<compile_context>
chip_gen: v7x
topology: tpu7x:2x2x1
jax: 0.10.0
libtpu: 0.0.40
codegen_flags: <defaults>
</compile_context>

<pallas_src>
import functools

import jax
import jax.numpy as jnp
from jax import lax
from jax.experimental import pallas as pl
from jax.experimental.pallas import tpu as pltpu

_EPS = 1e-5


# ---------------------------------------------------------------------------
# Pallas kernel: fused (im2col-matmul conv) + InstanceNorm + LeakyReLU
# ---------------------------------------------------------------------------
def _fused_conv_in_lrelu_kernel(w_ref, p_ref, o_ref, sum_ref, ssq_ref, *,
                                eps, alpha, use_act, s_tile, num_s_tiles, inv_s):
    # w_ref: (Cout, K_pad) bf16    p_ref: (K_pad, s_tile) bf16
    # o_ref: (Cout, S) f32 -- resident across the S-tile grid axis
    s = pl.program_id(1)

    @pl.when(s == 0)
    def _init():
        sum_ref[...] = jnp.zeros_like(sum_ref)
        ssq_ref[...] = jnp.zeros_like(ssq_ref)

    # MXU matmul, bf16 in / fp32 out.  Output tile is lane-dense (Cout, s_tile).
    y = jnp.dot(w_ref[...], p_ref[...], preferred_element_type=jnp.float32)

    # Single-pass per-channel statistics (cross-lane reduce -> XLU slot).
    sum_ref[...] += jnp.sum(y, axis=1, keepdims=True)
    ssq_ref[...] += jnp.sum(y * y, axis=1, keepdims=True)

    if num_s_tiles == 1:
        o_ref[...] = y
    else:
        off = pl.multiple_of(s * s_tile, s_tile)
        o_ref[:, pl.ds(off, s_tile)] = y

    @pl.when(s == num_s_tiles - 1)
    def _finalize():
        mean = sum_ref[...] * inv_s                        # (Cout, 1)
        var = ssq_ref[...] * inv_s - mean * mean           # biased variance (fp32)
        var = jnp.maximum(var, 0.0)
        scale = lax.rsqrt(var + eps)
        shift = mean * scale

        def _apply(t):
            return jnp.where(t >= 0, t, alpha * t) if use_act else t

        if num_s_tiles == 1:
            o_ref[...] = _apply(o_ref[...] * scale - shift)
        else:
            @pl.loop(0, num_s_tiles)
            def _norm(t):
                o = pl.multiple_of(t * s_tile, s_tile)
                yt = _apply(o_ref[:, pl.ds(o, s_tile)] * scale - shift)
                o_ref[:, pl.ds(o, s_tile)] = yt


def _pick_s_tile(S, target=2048):
    # Largest multiple of 128 that divides S (<= target); fall back to full S.
    if S % 128 != 0:
        return S
    best, t = 128, 128
    while t <= min(S, target):
        if S % t == 0:
            best = t
        t += 128
    return best


def _fused_stage(patches, w2d, *, alpha, use_act):
    # patches: (N, K_pad, S) bf16     w2d: (Cout, K_pad) bf16
    N, K_pad, S = patches.shape
    Cout = w2d.shape[0]
    s_tile = _pick_s_tile(S)
    num_s = S // s_tile

    kernel = functools.partial(
        _fused_conv_in_lrelu_kernel, eps=_EPS, alpha=alpha, use_act=use_act,
        s_tile=s_tile, num_s_tiles=num_s, inv_s=1.0 / float(S))

    # VMEM budget: resident output block (x2 buffers) + double-buffered patch
    # tile + weight + headroom; clamp to be safe on v7x's 64 MiB VMEM.
    need = (2 * Cout * S * 4) + (2 * K_pad * s_tile * 2) + (2 * Cout * K_pad * 2) + (4 << 20)
    vmem_limit = int(min(max(need, 32 << 20), 64 << 20))

    return pl.pallas_call(
        kernel,
        out_shape=jax.ShapeDtypeStruct((N, Cout, S), jnp.float32),
        grid_spec=pltpu.PrefetchScalarGridSpec(
            num_scalar_prefetch=0,
            grid=(N, num_s),
            in_specs=[
                # weight: constant index map -> stays VMEM-resident
                pl.BlockSpec((Cout, K_pad), lambda n, s: (0, 0)),
                # patches: tiled along S (lane axis)
                pl.BlockSpec((None, K_pad, s_tile), lambda n, s: (n, 0, s)),
            ],
            # full per-sample output block, constant across the S axis
            out_specs=pl.BlockSpec((None, Cout, S), lambda n, s: (n, 0, 0)),
            scratch_shapes=[pltpu.VMEM((Cout, 1), jnp.float32),   # sum
                            pltpu.VMEM((Cout, 1), jnp.float32)],  # sum of squares
        ),
        compiler_params=pltpu.CompilerParams(
            dimension_semantics=("parallel", "arbitrary"),
            vmem_limit_bytes=vmem_limit,
        ),
    )(w2d, patches)


# ---------------------------------------------------------------------------
# Plain-JAX glue: "same" padding + K-major im2col + operand prep
# ---------------------------------------------------------------------------
def _pad_same_3d(x, k, pad_value):
    # TF-style SAME padding: total pad = k-1, split (k-1)//2 / k//2, constant fill.
    def pads(kk):
        tot = kk - 1
        return (tot // 2, tot - tot // 2)

    kd, kh, kw = k
    return jnp.pad(x, ((0, 0), (0, 0), pads(kd), pads(kh), pads(kw)),
                   mode="constant", constant_values=pad_value)


def _im2col_km(x, k, stride):
    # x: (N, Cin, D, H, W) already padded -> (N, Cin*kd*kh*kw, Do*Ho*Wo).
    # K-major layout (no trailing transpose): S lands on the lane axis.
    N, C, D, H, W = x.shape
    kd, kh, kw = k
    sd, sh, sw = stride
    Do = (D - kd) // sd + 1
    Ho = (H - kh) // sh + 1
    Wo = (W - kw) // sw + 1
    cols = []
    for dz in range(kd):
        for dy in range(kh):
            for dx in range(kw):
                cols.append(
                    x[:, :, dz:dz + sd * Do:sd, dy:dy + sh * Ho:sh, dx:dx + sw * Wo:sw])
    p = jnp.stack(cols, axis=2)                          # (N, C, k3, Do, Ho, Wo)
    p = p.reshape(N, C * kd * kh * kw, Do * Ho * Wo)     # (N, K, S)
    return p, (Do, Ho, Wo)


def _round_up(v, m):
    return (v + m - 1) // m * m


def _prep_operands(patches, w, dtype=jnp.bfloat16):
    # Zero-pad K to a multiple of 128 in both patches and weight, cast to bf16.
    N, K, S = patches.shape
    K_pad = _round_up(K, 128)
    w2d = w.reshape(w.shape[0], -1)                      # (Cout, K) -- same K ordering
    if K_pad != K:
        patches = jnp.pad(patches, ((0, 0), (0, K_pad - K), (0, 0)))
        w2d = jnp.pad(w2d, ((0, 0), (0, K_pad - K)))
    return patches.astype(dtype), w2d.astype(dtype)


# ---------------------------------------------------------------------------
# conv_block forward
# ---------------------------------------------------------------------------
def conv_block_forward(x, w1, w2, *, kernel_size, strides, pad_value,
                       lrelu_alpha, use_activation):
    k = (kernel_size,) * 3 if isinstance(kernel_size, int) else tuple(kernel_size)
    s1 = (strides,) * 3 if isinstance(strides, int) else tuple(strides)
    N = x.shape[0]

    # TODO(synk): pull im2col into the kernel (direct conv as kd*kh*kw shifted
    # matmuls read straight from HBM) to cut the ~27x patch inflation, and fuse
    # stage 2 into the same pallas_call to drop the remaining XLA glue.

    # stage 1: pad -> conv1 -> InstanceNorm -> LeakyReLU (always)
    p1, sp1 = _im2col_km(_pad_same_3d(x, k, pad_value), k, s1)
    p1, w1b = _prep_operands(p1, w1)
    y = _fused_stage(p1, w1b, alpha=lrelu_alpha, use_act=True)
    y = y.reshape(N, w1.shape[0], *sp1)                  # channel-major already: no transpose

    # stage 2: pad -> conv2 (stride 1) -> InstanceNorm -> (optional) LeakyReLU
    p2, sp2 = _im2col_km(_pad_same_3d(y, k, pad_value), k, (1, 1, 1))
    p2, w2b = _prep_operands(p2, w2)
    z = _fused_stage(p2, w2b, alpha=lrelu_alpha, use_act=use_activation)
    return z.reshape(N, w2.shape[0], *sp2)


# ---------------------------------------------------------------------------
# Pure-JAX reference (for correctness check)
# ---------------------------------------------------------------------------
def _ref_forward(x, w1, w2, *, kernel_size, strides, pad_value,
                 lrelu_alpha, use_activation):
    k = (kernel_size,) * 3 if isinstance(kernel_size, int) else tuple(kernel_size)
    s1 = (strides,) * 3 if isinstance(strides, int) else tuple(strides)

    def conv(a, w, stride):
        return lax.conv_general_dilated(
            a, w, window_strides=stride, padding="VALID",
            dimension_numbers=("NCDHW", "OIDHW", "NCDHW"),
            preferred_element_type=jnp.float32)

    def inorm(a):
        mean = a.mean(axis=(2, 3, 4), keepdims=True)
        var = a.var(axis=(2, 3, 4), keepdims=True)       # biased, like torch
        return (a - mean) / jnp.sqrt(var + _EPS)

    def lrelu(a):
        return jnp.where(a >= 0, a, lrelu_alpha * a)

    y = lrelu(inorm(conv(_pad_same_3d(x, k, pad_value), w1, s1)))
    z = inorm(conv(_pad_same_3d(y, k, pad_value), w2, (1, 1, 1)))
    if use_activation:
        z = lrelu(z)
    return z


if __name__ == "__main__":
    # Small deterministic config: in_channels=4, filters=8, kernel=3, stride=1,
    # spatial=16 (S = 4096 -> two 2048-wide S tiles, exercising the tiled path).
    N, Cin, D, H, W = 2, 4, 16, 16, 16
    filters, ksize, strides = 8, 3, 1
    pad_value, lrelu_alpha, use_activation = 0.0, 0.2, True

    key = jax.random.PRNGKey(0)
    kx, k1, k2 = jax.random.split(key, 3)
    x = jax.random.normal(kx, (N, Cin, D, H, W), dtype=jnp.float32)
    # Conv3d weights (bias=False), deterministic init scaled by 1/sqrt(fan_in)
    w1 = jax.random.normal(k1, (filters, Cin, ksize, ksize, ksize),
                           dtype=jnp.float32) / jnp.sqrt(Cin * ksize ** 3)
    w2 = jax.random.normal(k2, (filters, filters, ksize, ksize, ksize),
                           dtype=jnp.float32) / jnp.sqrt(filters * ksize ** 3)

    fwd = jax.jit(functools.partial(
        conv_block_forward, kernel_size=ksize, strides=strides,
        pad_value=pad_value, lrelu_alpha=lrelu_alpha,
        use_activation=use_activation))

    out = jax.block_until_ready(fwd(x, w1, w2))
    ref = jax.block_until_ready(_ref_forward(
        x, w1, w2, kernel_size=ksize, strides=strides, pad_value=pad_value,
        lrelu_alpha=lrelu_alpha, use_activation=use_activation))

    assert out.shape == (N, filters, D, H, W), out.shape
    assert bool(jnp.all(jnp.isfinite(out)))
    max_err = float(jnp.max(jnp.abs(out - ref)))
    # bf16 MXU inputs (fp32 accumulation / norm) -> small quantization delta vs
    # the full-fp32 reference on a unit-variance output.
    assert jnp.allclose(out, ref, rtol=5e-2, atol=5e-2), max_err
    print("KERNEL_OK")
</pallas_src>

<mosaic_0001>
module attributes {stable_mosaic.version = 11 : i64} {
  func.func @_fused_conv_in_lrelu_kernel(%arg0: i32, %arg1: i32, %arg2: memref<8x128xbf16, #tpu.memory_space<vmem>>, %arg3: memref<1x128x2048xbf16, #tpu.memory_space<vmem>>, %arg4: memref<1x8x4096xf32, #tpu.memory_space<vmem>>, %arg5: memref<8x1xf32, #tpu.memory_space<vmem>>, %arg6: memref<8x1xf32, #tpu.memory_space<vmem>>) attributes {dimension_semantics = [#tpu.dimension_semantics<parallel>, #tpu.dimension_semantics<arbitrary>], iteration_bounds = array<i64: 2, 2>, scalar_prefetch = 0 : i64, scratch_operands = 2 : i64, tpu.core_type = #tpu.core_type<tc>, window_params = [{pipeline_mode = #tpu.pipeline_mode<synchronous>, transform_indices = @transform_0, window_bounds = array<i64: 8, 128>}, {transform_indices = @transform_1, window_bounds = array<i64: 1, 128, 2048>}, {transform_indices = @transform_2, window_bounds = array<i64: 1, 8, 4096>}]} {
    %c0_i32 = arith.constant 0 : i32
    %0 = arith.cmpi eq, %arg1, %c0_i32 : i32
    %1 = arith.extui %0 : i1 to i32
    %c0_i32_0 = arith.constant 0 : i32
    %2 = arith.cmpi ne, %1, %c0_i32_0 : i32
    scf.if %2 {
      %cst_18 = arith.constant 0.000000e+00 : f32
      %27 = vector.broadcast %cst_18 : f32 to vector<8x1xf32>
      %c0_19 = arith.constant 0 : index
      %c0_20 = arith.constant 0 : index
      %28 = vector.load %arg5[%c0_19, %c0_20] : memref<8x1xf32, #tpu.memory_space<vmem>>, vector<8x1xf32>
      tpu.vector_store %arg5[%c0_19, %c0_20], %27 {strides = array<i32>} : memref<8x1xf32, #tpu.memory_space<vmem>>, vector<8x1xf32>,
      %cst_21 = arith.constant 0.000000e+00 : f32
      %29 = vector.broadcast %cst_21 : f32 to vector<8x1xf32>
      %c0_22 = arith.constant 0 : index
      %c0_23 = arith.constant 0 : index
      %30 = vector.load %arg6[%c0_22, %c0_23] : memref<8x1xf32, #tpu.memory_space<vmem>>, vector<8x1xf32>
      tpu.vector_store %arg6[%c0_22, %c0_23], %29 {strides = array<i32>} : memref<8x1xf32, #tpu.memory_space<vmem>>, vector<8x1xf32>,
    } else {
    }
    %c0 = arith.constant 0 : index
    %c0_1 = arith.constant 0 : index
    %3 = vector.load %arg2[%c0, %c0_1] : memref<8x128xbf16, #tpu.memory_space<vmem>>, vector<8x128xbf16>
    %c0_2 = arith.constant 0 : index
    %c0_3 = arith.constant 0 : index
    %c0_4 = arith.constant 0 : index
    %4 = vector.load %arg3[%c0_2, %c0_3, %c0_4] : memref<1x128x2048xbf16, #tpu.memory_space<vmem>>, vector<1x128x2048xbf16>
    %5 = vector.shape_cast %4 : vector<1x128x2048xbf16> to vector<128x2048xbf16>
    %cst = arith.constant dense<0.000000e+00> : vector<8x2048xf32>
    %6 = tpu.matmul %3, %5, %cst {dimension_numbers = #tpu.dot_dimension_numbers<[1], [0], [0], [1], [0, 0, 1, 1], [], []>} : vector<8x128xbf16>, vector<128x2048xbf16>, vector<8x2048xf32> -> vector<8x2048xf32>
    %c0_5 = arith.constant 0 : index
    %c0_6 = arith.constant 0 : index
    %7 = vector.load %arg5[%c0_5, %c0_6] : memref<8x1xf32, #tpu.memory_space<vmem>>, vector<8x1xf32>
    %cst_7 = arith.constant dense<0.000000e+00> : vector<8xf32>
    %8 = vector.multi_reduction <add>, %6, %cst_7 [1] : vector<8x2048xf32> to vector<8xf32>
    %9 = vector.shape_cast %8 : vector<8xf32> to vector<8x1xf32>
    %10 = arith.addf %7, %9 : vector<8x1xf32>
    %c0_8 = arith.constant 0 : index
    %c0_9 = arith.constant 0 : index
    %11 = vector.load %arg5[%c0_8, %c0_9] : memref<8x1xf32, #tpu.memory_space<vmem>>, vector<8x1xf32>
    tpu.vector_store %arg5[%c0_8, %c0_9], %10 {strides = array<i32>} : memref<8x1xf32, #tpu.memory_space<vmem>>, vector<8x1xf32>,
    %c0_10 = arith.constant 0 : index
    %c0_11 = arith.constant 0 : index
    %12 = vector.load %arg6[%c0_10, %c0_11] : memref<8x1xf32, #tpu.memory_space<vmem>>, vector<8x1xf32>
    %13 = arith.mulf %6, %6 : vector<8x2048xf32>
    %cst_12 = arith.constant dense<0.000000e+00> : vector<8xf32>
    %14 = vector.multi_reduction <add>, %13, %cst_12 [1] : vector<8x2048xf32> to vector<8xf32>
    %15 = vector.shape_cast %14 : vector<8xf32> to vector<8x1xf32>
    %16 = arith.addf %12, %15 : vector<8x1xf32>
    %c0_13 = arith.constant 0 : index
    %c0_14 = arith.constant 0 : index
    %17 = vector.load %arg6[%c0_13, %c0_14] : memref<8x1xf32, #tpu.memory_space<vmem>>, vector<8x1xf32>
    tpu.vector_store %arg6[%c0_13, %c0_14], %16 {strides = array<i32>} : memref<8x1xf32, #tpu.memory_space<vmem>>, vector<8x1xf32>,
    %c2048_i32 = arith.constant 2048 : i32
    %18 = arith.muli %arg1, %c2048_i32 : i32
    %19 = tpu.assume_multiple %18, 2048 : i32
    %c0_15 = arith.constant 0 : index
    %c0_16 = arith.constant 0 : index
    %20 = arith.index_cast %19 : i32 to index
    %21 = vector.load %arg4[%c0_15, %c0_16, %20] : memref<1x8x4096xf32, #tpu.memory_space<vmem>>, vector<1x8x2048xf32>
    %22 = vector.shape_cast %21 : vector<1x8x2048xf32> to vector<8x2048xf32>
    %23 = vector.shape_cast %6 : vector<8x2048xf32> to vector<1x8x2048xf32>
    tpu.vector_store %arg4[%c0_15, %c0_16, %20], %23 {strides = array<i32>} : memref<1x8x4096xf32, #tpu.memory_space<vmem>>, vector<1x8x2048xf32>,
    %c1_i32 = arith.constant 1 : i32
    %24 = arith.cmpi eq, %arg1, %c1_i32 : i32
    %25 = arith.extui %24 : i1 to i32
    %c0_i32_17 = arith.constant 0 : i32
    %26 = arith.cmpi ne, %25, %c0_i32_17 : i32
    scf.if %26 {
      %c0_18 = arith.constant 0 : index
      %c0_19 = arith.constant 0 : index
      %27 = vector.load %arg5[%c0_18, %c0_19] : memref<8x1xf32, #tpu.memory_space<vmem>>, vector<8x1xf32>
      %cst_20 = arith.constant 2.44140625E-4 : f32
      %28 = vector.broadcast %cst_20 : f32 to vector<8x1xf32>
      %29 = arith.mulf %27, %28 : vector<8x1xf32>
      %c0_21 = arith.constant 0 : index
      %c0_22 = arith.constant 0 : index
      %30 = vector.load %arg6[%c0_21, %c0_22] : memref<8x1xf32, #tpu.memory_space<vmem>>, vector<8x1xf32>
      %cst_23 = arith.constant 2.44140625E-4 : f32
      %31 = vector.broadcast %cst_23 : f32 to vector<8x1xf32>
      %32 = arith.mulf %30, %31 : vector<8x1xf32>
      %33 = arith.mulf %29, %29 : vector<8x1xf32>
      %34 = arith.subf %32, %33 : vector<8x1xf32>
      %cst_24 = arith.constant 0.000000e+00 : f32
      %35 = vector.broadcast %cst_24 : f32 to vector<8x1xf32>
      %36 = arith.maximumf %34, %35 : vector<8x1xf32>
      %cst_25 = arith.constant 9.99999974E-6 : f32
      %37 = vector.broadcast %cst_25 : f32 to vector<8x1xf32>
      %38 = arith.addf %36, %37 : vector<8x1xf32>
      %39 = math.rsqrt %38 : vector<8x1xf32>
      %40 = arith.mulf %29, %39 : vector<8x1xf32>
      %c0_i32_26 = arith.constant 0 : i32
      %c2_i32 = arith.constant 2 : i32
      %41 = arith.addi %c0_i32_26, %c2_i32 : i32
      %c1_i32_27 = arith.constant 1 : i32
      scf.for %arg7 = %c0_i32_26 to %41 step %c1_i32_27  : i32 {
        %c1_i32_29 = arith.constant 1 : i32
        %42 = arith.muli %arg7, %c1_i32_29 : i32
        %c0_i32_30 = arith.constant 0 : i32
        %43 = arith.addi %c0_i32_30, %42 : i32
        %c2048_i32_31 = arith.constant 2048 : i32
        %44 = arith.muli %43, %c2048_i32_31 : i32
        %45 = tpu.assume_multiple %44, 2048 : i32
        %c0_32 = arith.constant 0 : index
        %c0_33 = arith.constant 0 : index
        %46 = arith.index_cast %45 : i32 to index
        %47 = vector.load %arg4[%c0_32, %c0_33, %46] : memref<1x8x4096xf32, #tpu.memory_space<vmem>>, vector<1x8x2048xf32>
        %48 = vector.shape_cast %47 : vector<1x8x2048xf32> to vector<8x2048xf32>
        %49 = vector.broadcast %39 : vector<8x1xf32> to vector<8x2048xf32>
        %50 = arith.mulf %48, %49 : vector<8x2048xf32>
        %51 = vector.broadcast %40 : vector<8x1xf32> to vector<8x2048xf32>
        %52 = arith.subf %50, %51 : vector<8x2048xf32>
        %cst_34 = arith.constant 0.000000e+00 : f32
        %53 = vector.broadcast %cst_34 : f32 to vector<8x2048xf32>
        %54 = arith.cmpf oge, %52, %53 : vector<8x2048xf32>
        %cst_35 = arith.constant 2.000000e-01 : f32
        %55 = vector.broadcast %cst_35 : f32 to vector<8x2048xf32>
        %56 = arith.mulf %55, %52 : vector<8x2048xf32>
        %57 = arith.select %54, %52, %56 : vector<8x2048xi1>, vector<8x2048xf32>
        %c0_36 = arith.constant 0 : index
        %c0_37 = arith.constant 0 : index
        %58 = arith.index_cast %45 : i32 to index
        %59 = vector.load %arg4[%c0_36, %c0_37, %58] : memref<1x8x4096xf32, #tpu.memory_space<vmem>>, vector<1x8x2048xf32>
        %60 = vector.shape_cast %59 : vector<1x8x2048xf32> to vector<8x2048xf32>
        %61 = vector.shape_cast %57 : vector<8x2048xf32> to vector<1x8x2048xf32>
        tpu.vector_store %arg4[%c0_36, %c0_37, %58], %61 {strides = array<i32>} : memref<1x8x4096xf32, #tpu.memory_space<vmem>>, vector<1x8x2048xf32>,
      }
      %c2_i32_28 = arith.constant 2 : i32
    } else {
    }
    return
  }
  func.func @transform_0(%arg0: i32, %arg1: i32) -> (i32, i32) {
    %c0_i32 = arith.constant 0 : i32
    %c0_i32_0 = arith.constant 0 : i32
    %c0_i32_1 = arith.constant 0 : i32
    return %c0_i32, %c0_i32_0 : i32, i32
  }
  func.func @transform_1(%arg0: i32, %arg1: i32) -> (i32, i32, i32) {
    %c0_i32 = arith.constant 0 : i32
    %c0_i32_0 = arith.constant 0 : i32
    return %arg0, %c0_i32, %arg1 : i32, i32, i32
  }
  func.func @transform_2(%arg0: i32, %arg1: i32) -> (i32, i32, i32) {
    %c0_i32 = arith.constant 0 : i32
    %c0_i32_0 = arith.constant 0 : i32
    %c0_i32_1 = arith.constant 0 : i32
    return %arg0, %c0_i32, %c0_i32_0 : i32, i32, i32
  }
}

module attributes {stable_mosaic.version = 11 : i64} {
  func.func @_fused_conv_in_lrelu_kernel(%arg0: i32, %arg1: i32, %arg2: memref<8x256xbf16, #tpu.memory_space<vmem>>, %arg3: memref<1x256x2048xbf16, #tpu.memory_space<vmem>>, %arg4: memref<1x8x4096xf32, #tpu.memory_space<vmem>>, %arg5: memref<8x1xf32, #tpu.memory_space<vmem>>, %arg6: memref<8x1xf32, #tpu.memory_space<vmem>>) attributes {dimension_semantics = [#tpu.dimension_semantics<parallel>, #tpu.dimension_semantics<arbitrary>], iteration_bounds = array<i64: 2, 2>, scalar_prefetch = 0 : i64, scratch_operands = 2 : i64, tpu.core_type = #tpu.core_type<tc>, window_params = [{pipeline_mode = #tpu.pipeline_mode<synchronous>, transform_indices = @transform_0, window_bounds = array<i64: 8, 256>}, {transform_indices = @transform_1, window_bounds = array<i64: 1, 256, 2048>}, {transform_indices = @transform_2, window_bounds = array<i64: 1, 8, 4096>}]} {
    %c0_i32 = arith.constant 0 : i32
    %0 = arith.cmpi eq, %arg1, %c0_i32 : i32
    %1 = arith.extui %0 : i1 to i32
    %c0_i32_0 = arith.constant 0 : i32
    %2 = arith.cmpi ne, %1, %c0_i32_0 : i32
    scf.if %2 {
      %cst_18 = arith.constant 0.000000e+00 : f32
      %27 = vector.broadcast %cst_18 : f32 to vector<8x1xf32>
      %c0_19 = arith.constant 0 : index
      %c0_20 = arith.constant 0 : index
      %28 = vector.load %arg5[%c0_19, %c0_20] : memref<8x1xf32, #tpu.memory_space<vmem>>, vector<8x1xf32>
      tpu.vector_store %arg5[%c0_19, %c0_20], %27 {strides = array<i32>} : memref<8x1xf32, #tpu.memory_space<vmem>>, vector<8x1xf32>,
      %cst_21 = arith.constant 0.000000e+00 : f32
      %29 = vector.broadcast %cst_21 : f32 to vector<8x1xf32>
      %c0_22 = arith.constant 0 : index
      %c0_23 = arith.constant 0 : index
      %30 = vector.load %arg6[%c0_22, %c0_23] : memref<8x1xf32, #tpu.memory_space<vmem>>, vector<8x1xf32>
      tpu.vector_store %arg6[%c0_22, %c0_23], %29 {strides = array<i32>} : memref<8x1xf32, #tpu.memory_space<vmem>>, vector<8x1xf32>,
    } else {
    }
    %c0 = arith.constant 0 : index
    %c0_1 = arith.constant 0 : index
    %3 = vector.load %arg2[%c0, %c0_1] : memref<8x256xbf16, #tpu.memory_space<vmem>>, vector<8x256xbf16>
    %c0_2 = arith.constant 0 : index
    %c0_3 = arith.constant 0 : index
    %c0_4 = arith.constant 0 : index
    %4 = vector.load %arg3[%c0_2, %c0_3, %c0_4] : memref<1x256x2048xbf16, #tpu.memory_space<vmem>>, vector<1x256x2048xbf16>
    %5 = vector.shape_cast %4 : vector<1x256x2048xbf16> to vector<256x2048xbf16>
    %cst = arith.constant dense<0.000000e+00> : vector<8x2048xf32>
    %6 = tpu.matmul %3, %5, %cst {dimension_numbers = #tpu.dot_dimension_numbers<[1], [0], [0], [1], [0, 0, 1, 1], [], []>} : vector<8x256xbf16>, vector<256x2048xbf16>, vector<8x2048xf32> -> vector<8x2048xf32>
    %c0_5 = arith.constant 0 : index
    %c0_6 = arith.constant 0 : index
    %7 = vector.load %arg5[%c0_5, %c0_6] : memref<8x1xf32, #tpu.memory_space<vmem>>, vector<8x1xf32>
    %cst_7 = arith.constant dense<0.000000e+00> : vector<8xf32>
    %8 = vector.multi_reduction <add>, %6, %cst_7 [1] : vector<8x2048xf32> to vector<8xf32>
    %9 = vector.shape_cast %8 : vector<8xf32> to vector<8x1xf32>
    %10 = arith.addf %7, %9 : vector<8x1xf32>
    %c0_8 = arith.constant 0 : index
    %c0_9 = arith.constant 0 : index
    %11 = vector.load %arg5[%c0_8, %c0_9] : memref<8x1xf32, #tpu.memory_space<vmem>>, vector<8x1xf32>
    tpu.vector_store %arg5[%c0_8, %c0_9], %10 {strides = array<i32>} : memref<8x1xf32, #tpu.memory_space<vmem>>, vector<8x1xf32>,
    %c0_10 = arith.constant 0 : index
    %c0_11 = arith.constant 0 : index
    %12 = vector.load %arg6[%c0_10, %c0_11] : memref<8x1xf32, #tpu.memory_space<vmem>>, vector<8x1xf32>
    %13 = arith.mulf %6, %6 : vector<8x2048xf32>
    %cst_12 = arith.constant dense<0.000000e+00> : vector<8xf32>
    %14 = vector.multi_reduction <add>, %13, %cst_12 [1] : vector<8x2048xf32> to vector<8xf32>
    %15 = vector.shape_cast %14 : vector<8xf32> to vector<8x1xf32>
    %16 = arith.addf %12, %15 : vector<8x1xf32>
    %c0_13 = arith.constant 0 : index
    %c0_14 = arith.constant 0 : index
    %17 = vector.load %arg6[%c0_13, %c0_14] : memref<8x1xf32, #tpu.memory_space<vmem>>, vector<8x1xf32>
    tpu.vector_store %arg6[%c0_13, %c0_14], %16 {strides = array<i32>} : memref<8x1xf32, #tpu.memory_space<vmem>>, vector<8x1xf32>,
    %c2048_i32 = arith.constant 2048 : i32
    %18 = arith.muli %arg1, %c2048_i32 : i32
    %19 = tpu.assume_multiple %18, 2048 : i32
    %c0_15 = arith.constant 0 : index
    %c0_16 = arith.constant 0 : index
    %20 = arith.index_cast %19 : i32 to index
    %21 = vector.load %arg4[%c0_15, %c0_16, %20] : memref<1x8x4096xf32, #tpu.memory_space<vmem>>, vector<1x8x2048xf32>
    %22 = vector.shape_cast %21 : vector<1x8x2048xf32> to vector<8x2048xf32>
    %23 = vector.shape_cast %6 : vector<8x2048xf32> to vector<1x8x2048xf32>
    tpu.vector_store %arg4[%c0_15, %c0_16, %20], %23 {strides = array<i32>} : memref<1x8x4096xf32, #tpu.memory_space<vmem>>, vector<1x8x2048xf32>,
    %c1_i32 = arith.constant 1 : i32
    %24 = arith.cmpi eq, %arg1, %c1_i32 : i32
    %25 = arith.extui %24 : i1 to i32
    %c0_i32_17 = arith.constant 0 : i32
    %26 = arith.cmpi ne, %25, %c0_i32_17 : i32
    scf.if %26 {
      %c0_18 = arith.constant 0 : index
      %c0_19 = arith.constant 0 : index
      %27 = vector.load %arg5[%c0_18, %c0_19] : memref<8x1xf32, #tpu.memory_space<vmem>>, vector<8x1xf32>
      %cst_20 = arith.constant 2.44140625E-4 : f32
      %28 = vector.broadcast %cst_20 : f32 to vector<8x1xf32>
      %29 = arith.mulf %27, %28 : vector<8x1xf32>
      %c0_21 = arith.constant 0 : index
      %c0_22 = arith.constant 0 : index
      %30 = vector.load %arg6[%c0_21, %c0_22] : memref<8x1xf32, #tpu.memory_space<vmem>>, vector<8x1xf32>
      %cst_23 = arith.constant 2.44140625E-4 : f32
      %31 = vector.broadcast %cst_23 : f32 to vector<8x1xf32>
      %32 = arith.mulf %30, %31 : vector<8x1xf32>
      %33 = arith.mulf %29, %29 : vector<8x1xf32>
      %34 = arith.subf %32, %33 : vector<8x1xf32>
      %cst_24 = arith.constant 0.000000e+00 : f32
      %35 = vector.broadcast %cst_24 : f32 to vector<8x1xf32>
      %36 = arith.maximumf %34, %35 : vector<8x1xf32>
      %cst_25 = arith.constant 9.99999974E-6 : f32
      %37 = vector.broadcast %cst_25 : f32 to vector<8x1xf32>
      %38 = arith.addf %36, %37 : vector<8x1xf32>
      %39 = math.rsqrt %38 : vector<8x1xf32>
      %40 = arith.mulf %29, %39 : vector<8x1xf32>
      %c0_i32_26 = arith.constant 0 : i32
      %c2_i32 = arith.constant 2 : i32
      %41 = arith.addi %c0_i32_26, %c2_i32 : i32
      %c1_i32_27 = arith.constant 1 : i32
      scf.for %arg7 = %c0_i32_26 to %41 step %c1_i32_27  : i32 {
        %c1_i32_29 = arith.constant 1 : i32
        %42 = arith.muli %arg7, %c1_i32_29 : i32
        %c0_i32_30 = arith.constant 0 : i32
        %43 = arith.addi %c0_i32_30, %42 : i32
        %c2048_i32_31 = arith.constant 2048 : i32
        %44 = arith.muli %43, %c2048_i32_31 : i32
        %45 = tpu.assume_multiple %44, 2048 : i32
        %c0_32 = arith.constant 0 : index
        %c0_33 = arith.constant 0 : index
        %46 = arith.index_cast %45 : i32 to index
        %47 = vector.load %arg4[%c0_32, %c0_33, %46] : memref<1x8x4096xf32, #tpu.memory_space<vmem>>, vector<1x8x2048xf32>
        %48 = vector.shape_cast %47 : vector<1x8x2048xf32> to vector<8x2048xf32>
        %49 = vector.broadcast %39 : vector<8x1xf32> to vector<8x2048xf32>
        %50 = arith.mulf %48, %49 : vector<8x2048xf32>
        %51 = vector.broadcast %40 : vector<8x1xf32> to vector<8x2048xf32>
        %52 = arith.subf %50, %51 : vector<8x2048xf32>
        %cst_34 = arith.constant 0.000000e+00 : f32
        %53 = vector.broadcast %cst_34 : f32 to vector<8x2048xf32>
        %54 = arith.cmpf oge, %52, %53 : vector<8x2048xf32>
        %cst_35 = arith.constant 2.000000e-01 : f32
        %55 = vector.broadcast %cst_35 : f32 to vector<8x2048xf32>
        %56 = arith.mulf %55, %52 : vector<8x2048xf32>
        %57 = arith.select %54, %52, %56 : vector<8x2048xi1>, vector<8x2048xf32>
        %c0_36 = arith.constant 0 : index
        %c0_37 = arith.constant 0 : index
        %58 = arith.index_cast %45 : i32 to index
        %59 = vector.load %arg4[%c0_36, %c0_37, %58] : memref<1x8x4096xf32, #tpu.memory_space<vmem>>, vector<1x8x2048xf32>
        %60 = vector.shape_cast %59 : vector<1x8x2048xf32> to vector<8x2048xf32>
        %61 = vector.shape_cast %57 : vector<8x2048xf32> to vector<1x8x2048xf32>
        tpu.vector_store %arg4[%c0_36, %c0_37, %58], %61 {strides = array<i32>} : memref<1x8x4096xf32, #tpu.memory_space<vmem>>, vector<1x8x2048xf32>,
      }
      %c2_i32_28 = arith.constant 2 : i32
    } else {
    }
    return
  }
  func.func @transform_0(%arg0: i32, %arg1: i32) -> (i32, i32) {
    %c0_i32 = arith.constant 0 : i32
    %c0_i32_0 = arith.constant 0 : i32
    %c0_i32_1 = arith.constant 0 : i32
    return %c0_i32, %c0_i32_0 : i32, i32
  }
  func.func @transform_1(%arg0: i32, %arg1: i32) -> (i32, i32, i32) {
    %c0_i32 = arith.constant 0 : i32
    %c0_i32_0 = arith.constant 0 : i32
    return %arg0, %c0_i32, %arg1 : i32, i32, i32
  }
  func.func @transform_2(%arg0: i32, %arg1: i32) -> (i32, i32, i32) {
    %c0_i32 = arith.constant 0 : i32
    %c0_i32_0 = arith.constant 0 : i32
    %c0_i32_1 = arith.constant 0 : i32
    return %arg0, %c0_i32, %c0_i32_0 : i32, i32, i32
  }
}

</mosaic_0001>

<llo_original>
// kernel: conv_block_forward.2
$region0: #{conv_block_forward.2}
  #allocation0 [shape = 'u32[]', space=smem, size = 0x4, offset = 0x4, fixed_abs, tag = 'smem constant byte address 0x4 - core index']
  #allocation1 [shape = 'u32[144,128]{1,0:T(1,128)}', space=vmem, size = 0x12000, scoped, tag = 'internal scratch']
  #allocation2 [shape = 'f32[8,1]{1,0:T(8,128)}', space=vmem, size = 0x1000, scoped, tag = 'scratch operand']
  #allocation3 [shape = 'f32[8,1]{1,0:T(8,128)}', space=vmem, size = 0x1000, scoped, tag = 'scratch operand']
  %s0 = inlined_call_operand.vmem [shape: bf16[8,128], index: 0, kind: input, shape index: {}]
  %s1 = inlined_call_operand.vmem [shape: bf16[2,128,4096], index: 1, kind: input, shape index: {}]
  %s2 = inlined_call_operand.vmem [shape: f32[2,8,4096], index: 2, kind: output, shape index: {}]
  %s3 = sld [smem:[#allocation0]]
  $region79: #{conv_block_forward.2} parent=0
    _
  %s5 = ssub.s32 1, %s3
  %s6 = scalar_select 0, %s5, %s3
  $region1: #{conv_block_forward.2} parent=0
    #allocation4 [shape = 'u8[1048576]{0}', space=vmem, size = 0x100000, scoped, tag = 'input window, operand 1']
    loop: start=0, step=1, limit=6
    $region2: #{conv_block_forward.2} parent=1 // loop_pre_header
      _
    $region3: #{conv_block_forward.2} parent=1 // loop_header
      %s8 = sphi 0, %s12
      %p9 = scmp.ge.s32.totalorder %s8, 6
      %s15 = sphi 0, %s27
      %s16 = sphi 0, %s23
      %s17 = sphi 0, %s15
      %s18 = sphi 0, %s16
      %s19 = sphi 0, %s17
      %s20 = sphi 0, %s18
      %s28 = sphi 0, %s28
      %s30 = sphi 0, %s28
      %s31 = sphi 0, %s30
      %s45 = sphi 0, %s31
      %s53 = sphi 0, %s55
      %s56 = sphi 0, %s53
      %s57 = sphi 0, %s56
      %s73 = sphi 0, %s57
      %s79 = sphi 0, %s81
      %s82 = sphi 0, %s79
      %s83 = sphi 0, %s82
      %s99 = sphi 0, %s83
    $region4: #{conv_block_forward.2} parent=1 // loop_header_branch
      %11 = sbr.rel (%p9) target = $region8
    $region5: #{conv_block_forward.2} parent=1 // loop_body
      %s13 = ssub.s32 %s8, 1
      %s14 = ssub.s32 %s8, 2
      %s21 = sadd.s32 1, %s16
      %p22 = scmp.ge.s32.totalorder %s21, 2
      %s23 = scalar_select %p22, 0, %s21
      %s24 = sadd.s32 1, %s15
      %s25 = scalar_select %p22, %s24, %s15
      %p26 = scmp.ge.s32.totalorder %s25, 2
      %s27 = scalar_select %p26, 0, %s25
      %s29 = sadd.s32 %s28, 1
      %p32 = scmp.eq.s32.totalorder %s8, 3
      %p33 = scmp.ne.s32.totalorder %s28, %s30
      %p34 = scmp.eq.s32.totalorder %s8, 0
      %p35 = por %p33, %p34
      %p36 = scmp.ne.s32.totalorder %s28, %s30
      %p37 = scmp.eq.s32.totalorder %s13, 3
      %p38 = por %p36, %p37
      %p39 = scmp.ne.s32.totalorder %s30, %s31
      %p40 = scmp.eq.s32.totalorder %s13, 0
      %p41 = por %p39, %p40
      %p42 = scmp.ne.s32.totalorder %s30, %s31
      %p43 = scmp.eq.s32.totalorder %s14, 3
      %p44 = por %p42, %p43
      %p46 = scmp.ne.s32.totalorder %s31, %s45
      %p47 = scmp.eq.s32.totalorder %s14, 0
      %p48 = por %p46, %p47
      %s49 = ssub.s32 %s15, %s27
      %s50 = ssub.s32 %s16, %s23
      %s51 = sor.u32 %s49, %s50
      %p52 = scmp.eq.s32.totalorder %s51, 0
      %s54 = sadd.s32 %s53, 1
      %s55 = scalar_select %p52, %s53, %s54
      %p58 = pneg %p52
      %p59 = scmp.eq.s32.totalorder %s8, 3
      %p60 = por %p58, %p59
      %p61 = scmp.ne.s32.totalorder %s53, %s56
      %p62 = scmp.eq.s32.totalorder %s8, 0
      %p63 = por %p61, %p62
      %p64 = scmp.ne.s32.totalorder %s53, %s56
      %p65 = scmp.eq.s32.totalorder %s13, 3
      %p66 = por %p64, %p65
      %p67 = scmp.ne.s32.totalorder %s56, %s57
      %p68 = scmp.eq.s32.totalorder %s13, 0
      %p69 = por %p67, %p68
      %p70 = scmp.ne.s32.totalorder %s56, %s57
      %p71 = scmp.eq.s32.totalorder %s14, 3
      %p72 = por %p70, %p71
      %p74 = scmp.ne.s32.totalorder %s57, %s73
      %p75 = scmp.eq.s32.totalorder %s14, 0
      %p76 = por %p74, %p75
      %s77 = ssub.s32 %s15, %s27
      %p78 = scmp.eq.s32.totalorder %s77, 0
      %s80 = sadd.s32 %s79, 1
      %s81 = scalar_select %p78, %s79, %s80
      %p84 = pneg %p78
      %p85 = scmp.eq.s32.totalorder %s8, 3
      %p86 = por %p84, %p85
      %p87 = scmp.ne.s32.totalorder %s79, %s82
      %p88 = scmp.eq.s32.totalorder %s8, 0
      %p89 = por %p87, %p88
      %p90 = scmp.ne.s32.totalorder %s79, %s82
      %p91 = scmp.eq.s32.totalorder %s13, 3
      %p92 = por %p90, %p91
      %p93 = scmp.ne.s32.totalorder %s82, %s83
      %p94 = scmp.eq.s32.totalorder %s13, 0
      %p95 = por %p93, %p94
      %p96 = scmp.ne.s32.totalorder %s82, %s83
      %p97 = scmp.eq.s32.totalorder %s14, 3
      %p98 = por %p96, %p97
      %p100 = scmp.ne.s32.totalorder %s83, %s99
      %p101 = scmp.eq.s32.totalorder %s14, 0
      %p102 = por %p100, %p101
      %p103 = scmp.le.s32.totalorder 1, %s8
      %p104 = scmp.lt.s32.totalorder %s8, 5
      %p105 = pnand %p103, %p104
      %p106 = pneg %p105
      // Predicated region
      $region9: #{conv_block_forward.2} parent=5 // pred_check
        _
      $region10: #{conv_block_forward.2} parent=5 // pred_check_branch
        %108 = sbr.rel (%p105) target = $region12
      $region11: #{conv_block_forward.2} parent=5 // pred_region
        %s109 = ssub.s32 %s8, 1
        // Predicated region
        $region13: #{conv_block_forward.2} parent=11 // pred_check
          %p110 = pneg %p41
        $region14: #{conv_block_forward.2} parent=11 // pred_check_branch
          %112 = sbr.rel (%p110) target = $region16
        $region15: #{conv_block_forward.2} parent=11 // pred_region
          _
        $region16: #{conv_block_forward.2} parent=11 // pred_fallthru
          _
      $region12: #{conv_block_forward.2} parent=5 // pred_fallthru
        _
      %p113 = scmp.lt.s32.totalorder %s8, 4
      // Predicated region
      $region17: #{conv_block_forward.2} parent=5 // pred_check
        %p114 = pneg %p113
      $region18: #{conv_block_forward.2} parent=5 // pred_check_branch
        %116 = sbr.rel (%p114) target = $region20
      $region19: #{conv_block_forward.2} parent=5 // pred_region
        // Predicated region
        $region21: #{conv_block_forward.2} parent=19 // pred_check
          %p117 = pneg %p63
        $region22: #{conv_block_forward.2} parent=19 // pred_check_branch
          %119 = sbr.rel (%p117) target = $region24
        $region23: #{conv_block_forward.2} parent=19 // pred_region
          %s120 = sand.u32 %s53, 1
          %s121 = sand.u32 %s53, 1
          %s122 = smul.addr %s121, 1024
          %s123 = scalar_lea.vmem [#allocation4], %s122
          %s124 = smul.u32 16, %s16
          %s125 = smul.addr %s15, 512
          %s126 = sadd.s32 %s124, %s125
          %s127 = smul.addr %s126, 4
          %s128 = scalar_lea.vmem %s1, %s127
          // Predicated region
          $region25: #{conv_block_forward.2} parent=23 // pred_check
            _
          $region26: #{conv_block_forward.2} parent=23 // pred_check_branch
            %130 = sbr.rel (0) target = $region28
          $region27: #{conv_block_forward.2} parent=23 // pred_region
            // Predicated region
            $region29: #{conv_block_forward.2} parent=27 // pred_check
              _
            $region30: #{conv_block_forward.2} parent=27 // pred_check_branch
              %132 = sbr.rel (0) target = $region32
            $region31: #{conv_block_forward.2} parent=27 // pred_region
              loop: start=0, step=1, limit=1
              $region33: #{conv_block_forward.2} parent=31 // loop_pre_header
                _
              $region34: #{conv_block_forward.2} parent=31 // loop_header
                %s134 = sphi 0, %s138
                %p135 = scmp.ge.s32.totalorder %s134, 1
                %s139 = sphi %s128, %s128
                %s140 = sphi %s123, %s123
              $region35: #{conv_block_forward.2} parent=31 // loop_header_branch
                %137 = sbr.rel (%p135) target = $region39
              $region36: #{conv_block_forward.2} parent=31 // loop_body
                %v141 = vld [vmem:[%s139] sm:$0xff]
                %142 = vst [vmem:[%s140] sm:$0xff] %v141
                %v143 = vld [vmem:[%s139 + $0x8] sm:$0xff]
                %144 = vst [vmem:[%s140 + $0x8] sm:$0xff] %v143
                %v145 = vld [vmem:[%s139 + $0x10] sm:$0xff]
                %146 = vst [vmem:[%s140 + $0x10] sm:$0xff] %v145
                %v147 = vld [vmem:[%s139 + $0x18] sm:$0xff]
                %148 = vst [vmem:[%s140 + $0x18] sm:$0xff] %v147
                %v149 = vld [vmem:[%s139 + $0x20] sm:$0xff]
                %150 = vst [vmem:[%s140 + $0x20] sm:$0xff] %v149
                %v151 = vld [vmem:[%s139 + $0x28] sm:$0xff]
                %152 = vst [vmem:[%s140 + $0x28] sm:$0xff] %v151
                %v153 = vld [vmem:[%s139 + $0x30] sm:$0xff]
                %154 = vst [vmem:[%s140 + $0x30] sm:$0xff] %v153
                %v155 = vld [vmem:[%s139 + $0x38] sm:$0xff]
                %156 = vst [vmem:[%s140 + $0x38] sm:$0xff] %v155
                %v157 = vld [vmem:[%s139 + $0x80] sm:$0xff]
                %158 = vst [vmem:[%s140 + $0x40] sm:$0xff] %v157
                %v159 = vld [vmem:[%s139 + $0x88] sm:$0xff]
                %160 = vst [vmem:[%s140 + $0x48] sm:$0xff] %v159
                %v161 = vld [vmem:[%s139 + $0x90] sm:$0xff]
                %162 = vst [vmem:[%s140 + $0x50] sm:$0xff] %v161
                %v163 = vld [vmem:[%s139 + $0x98] sm:$0xff]
                %164 = vst [vmem:[%s140 + $0x58] sm:$0xff] %v163
                %v165 = vld [vmem:[%s139 + $0xa0] sm:$0xff]
                %166 = vst [vmem:[%s140 + $0x60] sm:$0xff] %v165
                %v167 = vld [vmem:[%s139 + $0xa8] sm:$0xff]
                %168 = vst [vmem:[%s140 + $0x68] sm:$0xff] %v167
                %v169 = vld [vmem:[%s139 + $0xb0] sm:$0xff]
                %170 = vst [vmem:[%s140 + $0x70] sm:$0xff] %v169
                %v171 = vld [vmem:[%s139 + $0xb8] sm:$0xff]
                %172 = vst [vmem:[%s140 + $0x78] sm:$0xff] %v171
                %v173 = vld [vmem:[%s139 + $0x100] sm:$0xff]
                %174 = vst [vmem:[%s140 + $0x80] sm:$0xff] %v173
                %v175 = vld [vmem:[%s139 + $0x108] sm:$0xff]
                %176 = vst [vmem:[%s140 + $0x88] sm:$0xff] %v175
                %v177 = vld [vmem:[%s139 + $0x110] sm:$0xff]
                %178 = vst [vmem:[%s140 + $0x90] sm:$0xff] %v177
                %v179 = vld [vmem:[%s139 + $0x118] sm:$0xff]
                %180 = vst [vmem:[%s140 + $0x98] sm:$0xff] %v179
                %v181 = vld [vmem:[%s139 + $0x120] sm:$0xff]
                %182 = vst [vmem:[%s140 + $0xa0] sm:$0xff] %v181
                %v183 = vld [vmem:[%s139 + $0x128] sm:$0xff]
                %184 = vst [vmem:[%s140 + $0xa8] sm:$0xff] %v183
                %v185 = vld [vmem:[%s139 + $0x130] sm:$0xff]
                %186 = vst [vmem:[%s140 + $0xb0] sm:$0xff] %v185
                %v187 = vld [vmem:[%s139 + $0x138] sm:$0xff]
                %188 = vst [vmem:[%s140 + $0xb8] sm:$0xff] %v187
                %v189 = vld [vmem:[%s139 + $0x180] sm:$0xff]
                %190 = vst [vmem:[%s140 + $0xc0] sm:$0xff] %v189
                %v191 = vld [vmem:[%s139 + $0x188] sm:$0xff]
                %192 = vst [vmem:[%s140 + $0xc8] sm:$0xff] %v191
                %v193 = vld [vmem:[%s139 + $0x190] sm:$0xff]
                %194 = vst [vmem:[%s140 + $0xd0] sm:$0xff] %v193
                %v195 = vld [vmem:[%s139 + $0x198] sm:$0xff]
                %196 = vst [vmem:[%s140 + $0xd8] sm:$0xff] %v195
                %v197 = vld [vmem:[%s139 + $0x1a0] sm:$0xff]
                %198 = vst [vmem:[%s140 + $0xe0] sm:$0xff] %v197
                %v199 = vld [vmem:[%s139 + $0x1a8] sm:$0xff]
                %200 = vst [vmem:[%s140 + $0xe8] sm:$0xff] %v199
                %v201 = vld [vmem:[%s139 + $0x1b0] sm:$0xff]
                %202 = vst [vmem:[%s140 + $0xf0] sm:$0xff] %v201
                %v203 = vld [vmem:[%s139 + $0x1b8] sm:$0xff]
                %204 = vst [vmem:[%s140 + $0xf8] sm:$0xff] %v203
                %v205 = vld [vmem:[%s139 + $0x200] sm:$0xff]
                %206 = vst [vmem:[%s140 + $0x100] sm:$0xff] %v205
                %v207 = vld [vmem:[%s139 + $0x208] sm:$0xff]
                %208 = vst [vmem:[%s140 + $0x108] sm:$0xff] %v207
                %v209 = vld [vmem:[%s139 + $0x210] sm:$0xff]
                %210 = vst [vmem:[%s140 + $0x110] sm:$0xff] %v209
                %v211 = vld [vmem:[%s139 + $0x218] sm:$0xff]
                %212 = vst [vmem:[%s140 + $0x118] sm:$0xff] %v211
                %v213 = vld [vmem:[%s139 + $0x220] sm:$0xff]
                %214 = vst [vmem:[%s140 + $0x120] sm:$0xff] %v213
                %v215 = vld [vmem:[%s139 + $0x228] sm:$0xff]
                %216 = vst [vmem:[%s140 + $0x128] sm:$0xff] %v215
                %v217 = vld [vmem:[%s139 + $0x230] sm:$0xff]
                %218 = vst [vmem:[%s140 + $0x130] sm:$0xff] %v217
                %v219 = vld [vmem:[%s139 + $0x238] sm:$0xff]
                %220 = vst [vmem:[%s140 + $0x138] sm:$0xff] %v219
                %v221 = vld [vmem:[%s139 + $0x280] sm:$0xff]
                %222 = vst [vmem:[%s140 + $0x140] sm:$0xff] %v221
                %v223 = vld [vmem:[%s139 + $0x288] sm:$0xff]
                %224 = vst [vmem:[%s140 + $0x148] sm:$0xff] %v223
                %v225 = vld [vmem:[%s139 + $0x290] sm:$0xff]
                %226 = vst [vmem:[%s140 + $0x150] sm:$0xff] %v225
                %v227 = vld [vmem:[%s139 + $0x298] sm:$0xff]
                %228 = vst [vmem:[%s140 + $0x158] sm:$0xff] %v227
                %v229 = vld [vmem:[%s139 + $0x2a0] sm:$0xff]
                %230 = vst [vmem:[%s140 + $0x160] sm:$0xff] %v229
                %v231 = vld [vmem:[%s139 + $0x2a8] sm:$0xff]
                %232 = vst [vmem:[%s140 + $0x168] sm:$0xff] %v231
                %v233 = vld [vmem:[%s139 + $0x2b0] sm:$0xff]
                %234 = vst [vmem:[%s140 + $0x170] sm:$0xff] %v233
                %v235 = vld [vmem:[%s139 + $0x2b8] sm:$0xff]
                %236 = vst [vmem:[%s140 + $0x178] sm:$0xff] %v235
                %v237 = vld [vmem:[%s139 + $0x300] sm:$0xff]
                %238 = vst [vmem:[%s140 + $0x180] sm:$0xff] %v237
                %v239 = vld [vmem:[%s139 + $0x308] sm:$0xff]
                %240 = vst [vmem:[%s140 + $0x188] sm:$0xff] %v239
                %v241 = vld [vmem:[%s139 + $0x310] sm:$0xff]
                %242 = vst [vmem:[%s140 + $0x190] sm:$0xff] %v241
                %v243 = vld [vmem:[%s139 + $0x318] sm:$0xff]
                %244 = vst [vmem:[%s140 + $0x198] sm:$0xff] %v243
                %v245 = vld [vmem:[%s139 + $0x320] sm:$0xff]
                %246 = vst [vmem:[%s140 + $0x1a0] sm:$0xff] %v245
                %v247 = vld [vmem:[%s139 + $0x328] sm:$0xff]
                %248 = vst [vmem:[%s140 + $0x1a8] sm:$0xff] %v247
                %v249 = vld [vmem:[%s139 + $0x330] sm:$0xff]
                %250 = vst [vmem:[%s140 + $0x1b0] sm:$0xff] %v249
                %v251 = vld [vmem:[%s139 + $0x338] sm:$0xff]
                %252 = vst [vmem:[%s140 + $0x1b8] sm:$0xff] %v251
                %v253 = vld [vmem:[%s139 + $0x380] sm:$0xff]
                %254 = vst [vmem:[%s140 + $0x1c0] sm:$0xff] %v253
                %v255 = vld [vmem:[%s139 + $0x388] sm:$0xff]
                %256 = vst [vmem:[%s140 + $0x1c8] sm:$0xff] %v255
                %v257 = vld [vmem:[%s139 + $0x390] sm:$0xff]
                %258 = vst [vmem:[%s140 + $0x1d0] sm:$0xff] %v257
                %v259 = vld [vmem:[%s139 + $0x398] sm:$0xff]
                %260 = vst [vmem:[%s140 + $0x1d8] sm:$0xff] %v259
                %v261 = vld [vmem:[%s139 + $0x3a0] sm:$0xff]
                %262 = vst [vmem:[%s140 + $0x1e0] sm:$0xff] %v261
                %v263 = vld [vmem:[%s139 + $0x3a8] sm:$0xff]
                %264 = vst [vmem:[%s140 + $0x1e8] sm:$0xff] %v263
                %v265 = vld [vmem:[%s139 + $0x3b0] sm:$0xff]
                %266 = vst [vmem:[%s140 + $0x1f0] sm:$0xff] %v265
                %v267 = vld [vmem:[%s139 + $0x3b8] sm:$0xff]
                %268 = vst [vmem:[%s140 + $0x1f8] sm:$0xff] %v267
                %v269 = vld [vmem:[%s139 + $0x400] sm:$0xff]
                %270 = vst [vmem:[%s140 + $0x200] sm:$0xff] %v269
                %v271 = vld [vmem:[%s139 + $0x408] sm:$0xff]
                %272 = vst [vmem:[%s140 + $0x208] sm:$0xff] %v271
                %v273 = vld [vmem:[%s139 + $0x410] sm:$0xff]
                %274 = vst [vmem:[%s140 + $0x210] sm:$0xff] %v273
                %v275 = vld [vmem:[%s139 + $0x418] sm:$0xff]
                %276 = vst [vmem:[%s140 + $0x218] sm:$0xff] %v275
                %v277 = vld [vmem:[%s139 + $0x420] sm:$0xff]
                %278 = vst [vmem:[%s140 + $0x220] sm:$0xff] %v277
                %v279 = vld [vmem:[%s139 + $0x428] sm:$0xff]
                %280 = vst [vmem:[%s140 + $0x228] sm:$0xff] %v279
                %v281 = vld [vmem:[%s139 + $0x430] sm:$0xff]
                %282 = vst [vmem:[%s140 + $0x230] sm:$0xff] %v281
                %v283 = vld [vmem:[%s139 + $0x438] sm:$0xff]
                %284 = vst [vmem:[%s140 + $0x238] sm:$0xff] %v283
                %v285 = vld [vmem:[%s139 + $0x480] sm:$0xff]
                %286 = vst [vmem:[%s140 + $0x240] sm:$0xff] %v285
                %v287 = vld [vmem:[%s139 + $0x488] sm:$0xff]
                %288 = vst [vmem:[%s140 + $0x248] sm:$0xff] %v287
                %v289 = vld [vmem:[%s139 + $0x490] sm:$0xff]
                %290 = vst [vmem:[%s140 + $0x250] sm:$0xff] %v289
                %v291 = vld [vmem:[%s139 + $0x498] sm:$0xff]
                %292 = vst [vmem:[%s140 + $0x258] sm:$0xff] %v291
                %v293 = vld [vmem:[%s139 + $0x4a0] sm:$0xff]
                %294 = vst [vmem:[%s140 + $0x260] sm:$0xff] %v293
                %v295 = vld [vmem:[%s139 + $0x4a8] sm:$0xff]
                %296 = vst [vmem:[%s140 + $0x268] sm:$0xff] %v295
                %v297 = vld [vmem:[%s139 + $0x4b0] sm:$0xff]
                %298 = vst [vmem:[%s140 + $0x270] sm:$0xff] %v297
                %v299 = vld [vmem:[%s139 + $0x4b8] sm:$0xff]
                %300 = vst [vmem:[%s140 + $0x278] sm:$0xff] %v299
                %v301 = vld [vmem:[%s139 + $0x500] sm:$0xff]
                %302 = vst [vmem:[%s140 + $0x280] sm:$0xff] %v301
                %v303 = vld [vmem:[%s139 + $0x508] sm:$0xff]
                %304 = vst [vmem:[%s140 + $0x288] sm:$0xff] %v303
                %v305 = vld [vmem:[%s139 + $0x510] sm:$0xff]
                %306 = vst [vmem:[%s140 + $0x290] sm:$0xff] %v305
                %v307 = vld [vmem:[%s139 + $0x518] sm:$0xff]
                %308 = vst [vmem:[%s140 + $0x298] sm:$0xff] %v307
                %v309 = vld [vmem:[%s139 + $0x520] sm:$0xff]
                %310 = vst [vmem:[%s140 + $0x2a0] sm:$0xff] %v309
                %v311 = vld [vmem:[%s139 + $0x528] sm:$0xff]
                %312 = vst [vmem:[%s140 + $0x2a8] sm:$0xff] %v311
                %v313 = vld [vmem:[%s139 + $0x530] sm:$0xff]
                %314 = vst [vmem:[%s140 + $0x2b0] sm:$0xff] %v313
                %v315 = vld [vmem:[%s139 + $0x538] sm:$0xff]
                %316 = vst [vmem:[%s140 + $0x2b8] sm:$0xff] %v315
                %v317 = vld [vmem:[%s139 + $0x580] sm:$0xff]
                %318 = vst [vmem:[%s140 + $0x2c0] sm:$0xff] %v317
                %v319 = vld [vmem:[%s139 + $0x588] sm:$0xff]
                %320 = vst [vmem:[%s140 + $0x2c8] sm:$0xff] %v319
                %v321 = vld [vmem:[%s139 + $0x590] sm:$0xff]
                %322 = vst [vmem:[%s140 + $0x2d0] sm:$0xff] %v321
                %v323 = vld [vmem:[%s139 + $0x598] sm:$0xff]
                %324 = vst [vmem:[%s140 + $0x2d8] sm:$0xff] %v323
                %v325 = vld [vmem:[%s139 + $0x5a0] sm:$0xff]
                %326 = vst [vmem:[%s140 + $0x2e0] sm:$0xff] %v325
                %v327 = vld [vmem:[%s139 + $0x5a8] sm:$0xff]
                %328 = vst [vmem:[%s140 + $0x2e8] sm:$0xff] %v327
                %v329 = vld [vmem:[%s139 + $0x5b0] sm:$0xff]
                %330 = vst [vmem:[%s140 + $0x2f0] sm:$0xff] %v329
                %v331 = vld [vmem:[%s139 + $0x5b8] sm:$0xff]
                %332 = vst [vmem:[%s140 + $0x2f8] sm:$0xff] %v331
                %v333 = vld [vmem:[%s139 + $0x600] sm:$0xff]
                %334 = vst [vmem:[%s140 + $0x300] sm:$0xff] %v333
                %v335 = vld [vmem:[%s139 + $0x608] sm:$0xff]
                %336 = vst [vmem:[%s140 + $0x308] sm:$0xff] %v335
                %v337 = vld [vmem:[%s139 + $0x610] sm:$0xff]
                %338 = vst [vmem:[%s140 + $0x310] sm:$0xff] %v337
                %v339 = vld [vmem:[%s139 + $0x618] sm:$0xff]
                %340 = vst [vmem:[%s140 + $0x318] sm:$0xff] %v339
                %v341 = vld [vmem:[%s139 + $0x620] sm:$0xff]
                %342 = vst [vmem:[%s140 + $0x320] sm:$0xff] %v341
                %v343 = vld [vmem:[%s139 + $0x628] sm:$0xff]
                %344 = vst [vmem:[%s140 + $0x328] sm:$0xff] %v343
                %v345 = vld [vmem:[%s139 + $0x630] sm:$0xff]
                %346 = vst [vmem:[%s140 + $0x330] sm:$0xff] %v345
                %v347 = vld [vmem:[%s139 + $0x638] sm:$0xff]
                %348 = vst [vmem:[%s140 + $0x338] sm:$0xff] %v347
                %v349 = vld [vmem:[%s139 + $0x680] sm:$0xff]
                %350 = vst [vmem:[%s140 + $0x340] sm:$0xff] %v349
                %v351 = vld [vmem:[%s139 + $0x688] sm:$0xff]
                %352 = vst [vmem:[%s140 + $0x348] sm:$0xff] %v351
                %v353 = vld [vmem:[%s139 + $0x690] sm:$0xff]
                %354 = vst [vmem:[%s140 + $0x350] sm:$0xff] %v353
                %v355 = vld [vmem:[%s139 + $0x698] sm:$0xff]
                %356 = vst [vmem:[%s140 + $0x358] sm:$0xff] %v355
                %v357 = vld [vmem:[%s139 + $0x6a0] sm:$0xff]
                %358 = vst [vmem:[%s140 + $0x360] sm:$0xff] %v357
                %v359 = vld [vmem:[%s139 + $0x6a8] sm:$0xff]
                %360 = vst [vmem:[%s140 + $0x368] sm:$0xff] %v359
                %v361 = vld [vmem:[%s139 + $0x6b0] sm:$0xff]
                %362 = vst [vmem:[%s140 + $0x370] sm:$0xff] %v361
                %v363 = vld [vmem:[%s139 + $0x6b8] sm:$0xff]
                %364 = vst [vmem:[%s140 + $0x378] sm:$0xff] %v363
                %v365 = vld [vmem:[%s139 + $0x700] sm:$0xff]
                %366 = vst [vmem:[%s140 + $0x380] sm:$0xff] %v365
                %v367 = vld [vmem:[%s139 + $0x708] sm:$0xff]
                %368 = vst [vmem:[%s140 + $0x388] sm:$0xff] %v367
                %v369 = vld [vmem:[%s139 + $0x710] sm:$0xff]
                %370 = vst [vmem:[%s140 + $0x390] sm:$0xff] %v369
                %v371 = vld [vmem:[%s139 + $0x718] sm:$0xff]
                %372 = vst [vmem:[%s140 + $0x398] sm:$0xff] %v371
                %v373 = vld [vmem:[%s139 + $0x720] sm:$0xff]
                %374 = vst [vmem:[%s140 + $0x3a0] sm:$0xff] %v373
                %v375 = vld [vmem:[%s139 + $0x728] sm:$0xff]
                %376 = vst [vmem:[%s140 + $0x3a8] sm:$0xff] %v375
                %v377 = vld [vmem:[%s139 + $0x730] sm:$0xff]
                %378 = vst [vmem:[%s140 + $0x3b0] sm:$0xff] %v377
                %v379 = vld [vmem:[%s139 + $0x738] sm:$0xff]
                %380 = vst [vmem:[%s140 + $0x3b8] sm:$0xff] %v379
                %v381 = vld [vmem:[%s139 + $0x780] sm:$0xff]
                %382 = vst [vmem:[%s140 + $0x3c0] sm:$0xff] %v381
                %v383 = vld [vmem:[%s139 + $0x788] sm:$0xff]
                %384 = vst [vmem:[%s140 + $0x3c8] sm:$0xff] %v383
                %v385 = vld [vmem:[%s139 + $0x790] sm:$0xff]
                %386 = vst [vmem:[%s140 + $0x3d0] sm:$0xff] %v385
                %v387 = vld [vmem:[%s139 + $0x798] sm:$0xff]
                %388 = vst [vmem:[%s140 + $0x3d8] sm:$0xff] %v387
                %v389 = vld [vmem:[%s139 + $0x7a0] sm:$0xff]
                %390 = vst [vmem:[%s140 + $0x3e0] sm:$0xff] %v389
                %v391 = vld [vmem:[%s139 + $0x7a8] sm:$0xff]
                %392 = vst [vmem:[%s140 + $0x3e8] sm:$0xff] %v391
                %v393 = vld [vmem:[%s139 + $0x7b0] sm:$0xff]
                %394 = vst [vmem:[%s140 + $0x3f0] sm:$0xff] %v393
                %v395 = vld [vmem:[%s139 + $0x7b8] sm:$0xff]
                %396 = vst [vmem:[%s140 + $0x3f8] sm:$0xff] %v395
              $region37: #{conv_block_forward.2} parent=31 // loop_footer
                %s138 = sadd.s32 1, %s134
              $region38: #{conv_block_forward.2} parent=31 // loop_footer_branch
                %133 = sbr.rel target = $region34
              $region39: #{conv_block_forward.2} parent=31 // loop_exit
                _
            $region32: #{conv_block_forward.2} parent=27 // pred_fallthru
              _
            // Predicated region
            $region40: #{conv_block_forward.2} parent=27 // pred_check
              _
            $region41: #{conv_block_forward.2} parent=27 // pred_check_branch
              %398 = sbr.rel target = $region43
            $region42: #{conv_block_forward.2} parent=27 // pred_region
              _
            $region43: #{conv_block_forward.2} parent=27 // pred_fallthru
              _
          $region28: #{conv_block_forward.2} parent=23 // pred_fallthru
            _
          %399 = vnop
        $region24: #{conv_block_forward.2} parent=19 // pred_fallthru
          _
      $region20: #{conv_block_forward.2} parent=5 // pred_fallthru
        _
      %p400 = scmp.le.s32.totalorder 1, %s8
      %p401 = scmp.lt.s32.totalorder %s8, 5
      %p402 = pnand %p400, %p401
      %p403 = pneg %p402
      // Predicated region
      $region44: #{conv_block_forward.2} parent=5 // pred_check
        _
      $region45: #{conv_block_forward.2} parent=5 // pred_check_branch
        %405 = sbr.rel (%p402) target = $region47
      $region46: #{conv_block_forward.2} parent=5 // pred_region
        %s406 = ssub.s32 %s8, 1
        %s407 = sand.u32 %s56, 1
        %s408 = sand.u32 %s56, 1
        %s409 = smul.addr %s408, 1024
        %s410 = scalar_lea.vmem [#allocation4], %s409
        // Predicated region
        $region48: #{conv_block_forward.2} parent=46 // pred_check
          %p411 = pneg %p69
        $region49: #{conv_block_forward.2} parent=46 // pred_check_branch
          %413 = sbr.rel (%p411) target = $region51
        $region50: #{conv_block_forward.2} parent=46 // pred_region
          _
        $region51: #{conv_block_forward.2} parent=46 // pred_fallthru
          _
        %p414 = pneg %p41
        %p415 = pneg %p38
        %s416 = sand.u32 %s56, 1
        %s417 = sand.u32 %s56, 1
        %s418 = smul.addr %s417, 1024
        %s419 = scalar_lea.vmem [#allocation4], %s418
        %p420 = pneg %p69
        %p421 = pneg %p66
        %p422 = pneg %p95
        %p423 = pneg %p92
        %p424 = scmp.lt.s32.totalorder %s17, 1
        %s425 = scalar_select %p424, %s17, 1
        %s426 = smul.addr %s425, 32
        %s427 = smul.addr %s426, 8
        %s428 = scalar_lea.vmem %s2, %s427
        %s429 = smul.u32 16, %s18
        %p430 = scmp.lt.s32.totalorder %s17, 1
        %s431 = scalar_select %p430, %s17, 1
        %s432 = smul.addr %s431, 32
        %s433 = smul.addr %s432, 8
        %s434 = scalar_lea.vmem %s2, %s433
        %p436 = scmp.eq.s32.totalorder %s18, 0
        // Predicated region
        $region52: #{conv_block_forward.2} parent=46 // pred_check
          %p437 = pneg %p436
        $region53: #{conv_block_forward.2} parent=46 // pred_check_branch
          %439 = sbr.rel (%p437) target = $region55
        $region54: #{conv_block_forward.2} parent=46 // pred_region
          %vm440 = vcmask 7168
          %441 = vst.msk [vmem:[#allocation2] sm:$0xff] %vm440, 0.0
          %442 = vst.msk [vmem:[#allocation3] sm:$0xff] %vm440, 0.0
        $region55: #{conv_block_forward.2} parent=46 // pred_fallthru
          _
        %v443 = vld [vmem:[%s0] sm:$0xf]
        %v444 = vld [vmem:[%s410] sm:$0xff]
        %v445 = vld [vmem:[%s410 + $0x8] sm:$0xff]
        %v446 = vld [vmem:[%s410 + $0x10] sm:$0xff]
        %v447 = vld [vmem:[%s410 + $0x18] sm:$0xff]
        %v448 = vld [vmem:[%s410 + $0x20] sm:$0xff]
        %v449 = vld [vmem:[%s410 + $0x28] sm:$0xff]
        %v450 = vld [vmem:[%s410 + $0x30] sm:$0xff]
        %v451 = vld [vmem:[%s410 + $0x38] sm:$0xff]
        %v452 = vld [vmem:[%s410 + $0x40] sm:$0xff]
        %v453 = vld [vmem:[%s410 + $0x48] sm:$0xff]
        %v454 = vld [vmem:[%s410 + $0x50] sm:$0xff]
        %v455 = vld [vmem:[%s410 + $0x58] sm:$0xff]
        %v456 = vld [vmem:[%s410 + $0x60] sm:$0xff]
        %v457 = vld [vmem:[%s410 + $0x68] sm:$0xff]
        %v458 = vld [vmem:[%s410 + $0x70] sm:$0xff]
        %v459 = vld [vmem:[%s410 + $0x78] sm:$0xff]
        %v460 = vld [vmem:[%s410 + $0x80] sm:$0xff]
        %v461 = vld [vmem:[%s410 + $0x88] sm:$0xff]
        %v462 = vld [vmem:[%s410 + $0x90] sm:$0xff]
        %v463 = vld [vmem:[%s410 + $0x98] sm:$0xff]
        %v464 = vld [vmem:[%s410 + $0xa0] sm:$0xff]
        %v465 = vld [vmem:[%s410 + $0xa8] sm:$0xff]
        %v466 = vld [vmem:[%s410 + $0xb0] sm:$0xff]
        %v467 = vld [vmem:[%s410 + $0xb8] sm:$0xff]
        %v468 = vld [vmem:[%s410 + $0xc0] sm:$0xff]
        %v469 = vld [vmem:[%s410 + $0xc8] sm:$0xff]
        %v470 = vld [vmem:[%s410 + $0xd0] sm:$0xff]
        %v471 = vld [vmem:[%s410 + $0xd8] sm:$0xff]
        %v472 = vld [vmem:[%s410 + $0xe0] sm:$0xff]
        %v473 = vld [vmem:[%s410 + $0xe8] sm:$0xff]
        %v474 = vld [vmem:[%s410 + $0xf0] sm:$0xff]
        %v475 = vld [vmem:[%s410 + $0xf8] sm:$0xff]
        %v476 = vld [vmem:[%s410 + $0x100] sm:$0xff]
        %v477 = vld [vmem:[%s410 + $0x108] sm:$0xff]
        %v478 = vld [vmem:[%s410 + $0x110] sm:$0xff]
        %v479 = vld [vmem:[%s410 + $0x118] sm:$0xff]
        %v480 = vld [vmem:[%s410 + $0x120] sm:$0xff]
        %v481 = vld [vmem:[%s410 + $0x128] sm:$0xff]
        %v482 = vld [vmem:[%s410 + $0x130] sm:$0xff]
        %v483 = vld [vmem:[%s410 + $0x138] sm:$0xff]
        %v484 = vld [vmem:[%s410 + $0x140] sm:$0xff]
        %v485 = vld [vmem:[%s410 + $0x148] sm:$0xff]
        %v486 = vld [vmem:[%s410 + $0x150] sm:$0xff]
        %v487 = vld [vmem:[%s410 + $0x158] sm:$0xff]
        %v488 = vld [vmem:[%s410 + $0x160] sm:$0xff]
        %v489 = vld [vmem:[%s410 + $0x168] sm:$0xff]
        %v490 = vld [vmem:[%s410 + $0x170] sm:$0xff]
        %v491 = vld [vmem:[%s410 + $0x178] sm:$0xff]
        %v492 = vld [vmem:[%s410 + $0x180] sm:$0xff]
        %v493 = vld [vmem:[%s410 + $0x188] sm:$0xff]
        %v494 = vld [vmem:[%s410 + $0x190] sm:$0xff]
        %v495 = vld [vmem:[%s410 + $0x198] sm:$0xff]
        %v496 = vld [vmem:[%s410 + $0x1a0] sm:$0xff]
        %v497 = vld [vmem:[%s410 + $0x1a8] sm:$0xff]
        %v498 = vld [vmem:[%s410 + $0x1b0] sm:$0xff]
        %v499 = vld [vmem:[%s410 + $0x1b8] sm:$0xff]
        %v500 = vld [vmem:[%s410 + $0x1c0] sm:$0xff]
        %v501 = vld [vmem:[%s410 + $0x1c8] sm:$0xff]
        %v502 = vld [vmem:[%s410 + $0x1d0] sm:$0xff]
        %v503 = vld [vmem:[%s410 + $0x1d8] sm:$0xff]
        %v504 = vld [vmem:[%s410 + $0x1e0] sm:$0xff]
        %v505 = vld [vmem:[%s410 + $0x1e8] sm:$0xff]
        %v506 = vld [vmem:[%s410 + $0x1f0] sm:$0xff]
        %v507 = vld [vmem:[%s410 + $0x1f8] sm:$0xff]
        %v508 = vld [vmem:[%s410 + $0x200] sm:$0xff]
        %v509 = vld [vmem:[%s410 + $0x208] sm:$0xff]
        %v510 = vld [vmem:[%s410 + $0x210] sm:$0xff]
        %v511 = vld [vmem:[%s410 + $0x218] sm:$0xff]
        %v512 = vld [vmem:[%s410 + $0x220] sm:$0xff]
        %v513 = vld [vmem:[%s410 + $0x228] sm:$0xff]
        %v514 = vld [vmem:[%s410 + $0x230] sm:$0xff]
        %v515 = vld [vmem:[%s410 + $0x238] sm:$0xff]
        %v516 = vld [vmem:[%s410 + $0x240] sm:$0xff]
        %v517 = vld [vmem:[%s410 + $0x248] sm:$0xff]
        %v518 = vld [vmem:[%s410 + $0x250] sm:$0xff]
        %v519 = vld [vmem:[%s410 + $0x258] sm:$0xff]
        %v520 = vld [vmem:[%s410 + $0x260] sm:$0xff]
        %v521 = vld [vmem:[%s410 + $0x268] sm:$0xff]
        %v522 = vld [vmem:[%s410 + $0x270] sm:$0xff]
        %v523 = vld [vmem:[%s410 + $0x278] sm:$0xff]
        %v524 = vld [vmem:[%s410 + $0x280] sm:$0xff]
        %v525 = vld [vmem:[%s410 + $0x288] sm:$0xff]
        %v526 = vld [vmem:[%s410 + $0x290] sm:$0xff]
        %v527 = vld [vmem:[%s410 + $0x298] sm:$0xff]
        %v528 = vld [vmem:[%s410 + $0x2a0] sm:$0xff]
        %v529 = vld [vmem:[%s410 + $0x2a8] sm:$0xff]
        %v530 = vld [vmem:[%s410 + $0x2b0] sm:$0xff]
        %v531 = vld [vmem:[%s410 + $0x2b8] sm:$0xff]
        %v532 = vld [vmem:[%s410 + $0x2c0] sm:$0xff]
        %v533 = vld [vmem:[%s410 + $0x2c8] sm:$0xff]
        %v534 = vld [vmem:[%s410 + $0x2d0] sm:$0xff]
        %v535 = vld [vmem:[%s410 + $0x2d8] sm:$0xff]
        %v536 = vld [vmem:[%s410 + $0x2e0] sm:$0xff]
        %v537 = vld [vmem:[%s410 + $0x2e8] sm:$0xff]
        %v538 = vld [vmem:[%s410 + $0x2f0] sm:$0xff]
        %v539 = vld [vmem:[%s410 + $0x2f8] sm:$0xff]
        %v540 = vld [vmem:[%s410 + $0x300] sm:$0xff]
        %v541 = vld [vmem:[%s410 + $0x308] sm:$0xff]
        %v542 = vld [vmem:[%s410 + $0x310] sm:$0xff]
        %v543 = vld [vmem:[%s410 + $0x318] sm:$0xff]
        %v544 = vld [vmem:[%s410 + $0x320] sm:$0xff]
        %v545 = vld [vmem:[%s410 + $0x328] sm:$0xff]
        %v546 = vld [vmem:[%s410 + $0x330] sm:$0xff]
        %v547 = vld [vmem:[%s410 + $0x338] sm:$0xff]
        %v548 = vld [vmem:[%s410 + $0x340] sm:$0xff]
        %v549 = vld [vmem:[%s410 + $0x348] sm:$0xff]
        %v550 = vld [vmem:[%s410 + $0x350] sm:$0xff]
        %v551 = vld [vmem:[%s410 + $0x358] sm:$0xff]
        %v552 = vld [vmem:[%s410 + $0x360] sm:$0xff]
        %v553 = vld [vmem:[%s410 + $0x368] sm:$0xff]
        %v554 = vld [vmem:[%s410 + $0x370] sm:$0xff]
        %v555 = vld [vmem:[%s410 + $0x378] sm:$0xff]
        %v556 = vld [vmem:[%s410 + $0x380] sm:$0xff]
        %v557 = vld [vmem:[%s410 + $0x388] sm:$0xff]
        %v558 = vld [vmem:[%s410 + $0x390] sm:$0xff]
        %v559 = vld [vmem:[%s410 + $0x398] sm:$0xff]
        %v560 = vld [vmem:[%s410 + $0x3a0] sm:$0xff]
        %v561 = vld [vmem:[%s410 + $0x3a8] sm:$0xff]
        %v562 = vld [vmem:[%s410 + $0x3b0] sm:$0xff]
        %v563 = vld [vmem:[%s410 + $0x3b8] sm:$0xff]
        %v564 = vld [vmem:[%s410 + $0x3c0] sm:$0xff]
        %v565 = vld [vmem:[%s410 + $0x3c8] sm:$0xff]
        %v566 = vld [vmem:[%s410 + $0x3d0] sm:$0xff]
        %v567 = vld [vmem:[%s410 + $0x3d8] sm:$0xff]
        %v568 = vld [vmem:[%s410 + $0x3e0] sm:$0xff]
        %v569 = vld [vmem:[%s410 + $0x3e8] sm:$0xff]
        %v570 = vld [vmem:[%s410 + $0x3f0] sm:$0xff]
        %v571 = vld [vmem:[%s410 + $0x3f8] sm:$0xff]
        %v700 = vunpack.c.l.b16 %v444
        %v701 = vunpack.c.h.b16 %v444
        %v702 = vunpack.c.l.b16 %v445
        %v703 = vunpack.c.h.b16 %v445
        %v704 = vunpack.c.l.b16 %v446
        %v705 = vunpack.c.h.b16 %v446
        %v706 = vunpack.c.l.b16 %v447
        %v707 = vunpack.c.h.b16 %v447
        %v708 = vunpack.c.l.b16 %v448
        %v709 = vunpack.c.h.b16 %v448
        %v710 = vunpack.c.l.b16 %v449
        %v711 = vunpack.c.h.b16 %v449
        %v712 = vunpack.c.l.b16 %v450
        %v713 = vunpack.c.h.b16 %v450
        %v714 = vunpack.c.l.b16 %v451
        %v715 = vunpack.c.h.b16 %v451
        %v716 = vunpack.c.l.b16 %v452
        %v717 = vunpack.c.h.b16 %v452
        %v718 = vunpack.c.l.b16 %v453
        %v719 = vunpack.c.h.b16 %v453
        %v720 = vunpack.c.l.b16 %v454
        %v721 = vunpack.c.h.b16 %v454
        %v722 = vunpack.c.l.b16 %v455
        %v723 = vunpack.c.h.b16 %v455
        %v724 = vunpack.c.l.b16 %v456
        %v725 = vunpack.c.h.b16 %v456
        %v726 = vunpack.c.l.b16 %v457
        %v727 = vunpack.c.h.b16 %v457
        %v728 = vunpack.c.l.b16 %v458
        %v729 = vunpack.c.h.b16 %v458
        %v730 = vunpack.c.l.b16 %v459
        %v731 = vunpack.c.h.b16 %v459
        %v732 = vunpack.c.l.b16 %v460
        %v733 = vunpack.c.h.b16 %v460
        %v734 = vunpack.c.l.b16 %v461
        %v735 = vunpack.c.h.b16 %v461
        %v736 = vunpack.c.l.b16 %v462
        %v737 = vunpack.c.h.b16 %v462
        %v738 = vunpack.c.l.b16 %v463
        %v739 = vunpack.c.h.b16 %v463
        %v740 = vunpack.c.l.b16 %v464
        %v741 = vunpack.c.h.b16 %v464
        %v742 = vunpack.c.l.b16 %v465
        %v743 = vunpack.c.h.b16 %v465
        %v744 = vunpack.c.l.b16 %v466
        %v745 = vunpack.c.h.b16 %v466
        %v746 = vunpack.c.l.b16 %v467
        %v747 = vunpack.c.h.b16 %v467
        %v748 = vunpack.c.l.b16 %v468
        %v749 = vunpack.c.h.b16 %v468
        %v750 = vunpack.c.l.b16 %v469
        %v751 = vunpack.c.h.b16 %v469
        %v752 = vunpack.c.l.b16 %v470
        %v753 = vunpack.c.h.b16 %v470
        %v754 = vunpack.c.l.b16 %v471
        %v755 = vunpack.c.h.b16 %v471
        %v756 = vunpack.c.l.b16 %v472
        %v757 = vunpack.c.h.b16 %v472
        %v758 = vunpack.c.l.b16 %v473
        %v759 = vunpack.c.h.b16 %v473
        %v760 = vunpack.c.l.b16 %v474
        %v761 = vunpack.c.h.b16 %v474
        %v762 = vunpack.c.l.b16 %v475
        %v763 = vunpack.c.h.b16 %v475
        %v764 = vunpack.c.l.b16 %v476
        %v765 = vunpack.c.h.b16 %v476
        %v766 = vunpack.c.l.b16 %v477
        %v767 = vunpack.c.h.b16 %v477
        %v768 = vunpack.c.l.b16 %v478
        %v769 = vunpack.c.h.b16 %v478
        %v770 = vunpack.c.l.b16 %v479
        %v771 = vunpack.c.h.b16 %v479
        %v772 = vunpack.c.l.b16 %v480
        %v773 = vunpack.c.h.b16 %v480
        %v774 = vunpack.c.l.b16 %v481
        %v775 = vunpack.c.h.b16 %v481
        %v776 = vunpack.c.l.b16 %v482
        %v777 = vunpack.c.h.b16 %v482
        %v778 = vunpack.c.l.b16 %v483
        %v779 = vunpack.c.h.b16 %v483
        %v780 = vunpack.c.l.b16 %v484
        %v781 = vunpack.c.h.b16 %v484
        %v782 = vunpack.c.l.b16 %v485
        %v783 = vunpack.c.h.b16 %v485
        %v784 = vunpack.c.l.b16 %v486
        %v785 = vunpack.c.h.b16 %v486
        %v786 = vunpack.c.l.b16 %v487
        %v787 = vunpack.c.h.b16 %v487
        %v788 = vunpack.c.l.b16 %v488
        %v789 = vunpack.c.h.b16 %v488
        %v790 = vunpack.c.l.b16 %v489
        %v791 = vunpack.c.h.b16 %v489
        %v792 = vunpack.c.l.b16 %v490
        %v793 = vunpack.c.h.b16 %v490
        %v794 = vunpack.c.l.b16 %v491
        %v795 = vunpack.c.h.b16 %v491
        %v796 = vunpack.c.l.b16 %v492
        %v797 = vunpack.c.h.b16 %v492
        %v798 = vunpack.c.l.b16 %v493
        %v799 = vunpack.c.h.b16 %v493
        %v800 = vunpack.c.l.b16 %v494
        %v801 = vunpack.c.h.b16 %v494
        %v802 = vunpack.c.l.b16 %v495
        %v803 = vunpack.c.h.b16 %v495
        %v804 = vunpack.c.l.b16 %v496
        %v805 = vunpack.c.h.b16 %v496
        %v806 = vunpack.c.l.b16 %v497
        %v807 = vunpack.c.h.b16 %v497
        %v808 = vunpack.c.l.b16 %v498
        %v809 = vunpack.c.h.b16 %v498
        %v810 = vunpack.c.l.b16 %v499
        %v811 = vunpack.c.h.b16 %v499
        %v812 = vunpack.c.l.b16 %v500
        %v813 = vunpack.c.h.b16 %v500
        %v814 = vunpack.c.l.b16 %v501
        %v815 = vunpack.c.h.b16 %v501
        %v816 = vunpack.c.l.b16 %v502
        %v817 = vunpack.c.h.b16 %v502
        %v818 = vunpack.c.l.b16 %v503
        %v819 = vunpack.c.h.b16 %v503
        %v820 = vunpack.c.l.b16 %v504
        %v821 = vunpack.c.h.b16 %v504
        %v822 = vunpack.c.l.b16 %v505
        %v823 = vunpack.c.h.b16 %v505
        %v824 = vunpack.c.l.b16 %v506
        %v825 = vunpack.c.h.b16 %v506
        %v826 = vunpack.c.l.b16 %v507
        %v827 = vunpack.c.h.b16 %v507
        %v828 = vunpack.c.l.b16 %v508
        %v829 = vunpack.c.h.b16 %v508
        %v830 = vunpack.c.l.b16 %v509
        %v831 = vunpack.c.h.b16 %v509
        %v832 = vunpack.c.l.b16 %v510
        %v833 = vunpack.c.h.b16 %v510
        %v834 = vunpack.c.l.b16 %v511
        %v835 = vunpack.c.h.b16 %v511
        %v836 = vunpack.c.l.b16 %v512
        %v837 = vunpack.c.h.b16 %v512
        %v838 = vunpack.c.l.b16 %v513
        %v839 = vunpack.c.h.b16 %v513
        %v840 = vunpack.c.l.b16 %v514
        %v841 = vunpack.c.h.b16 %v514
        %v842 = vunpack.c.l.b16 %v515
        %v843 = vunpack.c.h.b16 %v515
        %v844 = vunpack.c.l.b16 %v516
        %v845 = vunpack.c.h.b16 %v516
        %v846 = vunpack.c.l.b16 %v517
        %v847 = vunpack.c.h.b16 %v517
        %v848 = vunpack.c.l.b16 %v518
        %v849 = vunpack.c.h.b16 %v518
        %v850 = vunpack.c.l.b16 %v519
        %v851 = vunpack.c.h.b16 %v519
        %v852 = vunpack.c.l.b16 %v520
        %v853 = vunpack.c.h.b16 %v520
        %v854 = vunpack.c.l.b16 %v521
        %v855 = vunpack.c.h.b16 %v521
        %v856 = vunpack.c.l.b16 %v522
        %v857 = vunpack.c.h.b16 %v522
        %v858 = vunpack.c.l.b16 %v523
        %v859 = vunpack.c.h.b16 %v523
        %v860 = vunpack.c.l.b16 %v524
        %v861 = vunpack.c.h.b16 %v524
        %v862 = vunpack.c.l.b16 %v525
        %v863 = vunpack.c.h.b16 %v525
        %v864 = vunpack.c.l.b16 %v526
        %v865 = vunpack.c.h.b16 %v526
        %v866 = vunpack.c.l.b16 %v527
        %v867 = vunpack.c.h.b16 %v527
        %v868 = vunpack.c.l.b16 %v528
        %v869 = vunpack.c.h.b16 %v528
        %v870 = vunpack.c.l.b16 %v529
        %v871 = vunpack.c.h.b16 %v529
        %v872 = vunpack.c.l.b16 %v530
        %v873 = vunpack.c.h.b16 %v530
        %v874 = vunpack.c.l.b16 %v531
        %v875 = vunpack.c.h.b16 %v531
        %v876 = vunpack.c.l.b16 %v532
        %v877 = vunpack.c.h.b16 %v532
        %v878 = vunpack.c.l.b16 %v533
        %v879 = vunpack.c.h.b16 %v533
        %v880 = vunpack.c.l.b16 %v534
        %v881 = vunpack.c.h.b16 %v534
        %v882 = vunpack.c.l.b16 %v535
        %v883 = vunpack.c.h.b16 %v535
        %v884 = vunpack.c.l.b16 %v536
        %v885 = vunpack.c.h.b16 %v536
        %v886 = vunpack.c.l.b16 %v537
        %v887 = vunpack.c.h.b16 %v537
        %v888 = vunpack.c.l.b16 %v538
        %v889 = vunpack.c.h.b16 %v538
        %v890 = vunpack.c.l.b16 %v539
        %v891 = vunpack.c.h.b16 %v539
        %v892 = vunpack.c.l.b16 %v540
        %v893 = vunpack.c.h.b16 %v540
        %v894 = vunpack.c.l.b16 %v541
        %v895 = vunpack.c.h.b16 %v541
        %v896 = vunpack.c.l.b16 %v542
        %v897 = vunpack.c.h.b16 %v542
        %v898 = vunpack.c.l.b16 %v543
        %v899 = vunpack.c.h.b16 %v543
        %v900 = vunpack.c.l.b16 %v544
        %v901 = vunpack.c.h.b16 %v544
        %v902 = vunpack.c.l.b16 %v545
        %v903 = vunpack.c.h.b16 %v545
        %v904 = vunpack.c.l.b16 %v546
        %v905 = vunpack.c.h.b16 %v546
        %v906 = vunpack.c.l.b16 %v547
        %v907 = vunpack.c.h.b16 %v547
        %v908 = vunpack.c.l.b16 %v548
        %v909 = vunpack.c.h.b16 %v548
        %v910 = vunpack.c.l.b16 %v549
        %v911 = vunpack.c.h.b16 %v549
        %v912 = vunpack.c.l.b16 %v550
        %v913 = vunpack.c.h.b16 %v550
        %v914 = vunpack.c.l.b16 %v551
        %v915 = vunpack.c.h.b16 %v551
        %v916 = vunpack.c.l.b16 %v552
        %v917 = vunpack.c.h.b16 %v552
        %v918 = vunpack.c.l.b16 %v553
        %v919 = vunpack.c.h.b16 %v553
        %v920 = vunpack.c.l.b16 %v554
        %v921 = vunpack.c.h.b16 %v554
        %v922 = vunpack.c.l.b16 %v555
        %v923 = vunpack.c.h.b16 %v555
        %v924 = vunpack.c.l.b16 %v556
        %v925 = vunpack.c.h.b16 %v556
        %v926 = vunpack.c.l.b16 %v557
        %v927 = vunpack.c.h.b16 %v557
        %v928 = vunpack.c.l.b16 %v558
        %v929 = vunpack.c.h.b16 %v558
        %v930 = vunpack.c.l.b16 %v559
        %v931 = vunpack.c.h.b16 %v559
        %v932 = vunpack.c.l.b16 %v560
        %v933 = vunpack.c.h.b16 %v560
        %v934 = vunpack.c.l.b16 %v561
        %v935 = vunpack.c.h.b16 %v561
        %v936 = vunpack.c.l.b16 %v562
        %v937 = vunpack.c.h.b16 %v562
        %v938 = vunpack.c.l.b16 %v563
        %v939 = vunpack.c.h.b16 %v563
        %v940 = vunpack.c.l.b16 %v564
        %v941 = vunpack.c.h.b16 %v564
        %v942 = vunpack.c.l.b16 %v565
        %v943 = vunpack.c.h.b16 %v565
        %v944 = vunpack.c.l.b16 %v566
        %v945 = vunpack.c.h.b16 %v566
        %v946 = vunpack.c.l.b16 %v567
        %v947 = vunpack.c.h.b16 %v567
        %v948 = vunpack.c.l.b16 %v568
        %v949 = vunpack.c.h.b16 %v568
        %v950 = vunpack.c.l.b16 %v569
        %v951 = vunpack.c.h.b16 %v569
        %v952 = vunpack.c.l.b16 %v570
        %v953 = vunpack.c.h.b16 %v570
        %v954 = vunpack.c.l.b16 %v571
        %v955 = vunpack.c.h.b16 %v571
        %v956 = vpack.c.b16 %v716, %v700
        %v957 = vpack.c.b16 %v717, %v701
        %v958 = vpack.c.b16 %v718, %v702
        %v959 = vpack.c.b16 %v719, %v703
        %v960 = vpack.c.b16 %v720, %v704
        %v961 = vpack.c.b16 %v721, %v705
        %v962 = vpack.c.b16 %v722, %v706
        %v963 = vpack.c.b16 %v723, %v707
        %v964 = vpack.c.b16 %v724, %v708
        %v965 = vpack.c.b16 %v725, %v709
        %v966 = vpack.c.b16 %v726, %v710
        %v967 = vpack.c.b16 %v727, %v711
        %v968 = vpack.c.b16 %v728, %v712
        %v969 = vpack.c.b16 %v729, %v713
        %v970 = vpack.c.b16 %v730, %v714
        %v971 = vpack.c.b16 %v731, %v715
        %v972 = vpack.c.b16 %v748, %v732
        %v973 = vpack.c.b16 %v749, %v733
        %v974 = vpack.c.b16 %v750, %v734
        %v975 = vpack.c.b16 %v751, %v735
        %v976 = vpack.c.b16 %v752, %v736
        %v977 = vpack.c.b16 %v753, %v737
        %v978 = vpack.c.b16 %v754, %v738
        %v979 = vpack.c.b16 %v755, %v739
        %v980 = vpack.c.b16 %v756, %v740
        %v981 = vpack.c.b16 %v757, %v741
        %v982 = vpack.c.b16 %v758, %v742
        %v983 = vpack.c.b16 %v759, %v743
        %v984 = vpack.c.b16 %v760, %v744
        %v985 = vpack.c.b16 %v761, %v745
        %v986 = vpack.c.b16 %v762, %v746
        %v987 = vpack.c.b16 %v763, %v747
        %v988 = vpack.c.b16 %v780, %v764
        %v989 = vpack.c.b16 %v781, %v765
        %v990 = vpack.c.b16 %v782, %v766
        %v991 = vpack.c.b16 %v783, %v767
        %v992 = vpack.c.b16 %v784, %v768
        %v993 = vpack.c.b16 %v785, %v769
        %v994 = vpack.c.b16 %v786, %v770
        %v995 = vpack.c.b16 %v787, %v771
        %v996 = vpack.c.b16 %v788, %v772
        %v997 = vpack.c.b16 %v789, %v773
        %v998 = vpack.c.b16 %v790, %v774
        %v999 = vpack.c.b16 %v791, %v775
        %v1000 = vpack.c.b16 %v792, %v776
        %v1001 = vpack.c.b16 %v793, %v777
        %v1002 = vpack.c.b16 %v794, %v778
        %v1003 = vpack.c.b16 %v795, %v779
        %v1004 = vpack.c.b16 %v812, %v796
        %v1005 = vpack.c.b16 %v813, %v797
        %v1006 = vpack.c.b16 %v814, %v798
        %v1007 = vpack.c.b16 %v815, %v799
        %v1008 = vpack.c.b16 %v816, %v800
        %v1009 = vpack.c.b16 %v817, %v801
        %v1010 = vpack.c.b16 %v818, %v802
        %v1011 = vpack.c.b16 %v819, %v803
        %v1012 = vpack.c.b16 %v820, %v804
        %v1013 = vpack.c.b16 %v821, %v805
        %v1014 = vpack.c.b16 %v822, %v806
        %v1015 = vpack.c.b16 %v823, %v807
        %v1016 = vpack.c.b16 %v824, %v808
        %v1017 = vpack.c.b16 %v825, %v809
        %v1018 = vpack.c.b16 %v826, %v810
        %v1019 = vpack.c.b16 %v827, %v811
        %v1020 = vpack.c.b16 %v844, %v828
        %v1021 = vpack.c.b16 %v845, %v829
        %v1022 = vpack.c.b16 %v846, %v830
        %v1023 = vpack.c.b16 %v847, %v831
        %v1024 = vpack.c.b16 %v848, %v832
        %v1025 = vpack.c.b16 %v849, %v833
        %v1026 = vpack.c.b16 %v850, %v834
        %v1027 = vpack.c.b16 %v851, %v835
        %v1028 = vpack.c.b16 %v852, %v836
        %v1029 = vpack.c.b16 %v853, %v837
        %v1030 = vpack.c.b16 %v854, %v838
        %v1031 = vpack.c.b16 %v855, %v839
        %v1032 = vpack.c.b16 %v856, %v840
        %v1033 = vpack.c.b16 %v857, %v841
        %v1034 = vpack.c.b16 %v858, %v842
        %v1035 = vpack.c.b16 %v859, %v843
        %v1036 = vpack.c.b16 %v876, %v860
        %v1037 = vpack.c.b16 %v877, %v861
        %v1038 = vpack.c.b16 %v878, %v862
        %v1039 = vpack.c.b16 %v879, %v863
        %v1040 = vpack.c.b16 %v880, %v864
        %v1041 = vpack.c.b16 %v881, %v865
        %v1042 = vpack.c.b16 %v882, %v866
        %v1043 = vpack.c.b16 %v883, %v867
        %v1044 = vpack.c.b16 %v884, %v868
        %v1045 = vpack.c.b16 %v885, %v869
        %v1046 = vpack.c.b16 %v886, %v870
        %v1047 = vpack.c.b16 %v887, %v871
        %v1048 = vpack.c.b16 %v888, %v872
        %v1049 = vpack.c.b16 %v889, %v873
        %v1050 = vpack.c.b16 %v890, %v874
        %v1051 = vpack.c.b16 %v891, %v875
        %v1052 = vpack.c.b16 %v908, %v892
        %v1053 = vpack.c.b16 %v909, %v893
        %v1054 = vpack.c.b16 %v910, %v894
        %v1055 = vpack.c.b16 %v911, %v895
        %v1056 = vpack.c.b16 %v912, %v896
        %v1057 = vpack.c.b16 %v913, %v897
        %v1058 = vpack.c.b16 %v914, %v898
        %v1059 = vpack.c.b16 %v915, %v899
        %v1060 = vpack.c.b16 %v916, %v900
        %v1061 = vpack.c.b16 %v917, %v901
        %v1062 = vpack.c.b16 %v918, %v902
        %v1063 = vpack.c.b16 %v919, %v903
        %v1064 = vpack.c.b16 %v920, %v904
        %v1065 = vpack.c.b16 %v921, %v905
        %v1066 = vpack.c.b16 %v922, %v906
        %v1067 = vpack.c.b16 %v923, %v907
        %v1068 = vpack.c.b16 %v940, %v924
        %v1069 = vpack.c.b16 %v941, %v925
        %v1070 = vpack.c.b16 %v942, %v926
        %v1071 = vpack.c.b16 %v943, %v927
        %v1072 = vpack.c.b16 %v944, %v928
        %v1073 = vpack.c.b16 %v945, %v929
        %v1074 = vpack.c.b16 %v946, %v930
        %v1075 = vpack.c.b16 %v947, %v931
        %v1076 = vpack.c.b16 %v948, %v932
        %v1077 = vpack.c.b16 %v949, %v933
        %v1078 = vpack.c.b16 %v950, %v934
        %v1079 = vpack.c.b16 %v951, %v935
        %v1080 = vpack.c.b16 %v952, %v936
        %v1081 = vpack.c.b16 %v953, %v937
        %v1082 = vpack.c.b16 %v954, %v938
        %v1083 = vpack.c.b16 %v955, %v939
        %1212 = vmatprep.subr.bf16.mxu0 %v957
        %1213 = vmatpush1.bf16.msra.mxu0 %v956
        %1214 = vmatprep.subr.bf16.mxu0 %v973
        %1215 = vmatpush1.bf16.msra.mxu0 %v972
        %1216 = vmatprep.subr.bf16.mxu0 %v989
        %1217 = vmatpush1.bf16.msra.mxu0 %v988
        %1218 = vmatprep.subr.bf16.mxu0 %v1005
        %1219 = vmatpush1.bf16.msra.mxu0 %v1004
        %1220 = vmatprep.subr.bf16.mxu0 %v1021
        %1221 = vmatpush1.bf16.msra.mxu0 %v1020
        %1222 = vmatprep.subr.bf16.mxu0 %v1037
        %1223 = vmatpush1.bf16.msra.mxu0 %v1036
        %1224 = vmatprep.subr.bf16.mxu0 %v1053
        %1225 = vmatpush1.bf16.msra.mxu0 %v1052
        %1226 = vmatprep.subr.bf16.mxu0 %v1069
        %1227 = vmatpush1.bf16.msra.mxu0 %v1068
        %1228 = vmatprep.subr.bf16.mxu0 0
        %1229 = vmatpush1.bf16.msra.mxu0 0
        %1230 = vmatprep.subr.bf16.mxu0 0
        %1231 = vmatpush1.bf16.msra.mxu0 0
        %1232 = vmatprep.subr.bf16.mxu0 0
        %1233 = vmatpush1.bf16.msra.mxu0 0
        %1234 = vmatprep.subr.bf16.mxu0 0
        %1235 = vmatpush1.bf16.msra.mxu0 0
        %1236 = vmatprep.subr.bf16.mxu0 0
        %1237 = vmatpush1.bf16.msra.mxu0 0
        %1238 = vmatprep.subr.bf16.mxu0 0
        %1239 = vmatpush1.bf16.msra.mxu0 0
        %1240 = vmatprep.subr.bf16.mxu0 0
        %1241 = vmatpush1.bf16.msra.mxu0 0
        %1242 = vmatprep.subr.bf16.mxu0 0
        %1243 = vmatpush1.bf16.msra.mxu0 0
        %1244 = vmatprep.mubr.bf16.mxu0 0
        %1245 = vmatmul.mubr.bf16.gmra.mrb[0].mxu0 %v443
        %v1246 = vpop.f32.mrb[0].mxu0
        %v1247 = vadd.f32 0.0, %v1246
        %v1248 = vpop.f32.mrb[0].mxu0
        %v1249 = vadd.f32 0.0, %v1248
        %v1250 = vpop.f32.mrb[0].mxu0
        %v1251 = vpop.f32.mrb[0].mxu0
        %1252 = vdwg.mxu0
        %1253 = vmatprep.subr.bf16.mxu0 %v959
        %1254 = vmatpush1.bf16.msra.mxu0 %v958
        %1255 = vmatprep.subr.bf16.mxu0 %v975
        %1256 = vmatpush1.bf16.msra.mxu0 %v974
        %1257 = vmatprep.subr.bf16.mxu0 %v991
        %1258 = vmatpush1.bf16.msra.mxu0 %v990
        %1259 = vmatprep.subr.bf16.mxu0 %v1007
        %1260 = vmatpush1.bf16.msra.mxu0 %v1006
        %1261 = vmatprep.subr.bf16.mxu0 %v1023
        %1262 = vmatpush1.bf16.msra.mxu0 %v1022
        %1263 = vmatprep.subr.bf16.mxu0 %v1039
        %1264 = vmatpush1.bf16.msra.mxu0 %v1038
        %1265 = vmatprep.subr.bf16.mxu0 %v1055
        %1266 = vmatpush1.bf16.msra.mxu0 %v1054
        %1267 = vmatprep.subr.bf16.mxu0 %v1071
        %1268 = vmatpush1.bf16.msra.mxu0 %v1070
        %1269 = vmatprep.subr.bf16.mxu0 0
        %1270 = vmatpush1.bf16.msra.mxu0 0
        %1271 = vmatprep.subr.bf16.mxu0 0
        %1272 = vmatpush1.bf16.msra.mxu0 0
        %1273 = vmatprep.subr.bf16.mxu0 0
        %1274 = vmatpush1.bf16.msra.mxu0 0
        %1275 = vmatprep.subr.bf16.mxu0 0
        %1276 = vmatpush1.bf16.msra.mxu0 0
        %1277 = vmatprep.subr.bf16.mxu0 0
        %1278 = vmatpush1.bf16.msra.mxu0 0
        %1279 = vmatprep.subr.bf16.mxu0 0
        %1280 = vmatpush1.bf16.msra.mxu0 0
        %1281 = vmatprep.subr.bf16.mxu0 0
        %1282 = vmatpush1.bf16.msra.mxu0 0
        %1283 = vmatprep.subr.bf16.mxu0 0
        %1284 = vmatpush1.bf16.msra.mxu0 0
        %1285 = vmatprep.mubr.bf16.mxu0 0
        %1286 = vmatmul.mubr.bf16.gmra.mrb[0].mxu0 %v443
        %v1287 = vpop.f32.mrb[0].mxu0
        %v1288 = vadd.f32 0.0, %v1287
        %v1289 = vpop.f32.mrb[0].mxu0
        %v1290 = vadd.f32 0.0, %v1289
        %v1291 = vpop.f32.mrb[0].mxu0
        %v1292 = vpop.f32.mrb[0].mxu0
        %1293 = vdwg.mxu0
        %1294 = vmatprep.subr.bf16.mxu0 %v961
        %1295 = vmatpush1.bf16.msra.mxu0 %v960
        %1296 = vmatprep.subr.bf16.mxu0 %v977
        %1297 = vmatpush1.bf16.msra.mxu0 %v976
        %1298 = vmatprep.subr.bf16.mxu0 %v993
        %1299 = vmatpush1.bf16.msra.mxu0 %v992
        %1300 = vmatprep.subr.bf16.mxu0 %v1009
        %1301 = vmatpush1.bf16.msra.mxu0 %v1008
        %1302 = vmatprep.subr.bf16.mxu0 %v1025
        %1303 = vmatpush1.bf16.msra.mxu0 %v1024
        %1304 = vmatprep.subr.bf16.mxu0 %v1041
        %1305 = vmatpush1.bf16.msra.mxu0 %v1040
        %1306 = vmatprep.subr.bf16.mxu0 %v1057
        %1307 = vmatpush1.bf16.msra.mxu0 %v1056
        %1308 = vmatprep.subr.bf16.mxu0 %v1073
        %1309 = vmatpush1.bf16.msra.mxu0 %v1072
        %1310 = vmatprep.subr.bf16.mxu0 0
        %1311 = vmatpush1.bf16.msra.mxu0 0
        %1312 = vmatprep.subr.bf16.mxu0 0
        %1313 = vmatpush1.bf16.msra.mxu0 0
        %1314 = vmatprep.subr.bf16.mxu0 0
        %1315 = vmatpush1.bf16.msra.mxu0 0
        %1316 = vmatprep.subr.bf16.mxu0 0
        %1317 = vmatpush1.bf16.msra.mxu0 0
        %1318 = vmatprep.subr.bf16.mxu0 0
        %1319 = vmatpush1.bf16.msra.mxu0 0
        %1320 = vmatprep.subr.bf16.mxu0 0
        %1321 = vmatpush1.bf16.msra.mxu0 0
        %1322 = vmatprep.subr.bf16.mxu0 0
        %1323 = vmatpush1.bf16.msra.mxu0 0
        %1324 = vmatprep.subr.bf16.mxu0 0
        %1325 = vmatpush1.bf16.msra.mxu0 0
        %1326 = vmatprep.mubr.bf16.mxu0 0
        %1327 = vmatmul.mubr.bf16.gmra.mrb[0].mxu0 %v443
        %v1328 = vpop.f32.mrb[0].mxu0
        %v1329 = vadd.f32 0.0, %v1328
        %v1330 = vpop.f32.mrb[0].mxu0
        %v1331 = vadd.f32 0.0, %v1330
        %v1332 = vpop.f32.mrb[0].mxu0
        %v1333 = vpop.f32.mrb[0].mxu0
        %1334 = vdwg.mxu0
        %1335 = vmatprep.subr.bf16.mxu0 %v963
        %1336 = vmatpush1.bf16.msra.mxu0 %v962
        %1337 = vmatprep.subr.bf16.mxu0 %v979
        %1338 = vmatpush1.bf16.msra.mxu0 %v978
        %1339 = vmatprep.subr.bf16.mxu0 %v995
        %1340 = vmatpush1.bf16.msra.mxu0 %v994
        %1341 = vmatprep.subr.bf16.mxu0 %v1011
        %1342 = vmatpush1.bf16.msra.mxu0 %v1010
        %1343 = vmatprep.subr.bf16.mxu0 %v1027
        %1344 = vmatpush1.bf16.msra.mxu0 %v1026
        %1345 = vmatprep.subr.bf16.mxu0 %v1043
        %1346 = vmatpush1.bf16.msra.mxu0 %v1042
        %1347 = vmatprep.subr.bf16.mxu0 %v1059
        %1348 = vmatpush1.bf16.msra.mxu0 %v1058
        %1349 = vmatprep.subr.bf16.mxu0 %v1075
        %1350 = vmatpush1.bf16.msra.mxu0 %v1074
        %1351 = vmatprep.subr.bf16.mxu0 0
        %1352 = vmatpush1.bf16.msra.mxu0 0
        %1353 = vmatprep.subr.bf16.mxu0 0
        %1354 = vmatpush1.bf16.msra.mxu0 0
        %1355 = vmatprep.subr.bf16.mxu0 0
        %1356 = vmatpush1.bf16.msra.mxu0 0
        %1357 = vmatprep.subr.bf16.mxu0 0
        %1358 = vmatpush1.bf16.msra.mxu0 0
        %1359 = vmatprep.subr.bf16.mxu0 0
        %1360 = vmatpush1.bf16.msra.mxu0 0
        %1361 = vmatprep.subr.bf16.mxu0 0
        %1362 = vmatpush1.bf16.msra.mxu0 0
        %1363 = vmatprep.subr.bf16.mxu0 0
        %1364 = vmatpush1.bf16.msra.mxu0 0
        %1365 = vmatprep.subr.bf16.mxu0 0
        %1366 = vmatpush1.bf16.msra.mxu0 0
        %1367 = vmatprep.mubr.bf16.mxu0 0
        %1368 = vmatmul.mubr.bf16.gmra.mrb[0].mxu0 %v443
        %v1369 = vpop.f32.mrb[0].mxu0
        %v1370 = vadd.f32 0.0, %v1369
        %v1371 = vpop.f32.mrb[0].mxu0
        %v1372 = vadd.f32 0.0, %v1371
        %v1373 = vpop.f32.mrb[0].mxu0
        %v1374 = vpop.f32.mrb[0].mxu0
        %1375 = vdwg.mxu0
        %1376 = vmatprep.subr.bf16.mxu0 %v965
        %1377 = vmatpush1.bf16.msra.mxu0 %v964
        %1378 = vmatprep.subr.bf16.mxu0 %v981
        %1379 = vmatpush1.bf16.msra.mxu0 %v980
        %1380 = vmatprep.subr.bf16.mxu0 %v997
        %1381 = vmatpush1.bf16.msra.mxu0 %v996
        %1382 = vmatprep.subr.bf16.mxu0 %v1013
        %1383 = vmatpush1.bf16.msra.mxu0 %v1012
        %1384 = vmatprep.subr.bf16.mxu0 %v1029
        %1385 = vmatpush1.bf16.msra.mxu0 %v1028
        %1386 = vmatprep.subr.bf16.mxu0 %v1045
        %1387 = vmatpush1.bf16.msra.mxu0 %v1044
        %1388 = vmatprep.subr.bf16.mxu0 %v1061
        %1389 = vmatpush1.bf16.msra.mxu0 %v1060
        %1390 = vmatprep.subr.bf16.mxu0 %v1077
        %1391 = vmatpush1.bf16.msra.mxu0 %v1076
        %1392 = vmatprep.subr.bf16.mxu0 0
        %1393 = vmatpush1.bf16.msra.mxu0 0
        %1394 = vmatprep.subr.bf16.mxu0 0
        %1395 = vmatpush1.bf16.msra.mxu0 0
        %1396 = vmatprep.subr.bf16.mxu0 0
        %1397 = vmatpush1.bf16.msra.mxu0 0
        %1398 = vmatprep.subr.bf16.mxu0 0
        %1399 = vmatpush1.bf16.msra.mxu0 0
        %1400 = vmatprep.subr.bf16.mxu0 0
        %1401 = vmatpush1.bf16.msra.mxu0 0
        %1402 = vmatprep.subr.bf16.mxu0 0
        %1403 = vmatpush1.bf16.msra.mxu0 0
        %1404 = vmatprep.subr.bf16.mxu0 0
        %1405 = vmatpush1.bf16.msra.mxu0 0
        %1406 = vmatprep.subr.bf16.mxu0 0
        %1407 = vmatpush1.bf16.msra.mxu0 0
        %1408 = vmatprep.mubr.bf16.mxu0 0
        %1409 = vmatmul.mubr.bf16.gmra.mrb[0].mxu0 %v443
        %v1410 = vpop.f32.mrb[0].mxu0
        %v1411 = vadd.f32 0.0, %v1410
        %v1412 = vpop.f32.mrb[0].mxu0
        %v1413 = vadd.f32 0.0, %v1412
        %v1414 = vpop.f32.mrb[0].mxu0
        %v1415 = vpop.f32.mrb[0].mxu0
        %1416 = vdwg.mxu0
        %1417 = vmatprep.subr.bf16.mxu0 %v967
        %1418 = vmatpush1.bf16.msra.mxu0 %v966
        %1419 = vmatprep.subr.bf16.mxu0 %v983
        %1420 = vmatpush1.bf16.msra.mxu0 %v982
        %1421 = vmatprep.subr.bf16.mxu0 %v999
        %1422 = vmatpush1.bf16.msra.mxu0 %v998
        %1423 = vmatprep.subr.bf16.mxu0 %v1015
        %1424 = vmatpush1.bf16.msra.mxu0 %v1014
        %1425 = vmatprep.subr.bf16.mxu0 %v1031
        %1426 = vmatpush1.bf16.msra.mxu0 %v1030
        %1427 = vmatprep.subr.bf16.mxu0 %v1047
        %1428 = vmatpush1.bf16.msra.mxu0 %v1046
        %1429 = vmatprep.subr.bf16.mxu0 %v1063
        %1430 = vmatpush1.bf16.msra.mxu0 %v1062
        %1431 = vmatprep.subr.bf16.mxu0 %v1079
        %1432 = vmatpush1.bf16.msra.mxu0 %v1078
        %1433 = vmatprep.subr.bf16.mxu0 0
        %1434 = vmatpush1.bf16.msra.mxu0 0
        %1435 = vmatprep.subr.bf16.mxu0 0
        %1436 = vmatpush1.bf16.msra.mxu0 0
        %1437 = vmatprep.subr.bf16.mxu0 0
        %1438 = vmatpush1.bf16.msra.mxu0 0
        %1439 = vmatprep.subr.bf16.mxu0 0
        %1440 = vmatpush1.bf16.msra.mxu0 0
        %1441 = vmatprep.subr.bf16.mxu0 0
        %1442 = vmatpush1.bf16.msra.mxu0 0
        %1443 = vmatprep.subr.bf16.mxu0 0
        %1444 = vmatpush1.bf16.msra.mxu0 0
        %1445 = vmatprep.subr.bf16.mxu0 0
        %1446 = vmatpush1.bf16.msra.mxu0 0
        %1447 = vmatprep.subr.bf16.mxu0 0
        %1448 = vmatpush1.bf16.msra.mxu0 0
        %1449 = vmatprep.mubr.bf16.mxu0 0
        %1450 = vmatmul.mubr.bf16.gmra.mrb[0].mxu0 %v443
        %v1451 = vpop.f32.mrb[0].mxu0
        %v1452 = vadd.f32 0.0, %v1451
        %v1453 = vpop.f32.mrb[0].mxu0
        %v1454 = vadd.f32 0.0, %v1453
        %v1455 = vpop.f32.mrb[0].mxu0
        %v1456 = vpop.f32.mrb[0].mxu0
        %1457 = vdwg.mxu0
        %1458 = vmatprep.subr.bf16.mxu0 %v969
        %1459 = vmatpush1.bf16.msra.mxu0 %v968
        %1460 = vmatprep.subr.bf16.mxu0 %v985
        %1461 = vmatpush1.bf16.msra.mxu0 %v984
        %1462 = vmatprep.subr.bf16.mxu0 %v1001
        %1463 = vmatpush1.bf16.msra.mxu0 %v1000
        %1464 = vmatprep.subr.bf16.mxu0 %v1017
        %1465 = vmatpush1.bf16.msra.mxu0 %v1016
        %1466 = vmatprep.subr.bf16.mxu0 %v1033
        %1467 = vmatpush1.bf16.msra.mxu0 %v1032
        %1468 = vmatprep.subr.bf16.mxu0 %v1049
        %1469 = vmatpush1.bf16.msra.mxu0 %v1048
        %1470 = vmatprep.subr.bf16.mxu0 %v1065
        %1471 = vmatpush1.bf16.msra.mxu0 %v1064
        %1472 = vmatprep.subr.bf16.mxu0 %v1081
        %1473 = vmatpush1.bf16.msra.mxu0 %v1080
        %1474 = vmatprep.subr.bf16.mxu0 0
        %1475 = vmatpush1.bf16.msra.mxu0 0
        %1476 = vmatprep.subr.bf16.mxu0 0
        %1477 = vmatpush1.bf16.msra.mxu0 0
        %1478 = vmatprep.subr.bf16.mxu0 0
        %1479 = vmatpush1.bf16.msra.mxu0 0
        %1480 = vmatprep.subr.bf16.mxu0 0
        %1481 = vmatpush1.bf16.msra.mxu0 0
        %1482 = vmatprep.subr.bf16.mxu0 0
        %1483 = vmatpush1.bf16.msra.mxu0 0
        %1484 = vmatprep.subr.bf16.mxu0 0
        %1485 = vmatpush1.bf16.msra.mxu0 0
        %1486 = vmatprep.subr.bf16.mxu0 0
        %1487 = vmatpush1.bf16.msra.mxu0 0
        %1488 = vmatprep.subr.bf16.mxu0 0
        %1489 = vmatpush1.bf16.msra.mxu0 0
        %1490 = vmatprep.mubr.bf16.mxu0 0
        %1491 = vmatmul.mubr.bf16.gmra.mrb[0].mxu0 %v443
        %v1492 = vpop.f32.mrb[0].mxu0
        %v1493 = vadd.f32 0.0, %v1492
        %v1494 = vpop.f32.mrb[0].mxu0
        %v1495 = vadd.f32 0.0, %v1494
        %v1496 = vpop.f32.mrb[0].mxu0
        %v1497 = vpop.f32.mrb[0].mxu0
        %1498 = vdwg.mxu0
        %1499 = vmatprep.subr.bf16.mxu0 %v971
        %1500 = vmatpush1.bf16.msra.mxu0 %v970
        %1501 = vmatprep.subr.bf16.mxu0 %v987
        %1502 = vmatpush1.bf16.msra.mxu0 %v986
        %1503 = vmatprep.subr.bf16.mxu0 %v1003
        %1504 = vmatpush1.bf16.msra.mxu0 %v1002
        %1505 = vmatprep.subr.bf16.mxu0 %v1019
        %1506 = vmatpush1.bf16.msra.mxu0 %v1018
        %1507 = vmatprep.subr.bf16.mxu0 %v1035
        %1508 = vmatpush1.bf16.msra.mxu0 %v1034
        %1509 = vmatprep.subr.bf16.mxu0 %v1051
        %1510 = vmatpush1.bf16.msra.mxu0 %v1050
        %1511 = vmatprep.subr.bf16.mxu0 %v1067
        %1512 = vmatpush1.bf16.msra.mxu0 %v1066
        %1513 = vmatprep.subr.bf16.mxu0 %v1083
        %1514 = vmatpush1.bf16.msra.mxu0 %v1082
        %1515 = vmatprep.subr.bf16.mxu0 0
        %1516 = vmatpush1.bf16.msra.mxu0 0
        %1517 = vmatprep.subr.bf16.mxu0 0
        %1518 = vmatpush1.bf16.msra.mxu0 0
        %1519 = vmatprep.subr.bf16.mxu0 0
        %1520 = vmatpush1.bf16.msra.mxu0 0
        %1521 = vmatprep.subr.bf16.mxu0 0
        %1522 = vmatpush1.bf16.msra.mxu0 0
        %1523 = vmatprep.subr.bf16.mxu0 0
        %1524 = vmatpush1.bf16.msra.mxu0 0
        %1525 = vmatprep.subr.bf16.mxu0 0
        %1526 = vmatpush1.bf16.msra.mxu0 0
        %1527 = vmatprep.subr.bf16.mxu0 0
        %1528 = vmatpush1.bf16.msra.mxu0 0
        %1529 = vmatprep.subr.bf16.mxu0 0
        %1530 = vmatpush1.bf16.msra.mxu0 0
        %1531 = vmatprep.mubr.bf16.mxu0 0
        %1532 = vmatmul.mubr.bf16.gmra.mrb[0].mxu0 %v443
        %v1533 = vpop.f32.mrb[0].mxu0
        %v1534 = vadd.f32 0.0, %v1533
        %v1535 = vpop.f32.mrb[0].mxu0
        %v1536 = vadd.f32 0.0, %v1535
        %v1537 = vpop.f32.mrb[0].mxu0
        %v1538 = vpop.f32.mrb[0].mxu0
        %1539 = vdwg.mxu0
        %v1540 = vld [vmem:[#allocation2] sm:$0xff]
        %v1541 = vadd.f32 %v1247, %v1249
        %v1542 = vadd.f32 %v1541, %v1288
        %v1543 = vadd.f32 %v1542, %v1290
        %v1544 = vadd.f32 %v1543, %v1329
        %v1545 = vadd.f32 %v1544, %v1331
        %v1546 = vadd.f32 %v1545, %v1370
        %v1547 = vadd.f32 %v1546, %v1372
        %v1548 = vadd.f32 %v1547, %v1411
        %v1549 = vadd.f32 %v1548, %v1413
        %v1550 = vadd.f32 %v1549, %v1452
        %v1551 = vadd.f32 %v1550, %v1454
        %v1552 = vadd.f32 %v1551, %v1493
        %v1553 = vadd.f32 %v1552, %v1495
        %v1554 = vadd.f32 %v1553, %v1534
        %v1555 = vadd.f32 %v1554, %v1536
        %1556 = vadd.xlane.f32.xlu0 %v1555
        %v1557 = vpop.xlane.xlu0 %1556
        %v1558 = vadd.f32 %v1540, %v1557
        %vm1559 = vcmask 7168
        %1560 = vst.msk [vmem:[#allocation2] sm:$0xff] %vm1559, %v1558
        %v1561 = vld [vmem:[#allocation3] sm:$0xff]
        %v1562 = vmul.f32 %v1247, %v1247
        %v1563 = vmul.f32 %v1249, %v1249
        %v1564 = vmul.f32 %v1288, %v1288
        %v1565 = vmul.f32 %v1290, %v1290
        %v1566 = vmul.f32 %v1329, %v1329
        %v1567 = vmul.f32 %v1331, %v1331
        %v1568 = vmul.f32 %v1370, %v1370
        %v1569 = vmul.f32 %v1372, %v1372
        %v1570 = vmul.f32 %v1411, %v1411
        %v1571 = vmul.f32 %v1413, %v1413
        %v1572 = vmul.f32 %v1452, %v1452
        %v1573 = vmul.f32 %v1454, %v1454
        %v1574 = vmul.f32 %v1493, %v1493
        %v1575 = vmul.f32 %v1495, %v1495
        %v1576 = vmul.f32 %v1534, %v1534
        %v1577 = vmul.f32 %v1536, %v1536
        %v1578 = vadd.f32 %v1562, %v1563
        %v1579 = vadd.f32 %v1578, %v1564
        %v1580 = vadd.f32 %v1579, %v1565
        %v1581 = vadd.f32 %v1580, %v1566
        %v1582 = vadd.f32 %v1581, %v1567
        %v1583 = vadd.f32 %v1582, %v1568
        %v1584 = vadd.f32 %v1583, %v1569
        %v1585 = vadd.f32 %v1584, %v1570
        %v1586 = vadd.f32 %v1585, %v1571
        %v1587 = vadd.f32 %v1586, %v1572
        %v1588 = vadd.f32 %v1587, %v1573
        %v1589 = vadd.f32 %v1588, %v1574
        %v1590 = vadd.f32 %v1589, %v1575
        %v1591 = vadd.f32 %v1590, %v1576
        %v1592 = vadd.f32 %v1591, %v1577
        %1593 = vadd.xlane.f32.xlu0 %v1592
        %v1594 = vpop.xlane.xlu0 %1593
        %v1595 = vadd.f32 %v1561, %v1594
        %1596 = vst.msk [vmem:[#allocation3] sm:$0xff] %vm1559, %v1595
        %s1597 = smul.u32 %s18, 2048
        %s1598 = sshra.s32 %s1597, 7
        %s1599 = sand.u32 %s1597, 127
        %s1600 = smul.addr %s1598, 8
        %s1601 = scalar_lea.vmem %s434, %s1600
        %1602 = vst [vmem:[%s1601] sm:$0xff] %v1247
        %1603 = vst [vmem:[%s1601 + $0x8] sm:$0xff] %v1249
        %1604 = vst [vmem:[%s1601 + $0x10] sm:$0xff] %v1288
        %1605 = vst [vmem:[%s1601 + $0x18] sm:$0xff] %v1290
        %1606 = vst [vmem:[%s1601 + $0x20] sm:$0xff] %v1329
        %1607 = vst [vmem:[%s1601 + $0x28] sm:$0xff] %v1331
        %1608 = vst [vmem:[%s1601 + $0x30] sm:$0xff] %v1370
        %1609 = vst [vmem:[%s1601 + $0x38] sm:$0xff] %v1372
        %1610 = vst [vmem:[%s1601 + $0x40] sm:$0xff] %v1411
        %1611 = vst [vmem:[%s1601 + $0x48] sm:$0xff] %v1413
        %1612 = vst [vmem:[%s1601 + $0x50] sm:$0xff] %v1452
        %1613 = vst [vmem:[%s1601 + $0x58] sm:$0xff] %v1454
        %1614 = vst [vmem:[%s1601 + $0x60] sm:$0xff] %v1493
        %1615 = vst [vmem:[%s1601 + $0x68] sm:$0xff] %v1495
        %1616 = vst [vmem:[%s1601 + $0x70] sm:$0xff] %v1534
        %1617 = vst [vmem:[%s1601 + $0x78] sm:$0xff] %v1536
        %p1618 = scmp.eq.s32.totalorder %s18, 1
        // Predicated region
        $region56: #{conv_block_forward.2} parent=46 // pred_check
          %p1619 = pneg %p1618
        $region57: #{conv_block_forward.2} parent=46 // pred_check_branch
          %1621 = sbr.rel (%p1619) target = $region59
        $region58: #{conv_block_forward.2} parent=46 // pred_region
          %v1622 = vld [vmem:[#allocation2] sm:$0xff]
          %v1623 = vmul.f32 %v1622, 0.00024414063
          %v1624 = vld [vmem:[#allocation3] sm:$0xff]
          %v1625 = vmul.f32 %v1624, 0.00024414063
          %v1626 = vmul.f32 %v1623, %v1623
          %v1627 = vsub.f32 %v1625, %v1626
          %v1628 = vmax.f32 %v1627, 0.0
          %v1629 = vadd.f32 %v1628, 1e-05
          %v1630 = vrsqrt.pop %v1629
          %v1631 = vmul.f32 %v1623, %v1630
          loop: start=0, step=1, limit=2
          $region60: #{conv_block_forward.2} parent=58 // loop_pre_header
            _
          $region61: #{conv_block_forward.2} parent=58 // loop_header
            %s1633 = sphi 0, %s1637
            %p1634 = scmp.ge.s32.totalorder %s1633, 2
          $region62: #{conv_block_forward.2} parent=58 // loop_header_branch
            %1636 = sbr.rel (%p1634) target = $region66
          $region63: #{conv_block_forward.2} parent=58 // loop_body
            %s1638 = smul.u32 %s1633, 2048
            %s1639 = sshra.s32 %s1638, 7
            %s1640 = sand.u32 %s1638, 127
            %s1641 = smul.addr %s1639, 8
            %s1642 = scalar_lea.vmem %s434, %s1641
            %v1643 = vld [vmem:[%s1642] sm:$0xff]
            %v1644 = vld [vmem:[%s1642 + $0x8] sm:$0xff]
            %v1645 = vld [vmem:[%s1642 + $0x10] sm:$0xff]
            %v1646 = vld [vmem:[%s1642 + $0x18] sm:$0xff]
            %v1647 = vld [vmem:[%s1642 + $0x20] sm:$0xff]
            %v1648 = vld [vmem:[%s1642 + $0x28] sm:$0xff]
            %v1649 = vld [vmem:[%s1642 + $0x30] sm:$0xff]
            %v1650 = vld [vmem:[%s1642 + $0x38] sm:$0xff]
            %v1651 = vld [vmem:[%s1642 + $0x40] sm:$0xff]
            %v1652 = vld [vmem:[%s1642 + $0x48] sm:$0xff]
            %v1653 = vld [vmem:[%s1642 + $0x50] sm:$0xff]
            %v1654 = vld [vmem:[%s1642 + $0x58] sm:$0xff]
            %v1655 = vld [vmem:[%s1642 + $0x60] sm:$0xff]
            %v1656 = vld [vmem:[%s1642 + $0x68] sm:$0xff]
            %v1657 = vld [vmem:[%s1642 + $0x70] sm:$0xff]
            %v1658 = vld [vmem:[%s1642 + $0x78] sm:$0xff]
            %1660 = vset.pattern.permute.xlu0 0
            %1661 = vperm.xlu0 %1660, %v1630
            %v1662 = vpop.permute.xlu0 %1661
            %v1664 = vmul.f32 %v1643, %v1662
            %v1665 = vmul.f32 %v1644, %v1662
            %v1666 = vmul.f32 %v1645, %v1662
            %v1667 = vmul.f32 %v1646, %v1662
            %v1668 = vmul.f32 %v1647, %v1662
            %v1669 = vmul.f32 %v1648, %v1662
            %v1670 = vmul.f32 %v1649, %v1662
            %v1671 = vmul.f32 %v1650, %v1662
            %v1672 = vmul.f32 %v1651, %v1662
            %v1673 = vmul.f32 %v1652, %v1662
            %v1674 = vmul.f32 %v1653, %v1662
            %v1675 = vmul.f32 %v1654, %v1662
            %v1676 = vmul.f32 %v1655, %v1662
            %v1677 = vmul.f32 %v1656, %v1662
            %v1678 = vmul.f32 %v1657, %v1662
            %v1679 = vmul.f32 %v1658, %v1662
            %1681 = vset.pattern.permute.xlu0 0
            %1682 = vperm.xlu0 %1681, %v1631
            %v1683 = vpop.permute.xlu0 %1682
            %v1685 = vsub.f32 %v1664, %v1683
            %v1686 = vsub.f32 %v1665, %v1683
            %v1687 = vsub.f32 %v1666, %v1683
            %v1688 = vsub.f32 %v1667, %v1683
            %v1689 = vsub.f32 %v1668, %v1683
            %v1690 = vsub.f32 %v1669, %v1683
            %v1691 = vsub.f32 %v1670, %v1683
            %v1692 = vsub.f32 %v1671, %v1683
            %v1693 = vsub.f32 %v1672, %v1683
            %v1694 = vsub.f32 %v1673, %v1683
            %v1695 = vsub.f32 %v1674, %v1683
            %v1696 = vsub.f32 %v1675, %v1683
            %v1697 = vsub.f32 %v1676, %v1683
            %v1698 = vsub.f32 %v1677, %v1683
            %v1699 = vsub.f32 %v1678, %v1683
            %v1700 = vsub.f32 %v1679, %v1683
            %vm1701 = vcmp.ge.f32.partialorder %v1685, 0.0
            %vm1702 = vcmp.ge.f32.partialorder %v1686, 0.0
            %vm1703 = vcmp.ge.f32.partialorder %v1687, 0.0
            %vm1704 = vcmp.ge.f32.partialorder %v1688, 0.0
            %vm1705 = vcmp.ge.f32.partialorder %v1689, 0.0
            %vm1706 = vcmp.ge.f32.partialorder %v1690, 0.0
            %vm1707 = vcmp.ge.f32.partialorder %v1691, 0.0
            %vm1708 = vcmp.ge.f32.partialorder %v1692, 0.0
            %vm1709 = vcmp.ge.f32.partialorder %v1693, 0.0
            %vm1710 = vcmp.ge.f32.partialorder %v1694, 0.0
            %vm1711 = vcmp.ge.f32.partialorder %v1695, 0.0
            %vm1712 = vcmp.ge.f32.partialorder %v1696, 0.0
            %vm1713 = vcmp.ge.f32.partialorder %v1697, 0.0
            %vm1714 = vcmp.ge.f32.partialorder %v1698, 0.0
            %vm1715 = vcmp.ge.f32.partialorder %v1699, 0.0
            %vm1716 = vcmp.ge.f32.partialorder %v1700, 0.0
            %v1717 = vmul.f32 %v1685, 0.2
            %v1718 = vmul.f32 %v1686, 0.2
            %v1719 = vmul.f32 %v1687, 0.2
            %v1720 = vmul.f32 %v1688, 0.2
            %v1721 = vmul.f32 %v1689, 0.2
            %v1722 = vmul.f32 %v1690, 0.2
            %v1723 = vmul.f32 %v1691, 0.2
            %v1724 = vmul.f32 %v1692, 0.2
            %v1725 = vmul.f32 %v1693, 0.2
            %v1726 = vmul.f32 %v1694, 0.2
            %v1727 = vmul.f32 %v1695, 0.2
            %v1728 = vmul.f32 %v1696, 0.2
            %v1729 = vmul.f32 %v1697, 0.2
            %v1730 = vmul.f32 %v1698, 0.2
            %v1731 = vmul.f32 %v1699, 0.2
            %v1732 = vmul.f32 %v1700, 0.2
            %v1733 = vsel %vm1701, %v1685, %v1717
            %v1734 = vsel %vm1702, %v1686, %v1718
            %v1735 = vsel %vm1703, %v1687, %v1719
            %v1736 = vsel %vm1704, %v1688, %v1720
            %v1737 = vsel %vm1705, %v1689, %v1721
            %v1738 = vsel %vm1706, %v1690, %v1722
            %v1739 = vsel %vm1707, %v1691, %v1723
            %v1740 = vsel %vm1708, %v1692, %v1724
            %v1741 = vsel %vm1709, %v1693, %v1725
            %v1742 = vsel %vm1710, %v1694, %v1726
            %v1743 = vsel %vm1711, %v1695, %v1727
            %v1744 = vsel %vm1712, %v1696, %v1728
            %v1745 = vsel %vm1713, %v1697, %v1729
            %v1746 = vsel %vm1714, %v1698, %v1730
            %v1747 = vsel %vm1715, %v1699, %v1731
            %v1748 = vsel %vm1716, %v1700, %v1732
            %1749 = vst [vmem:[%s1642] sm:$0xff] %v1733
            %1750 = vst [vmem:[%s1642 + $0x8] sm:$0xff] %v1734
            %1751 = vst [vmem:[%s1642 + $0x10] sm:$0xff] %v1735
            %1752 = vst [vmem:[%s1642 + $0x18] sm:$0xff] %v1736
            %1753 = vst [vmem:[%s1642 + $0x20] sm:$0xff] %v1737
            %1754 = vst [vmem:[%s1642 + $0x28] sm:$0xff] %v1738
            %1755 = vst [vmem:[%s1642 + $0x30] sm:$0xff] %v1739
            %1756 = vst [vmem:[%s1642 + $0x38] sm:$0xff] %v1740
            %1757 = vst [vmem:[%s1642 + $0x40] sm:$0xff] %v1741
            %1758 = vst [vmem:[%s1642 + $0x48] sm:$0xff] %v1742
            %1759 = vst [vmem:[%s1642 + $0x50] sm:$0xff] %v1743
            %1760 = vst [vmem:[%s1642 + $0x58] sm:$0xff] %v1744
            %1761 = vst [vmem:[%s1642 + $0x60] sm:$0xff] %v1745
            %1762 = vst [vmem:[%s1642 + $0x68] sm:$0xff] %v1746
            %1763 = vst [vmem:[%s1642 + $0x70] sm:$0xff] %v1747
            %1764 = vst [vmem:[%s1642 + $0x78] sm:$0xff] %v1748
          $region64: #{conv_block_forward.2} parent=58 // loop_footer
            %s1637 = sadd.s32 1, %s1633
          $region65: #{conv_block_forward.2} parent=58 // loop_footer_branch
            %1632 = sbr.rel target = $region61
          $region66: #{conv_block_forward.2} parent=58 // loop_exit
            _
        $region59: #{conv_block_forward.2} parent=46 // pred_fallthru
          _
        %p1765 = scmp.lt.s32.totalorder %s17, 1
        %s1766 = scalar_select %p1765, %s17, 1
        %s1767 = smul.addr %s1766, 32
        %s1768 = smul.addr %s1767, 8
        %s1769 = scalar_lea.vmem %s2, %s1768
        // Predicated region
        $region67: #{conv_block_forward.2} parent=46 // pred_check
          %p1770 = pneg %p92
        $region68: #{conv_block_forward.2} parent=46 // pred_check_branch
          %1772 = sbr.rel (%p1770) target = $region70
        $region69: #{conv_block_forward.2} parent=46 // pred_region
          _
        $region70: #{conv_block_forward.2} parent=46 // pred_fallthru
          _
      $region47: #{conv_block_forward.2} parent=5 // pred_fallthru
        _
      %p1773 = scmp.le.s32.totalorder 2, %s8
      // Predicated region
      $region71: #{conv_block_forward.2} parent=5 // pred_check
        %p1774 = pneg %p1773
      $region72: #{conv_block_forward.2} parent=5 // pred_check_branch
        %1776 = sbr.rel (%p1774) target = $region74
      $region73: #{conv_block_forward.2} parent=5 // pred_region
        %s1777 = ssub.s32 %s8, 2
        // Predicated region
        $region75: #{conv_block_forward.2} parent=73 // pred_check
          %p1778 = pneg %p98
        $region76: #{conv_block_forward.2} parent=73 // pred_check_branch
          %1780 = sbr.rel (%p1778) target = $region78
        $region77: #{conv_block_forward.2} parent=73 // pred_region
          %p1781 = scmp.lt.s32.totalorder %s19, 1
          %s1782 = scalar_select %p1781, %s19, 1
          %s1783 = smul.addr %s1782, 32
          %s1784 = smul.addr %s1783, 8
          %s1785 = scalar_lea.vmem %s2, %s1784
        $region78: #{conv_block_forward.2} parent=73 // pred_fallthru
          _
      $region74: #{conv_block_forward.2} parent=5 // pred_fallthru
        _
    $region6: #{conv_block_forward.2} parent=1 // loop_footer
      %s12 = sadd.s32 1, %s8
    $region7: #{conv_block_forward.2} parent=1 // loop_footer_branch
      %7 = sbr.rel target = $region3
    $region8: #{conv_block_forward.2} parent=1 // loop_exit
      _

// kernel: conv_block_forward.3
$region0: #{conv_block_forward.3}
  #allocation0 [shape = 'u32[]', space=smem, size = 0x4, offset = 0x4, fixed_abs, tag = 'smem constant byte address 0x4 - core index']
  #allocation1 [shape = 'u32[144,128]{1,0:T(1,128)}', space=vmem, size = 0x12000, scoped, tag = 'internal scratch']
  #allocation2 [shape = 'f32[8,1]{1,0:T(8,128)}', space=vmem, size = 0x1000, scoped, tag = 'scratch operand']
  #allocation3 [shape = 'f32[8,1]{1,0:T(8,128)}', space=vmem, size = 0x1000, scoped, tag = 'scratch operand']
  %s0 = inlined_call_operand.vmem [shape: bf16[8,256], index: 0, kind: input, shape index: {}]
  %s1 = inlined_call_operand.vmem [shape: bf16[2,256,4096], index: 1, kind: input, shape index: {}]
  %s2 = inlined_call_operand.vmem [shape: f32[2,8,4096], index: 2, kind: output, shape index: {}]
  %s3 = sld [smem:[#allocation0]]
  $region79: #{conv_block_forward.3} parent=0
    _
  %s5 = ssub.s32 1, %s3
  %s6 = scalar_select 0, %s5, %s3
  $region1: #{conv_block_forward.3} parent=0
    #allocation4 [shape = 'u8[2097152]{0}', space=vmem, size = 0x200000, scoped, tag = 'input window, operand 1']
    loop: start=0, step=1, limit=6
    $region2: #{conv_block_forward.3} parent=1 // loop_pre_header
      _
    $region3: #{conv_block_forward.3} parent=1 // loop_header
      %s8 = sphi 0, %s12
      %p9 = scmp.ge.s32.totalorder %s8, 6
      %s15 = sphi 0, %s27
      %s16 = sphi 0, %s23
      %s17 = sphi 0, %s15
      %s18 = sphi 0, %s16
      %s19 = sphi 0, %s17
      %s20 = sphi 0, %s18
      %s28 = sphi 0, %s28
      %s30 = sphi 0, %s28
      %s31 = sphi 0, %s30
      %s45 = sphi 0, %s31
      %s53 = sphi 0, %s55
      %s56 = sphi 0, %s53
      %s57 = sphi 0, %s56
      %s73 = sphi 0, %s57
      %s79 = sphi 0, %s81
      %s82 = sphi 0, %s79
      %s83 = sphi 0, %s82
      %s99 = sphi 0, %s83
    $region4: #{conv_block_forward.3} parent=1 // loop_header_branch
      %11 = sbr.rel (%p9) target = $region8
    $region5: #{conv_block_forward.3} parent=1 // loop_body
      %s13 = ssub.s32 %s8, 1
      %s14 = ssub.s32 %s8, 2
      %s21 = sadd.s32 1, %s16
      %p22 = scmp.ge.s32.totalorder %s21, 2
      %s23 = scalar_select %p22, 0, %s21
      %s24 = sadd.s32 1, %s15
      %s25 = scalar_select %p22, %s24, %s15
      %p26 = scmp.ge.s32.totalorder %s25, 2
      %s27 = scalar_select %p26, 0, %s25
      %s29 = sadd.s32 %s28, 1
      %p32 = scmp.eq.s32.totalorder %s8, 3
      %p33 = scmp.ne.s32.totalorder %s28, %s30
      %p34 = scmp.eq.s32.totalorder %s8, 0
      %p35 = por %p33, %p34
      %p36 = scmp.ne.s32.totalorder %s28, %s30
      %p37 = scmp.eq.s32.totalorder %s13, 3
      %p38 = por %p36, %p37
      %p39 = scmp.ne.s32.totalorder %s30, %s31
      %p40 = scmp.eq.s32.totalorder %s13, 0
      %p41 = por %p39, %p40
      %p42 = scmp.ne.s32.totalorder %s30, %s31
      %p43 = scmp.eq.s32.totalorder %s14, 3
      %p44 = por %p42, %p43
      %p46 = scmp.ne.s32.totalorder %s31, %s45
      %p47 = scmp.eq.s32.totalorder %s14, 0
      %p48 = por %p46, %p47
      %s49 = ssub.s32 %s15, %s27
      %s50 = ssub.s32 %s16, %s23
      %s51 = sor.u32 %s49, %s50
      %p52 = scmp.eq.s32.totalorder %s51, 0
      %s54 = sadd.s32 %s53, 1
      %s55 = scalar_select %p52, %s53, %s54
      %p58 = pneg %p52
      %p59 = scmp.eq.s32.totalorder %s8, 3
      %p60 = por %p58, %p59
      %p61 = scmp.ne.s32.totalorder %s53, %s56
      %p62 = scmp.eq.s32.totalorder %s8, 0
      %p63 = por %p61, %p62
      %p64 = scmp.ne.s32.totalorder %s53, %s56
      %p65 = scmp.eq.s32.totalorder %s13, 3
      %p66 = por %p64, %p65
      %p67 = scmp.ne.s32.totalorder %s56, %s57
      %p68 = scmp.eq.s32.totalorder %s13, 0
      %p69 = por %p67, %p68
      %p70 = scmp.ne.s32.totalorder %s56, %s57
      %p71 = scmp.eq.s32.totalorder %s14, 3
      %p72 = por %p70, %p71
      %p74 = scmp.ne.s32.totalorder %s57, %s73
      %p75 = scmp.eq.s32.totalorder %s14, 0
      %p76 = por %p74, %p75
      %s77 = ssub.s32 %s15, %s27
      %p78 = scmp.eq.s32.totalorder %s77, 0
      %s80 = sadd.s32 %s79, 1
      %s81 = scalar_select %p78, %s79, %s80
      %p84 = pneg %p78
      %p85 = scmp.eq.s32.totalorder %s8, 3
      %p86 = por %p84, %p85
      %p87 = scmp.ne.s32.totalorder %s79, %s82
      %p88 = scmp.eq.s32.totalorder %s8, 0
      %p89 = por %p87, %p88
      %p90 = scmp.ne.s32.totalorder %s79, %s82
      %p91 = scmp.eq.s32.totalorder %s13, 3
      %p92 = por %p90, %p91
      %p93 = scmp.ne.s32.totalorder %s82, %s83
      %p94 = scmp.eq.s32.totalorder %s13, 0
      %p95 = por %p93, %p94
      %p96 = scmp.ne.s32.totalorder %s82, %s83
      %p97 = scmp.eq.s32.totalorder %s14, 3
      %p98 = por %p96, %p97
      %p100 = scmp.ne.s32.totalorder %s83, %s99
      %p101 = scmp.eq.s32.totalorder %s14, 0
      %p102 = por %p100, %p101
      %p103 = scmp.le.s32.totalorder 1, %s8
      %p104 = scmp.lt.s32.totalorder %s8, 5
      %p105 = pnand %p103, %p104
      %p106 = pneg %p105
      // Predicated region
      $region9: #{conv_block_forward.3} parent=5 // pred_check
        _
      $region10: #{conv_block_forward.3} parent=5 // pred_check_branch
        %108 = sbr.rel (%p105) target = $region12
      $region11: #{conv_block_forward.3} parent=5 // pred_region
        %s109 = ssub.s32 %s8, 1
        // Predicated region
        $region13: #{conv_block_forward.3} parent=11 // pred_check
          %p110 = pneg %p41
        $region14: #{conv_block_forward.3} parent=11 // pred_check_branch
          %112 = sbr.rel (%p110) target = $region16
        $region15: #{conv_block_forward.3} parent=11 // pred_region
          _
        $region16: #{conv_block_forward.3} parent=11 // pred_fallthru
          _
      $region12: #{conv_block_forward.3} parent=5 // pred_fallthru
        _
      %p113 = scmp.lt.s32.totalorder %s8, 4
      // Predicated region
      $region17: #{conv_block_forward.3} parent=5 // pred_check
        %p114 = pneg %p113
      $region18: #{conv_block_forward.3} parent=5 // pred_check_branch
        %116 = sbr.rel (%p114) target = $region20
      $region19: #{conv_block_forward.3} parent=5 // pred_region
        // Predicated region
        $region21: #{conv_block_forward.3} parent=19 // pred_check
          %p117 = pneg %p63
        $region22: #{conv_block_forward.3} parent=19 // pred_check_branch
          %119 = sbr.rel (%p117) target = $region24
        $region23: #{conv_block_forward.3} parent=19 // pred_region
          %s120 = sand.u32 %s53, 1
          %s121 = sand.u32 %s53, 1
          %s122 = smul.addr %s121, 2048
          %s123 = scalar_lea.vmem [#allocation4], %s122
          %s124 = smul.u32 16, %s16
          %s125 = smul.addr %s15, 1024
          %s126 = sadd.s32 %s124, %s125
          %s127 = smul.addr %s126, 4
          %s128 = scalar_lea.vmem %s1, %s127
          // Predicated region
          $region25: #{conv_block_forward.3} parent=23 // pred_check
            _
          $region26: #{conv_block_forward.3} parent=23 // pred_check_branch
            %130 = sbr.rel (0) target = $region28
          $region27: #{conv_block_forward.3} parent=23 // pred_region
            // Predicated region
            $region29: #{conv_block_forward.3} parent=27 // pred_check
              _
            $region30: #{conv_block_forward.3} parent=27 // pred_check_branch
              %132 = sbr.rel (0) target = $region32
            $region31: #{conv_block_forward.3} parent=27 // pred_region
              loop: start=0, step=1, limit=1
              $region33: #{conv_block_forward.3} parent=31 // loop_pre_header
                _
              $region34: #{conv_block_forward.3} parent=31 // loop_header
                %s134 = sphi 0, %s138
                %p135 = scmp.ge.s32.totalorder %s134, 1
                %s139 = sphi %s128, %s128
                %s140 = sphi %s123, %s123
              $region35: #{conv_block_forward.3} parent=31 // loop_header_branch
                %137 = sbr.rel (%p135) target = $region39
              $region36: #{conv_block_forward.3} parent=31 // loop_body
                %v141 = vld [vmem:[%s139] sm:$0xff]
                %142 = vst [vmem:[%s140] sm:$0xff] %v141
                %v143 = vld [vmem:[%s139 + $0x8] sm:$0xff]
                %144 = vst [vmem:[%s140 + $0x8] sm:$0xff] %v143
                %v145 = vld [vmem:[%s139 + $0x10] sm:$0xff]
                %146 = vst [vmem:[%s140 + $0x10] sm:$0xff] %v145
                %v147 = vld [vmem:[%s139 + $0x18] sm:$0xff]
                %148 = vst [vmem:[%s140 + $0x18] sm:$0xff] %v147
                %v149 = vld [vmem:[%s139 + $0x20] sm:$0xff]
                %150 = vst [vmem:[%s140 + $0x20] sm:$0xff] %v149
                %v151 = vld [vmem:[%s139 + $0x28] sm:$0xff]
                %152 = vst [vmem:[%s140 + $0x28] sm:$0xff] %v151
                %v153 = vld [vmem:[%s139 + $0x30] sm:$0xff]
                %154 = vst [vmem:[%s140 + $0x30] sm:$0xff] %v153
                %v155 = vld [vmem:[%s139 + $0x38] sm:$0xff]
                %156 = vst [vmem:[%s140 + $0x38] sm:$0xff] %v155
                %v157 = vld [vmem:[%s139 + $0x80] sm:$0xff]
                %158 = vst [vmem:[%s140 + $0x40] sm:$0xff] %v157
                %v159 = vld [vmem:[%s139 + $0x88] sm:$0xff]
                %160 = vst [vmem:[%s140 + $0x48] sm:$0xff] %v159
                %v161 = vld [vmem:[%s139 + $0x90] sm:$0xff]
                %162 = vst [vmem:[%s140 + $0x50] sm:$0xff] %v161
                %v163 = vld [vmem:[%s139 + $0x98] sm:$0xff]
                %164 = vst [vmem:[%s140 + $0x58] sm:$0xff] %v163
                %v165 = vld [vmem:[%s139 + $0xa0] sm:$0xff]
                %166 = vst [vmem:[%s140 + $0x60] sm:$0xff] %v165
                %v167 = vld [vmem:[%s139 + $0xa8] sm:$0xff]
                %168 = vst [vmem:[%s140 + $0x68] sm:$0xff] %v167
                %v169 = vld [vmem:[%s139 + $0xb0] sm:$0xff]
                %170 = vst [vmem:[%s140 + $0x70] sm:$0xff] %v169
                %v171 = vld [vmem:[%s139 + $0xb8] sm:$0xff]
                %172 = vst [vmem:[%s140 + $0x78] sm:$0xff] %v171
                %v173 = vld [vmem:[%s139 + $0x100] sm:$0xff]
                %174 = vst [vmem:[%s140 + $0x80] sm:$0xff] %v173
                %v175 = vld [vmem:[%s139 + $0x108] sm:$0xff]
                %176 = vst [vmem:[%s140 + $0x88] sm:$0xff] %v175
                %v177 = vld [vmem:[%s139 + $0x110] sm:$0xff]
                %178 = vst [vmem:[%s140 + $0x90] sm:$0xff] %v177
                %v179 = vld [vmem:[%s139 + $0x118] sm:$0xff]
                %180 = vst [vmem:[%s140 + $0x98] sm:$0xff] %v179
                %v181 = vld [vmem:[%s139 + $0x120] sm:$0xff]
                %182 = vst [vmem:[%s140 + $0xa0] sm:$0xff] %v181
                %v183 = vld [vmem:[%s139 + $0x128] sm:$0xff]
                %184 = vst [vmem:[%s140 + $0xa8] sm:$0xff] %v183
                %v185 = vld [vmem:[%s139 + $0x130] sm:$0xff]
                %186 = vst [vmem:[%s140 + $0xb0] sm:$0xff] %v185
                %v187 = vld [vmem:[%s139 + $0x138] sm:$0xff]
                %188 = vst [vmem:[%s140 + $0xb8] sm:$0xff] %v187
                %v189 = vld [vmem:[%s139 + $0x180] sm:$0xff]
                %190 = vst [vmem:[%s140 + $0xc0] sm:$0xff] %v189
                %v191 = vld [vmem:[%s139 + $0x188] sm:$0xff]
                %192 = vst [vmem:[%s140 + $0xc8] sm:$0xff] %v191
                %v193 = vld [vmem:[%s139 + $0x190] sm:$0xff]
                %194 = vst [vmem:[%s140 + $0xd0] sm:$0xff] %v193
                %v195 = vld [vmem:[%s139 + $0x198] sm:$0xff]
                %196 = vst [vmem:[%s140 + $0xd8] sm:$0xff] %v195
                %v197 = vld [vmem:[%s139 + $0x1a0] sm:$0xff]
                %198 = vst [vmem:[%s140 + $0xe0] sm:$0xff] %v197
                %v199 = vld [vmem:[%s139 + $0x1a8] sm:$0xff]
                %200 = vst [vmem:[%s140 + $0xe8] sm:$0xff] %v199
                %v201 = vld [vmem:[%s139 + $0x1b0] sm:$0xff]
                %202 = vst [vmem:[%s140 + $0xf0] sm:$0xff] %v201
                %v203 = vld [vmem:[%s139 + $0x1b8] sm:$0xff]
                %204 = vst [vmem:[%s140 + $0xf8] sm:$0xff] %v203
                %v205 = vld [vmem:[%s139 + $0x200] sm:$0xff]
                %206 = vst [vmem:[%s140 + $0x100] sm:$0xff] %v205
                %v207 = vld [vmem:[%s139 + $0x208] sm:$0xff]
                %208 = vst [vmem:[%s140 + $0x108] sm:$0xff] %v207
                %v209 = vld [vmem:[%s139 + $0x210] sm:$0xff]
                %210 = vst [vmem:[%s140 + $0x110] sm:$0xff] %v209
                %v211 = vld [vmem:[%s139 + $0x218] sm:$0xff]
                %212 = vst [vmem:[%s140 + $0x118] sm:$0xff] %v211
                %v213 = vld [vmem:[%s139 + $0x220] sm:$0xff]
                %214 = vst [vmem:[%s140 + $0x120] sm:$0xff] %v213
                %v215 = vld [vmem:[%s139 + $0x228] sm:$0xff]
                %216 = vst [vmem:[%s140 + $0x128] sm:$0xff] %v215
                %v217 = vld [vmem:[%s139 + $0x230] sm:$0xff]
                %218 = vst [vmem:[%s140 + $0x130] sm:$0xff] %v217
                %v219 = vld [vmem:[%s139 + $0x238] sm:$0xff]
                %220 = vst [vmem:[%s140 + $0x138] sm:$0xff] %v219
                %v221 = vld [vmem:[%s139 + $0x280] sm:$0xff]
                %222 = vst [vmem:[%s140 + $0x140] sm:$0xff] %v221
                %v223 = vld [vmem:[%s139 + $0x288] sm:$0xff]
                %224 = vst [vmem:[%s140 + $0x148] sm:$0xff] %v223
                %v225 = vld [vmem:[%s139 + $0x290] sm:$0xff]
                %226 = vst [vmem:[%s140 + $0x150] sm:$0xff] %v225
                %v227 = vld [vmem:[%s139 + $0x298] sm:$0xff]
                %228 = vst [vmem:[%s140 + $0x158] sm:$0xff] %v227
                %v229 = vld [vmem:[%s139 + $0x2a0] sm:$0xff]
                %230 = vst [vmem:[%s140 + $0x160] sm:$0xff] %v229
                %v231 = vld [vmem:[%s139 + $0x2a8] sm:$0xff]
                %232 = vst [vmem:[%s140 + $0x168] sm:$0xff] %v231
                %v233 = vld [vmem:[%s139 + $0x2b0] sm:$0xff]
                %234 = vst [vmem:[%s140 + $0x170] sm:$0xff] %v233
                %v235 = vld [vmem:[%s139 + $0x2b8] sm:$0xff]
                %236 = vst [vmem:[%s140 + $0x178] sm:$0xff] %v235
                %v237 = vld [vmem:[%s139 + $0x300] sm:$0xff]
                %238 = vst [vmem:[%s140 + $0x180] sm:$0xff] %v237
                %v239 = vld [vmem:[%s139 + $0x308] sm:$0xff]
                %240 = vst [vmem:[%s140 + $0x188] sm:$0xff] %v239
                %v241 = vld [vmem:[%s139 + $0x310] sm:$0xff]
                %242 = vst [vmem:[%s140 + $0x190] sm:$0xff] %v241
                %v243 = vld [vmem:[%s139 + $0x318] sm:$0xff]
                %244 = vst [vmem:[%s140 + $0x198] sm:$0xff] %v243
                %v245 = vld [vmem:[%s139 + $0x320] sm:$0xff]
                %246 = vst [vmem:[%s140 + $0x1a0] sm:$0xff] %v245
                %v247 = vld [vmem:[%s139 + $0x328] sm:$0xff]
                %248 = vst [vmem:[%s140 + $0x1a8] sm:$0xff] %v247
                %v249 = vld [vmem:[%s139 + $0x330] sm:$0xff]
                %250 = vst [vmem:[%s140 + $0x1b0] sm:$0xff] %v249
                %v251 = vld [vmem:[%s139 + $0x338] sm:$0xff]
                %252 = vst [vmem:[%s140 + $0x1b8] sm:$0xff] %v251
                %v253 = vld [vmem:[%s139 + $0x380] sm:$0xff]
                %254 = vst [vmem:[%s140 + $0x1c0] sm:$0xff] %v253
                %v255 = vld [vmem:[%s139 + $0x388] sm:$0xff]
                %256 = vst [vmem:[%s140 + $0x1c8] sm:$0xff] %v255
                %v257 = vld [vmem:[%s139 + $0x390] sm:$0xff]
                %258 = vst [vmem:[%s140 + $0x1d0] sm:$0xff] %v257
                %v259 = vld [vmem:[%s139 + $0x398] sm:$0xff]
                %260 = vst [vmem:[%s140 + $0x1d8] sm:$0xff] %v259
                %v261 = vld [vmem:[%s139 + $0x3a0] sm:$0xff]
                %262 = vst [vmem:[%s140 + $0x1e0] sm:$0xff] %v261
                %v263 = vld [vmem:[%s139 + $0x3a8] sm:$0xff]
                %264 = vst [vmem:[%s140 + $0x1e8] sm:$0xff] %v263
                %v265 = vld [vmem:[%s139 + $0x3b0] sm:$0xff]
                %266 = vst [vmem:[%s140 + $0x1f0] sm:$0xff] %v265
                %v267 = vld [vmem:[%s139 + $0x3b8] sm:$0xff]
                %268 = vst [vmem:[%s140 + $0x1f8] sm:$0xff] %v267
                %v269 = vld [vmem:[%s139 + $0x400] sm:$0xff]
                %270 = vst [vmem:[%s140 + $0x200] sm:$0xff] %v269
                %v271 = vld [vmem:[%s139 + $0x408] sm:$0xff]
                %272 = vst [vmem:[%s140 + $0x208] sm:$0xff] %v271
                %v273 = vld [vmem:[%s139 + $0x410] sm:$0xff]
                %274 = vst [vmem:[%s140 + $0x210] sm:$0xff] %v273
                %v275 = vld [vmem:[%s139 + $0x418] sm:$0xff]
                %276 = vst [vmem:[%s140 + $0x218] sm:$0xff] %v275
                %v277 = vld [vmem:[%s139 + $0x420] sm:$0xff]
                %278 = vst [vmem:[%s140 + $0x220] sm:$0xff] %v277
                %v279 = vld [vmem:[%s139 + $0x428] sm:$0xff]
                %280 = vst [vmem:[%s140 + $0x228] sm:$0xff] %v279
                %v281 = vld [vmem:[%s139 + $0x430] sm:$0xff]
                %282 = vst [vmem:[%s140 + $0x230] sm:$0xff] %v281
                %v283 = vld [vmem:[%s139 + $0x438] sm:$0xff]
                %284 = vst [vmem:[%s140 + $0x238] sm:$0xff] %v283
                %v285 = vld [vmem:[%s139 + $0x480] sm:$0xff]
                %286 = vst [vmem:[%s140 + $0x240] sm:$0xff] %v285
                %v287 = vld [vmem:[%s139 + $0x488] sm:$0xff]
                %288 = vst [vmem:[%s140 + $0x248] sm:$0xff] %v287
                %v289 = vld [vmem:[%s139 + $0x490] sm:$0xff]
                %290 = vst [vmem:[%s140 + $0x250] sm:$0xff] %v289
                %v291 = vld [vmem:[%s139 + $0x498] sm:$0xff]
                %292 = vst [vmem:[%s140 + $0x258] sm:$0xff] %v291
                %v293 = vld [vmem:[%s139 + $0x4a0] sm:$0xff]
                %294 = vst [vmem:[%s140 + $0x260] sm:$0xff] %v293
                %v295 = vld [vmem:[%s139 + $0x4a8] sm:$0xff]
                %296 = vst [vmem:[%s140 + $0x268] sm:$0xff] %v295
                %v297 = vld [vmem:[%s139 + $0x4b0] sm:$0xff]
                %298 = vst [vmem:[%s140 + $0x270] sm:$0xff] %v297
                %v299 = vld [vmem:[%s139 + $0x4b8] sm:$0xff]
                %300 = vst [vmem:[%s140 + $0x278] sm:$0xff] %v299
                %v301 = vld [vmem:[%s139 + $0x500] sm:$0xff]
                %302 = vst [vmem:[%s140 + $0x280] sm:$0xff] %v301
                %v303 = vld [vmem:[%s139 + $0x508] sm:$0xff]
                %304 = vst [vmem:[%s140 + $0x288] sm:$0xff] %v303
                %v305 = vld [vmem:[%s139 + $0x510] sm:$0xff]
                %306 = vst [vmem:[%s140 + $0x290] sm:$0xff] %v305
                %v307 = vld [vmem:[%s139 + $0x518] sm:$0xff]
                %308 = vst [vmem:[%s140 + $0x298] sm:$0xff] %v307
                %v309 = vld [vmem:[%s139 + $0x520] sm:$0xff]
                %310 = vst [vmem:[%s140 + $0x2a0] sm:$0xff] %v309
                %v311 = vld [vmem:[%s139 + $0x528] sm:$0xff]
                %312 = vst [vmem:[%s140 + $0x2a8] sm:$0xff] %v311
                %v313 = vld [vmem:[%s139 + $0x530] sm:$0xff]
                %314 = vst [vmem:[%s140 + $0x2b0] sm:$0xff] %v313
                %v315 = vld [vmem:[%s139 + $0x538] sm:$0xff]
                %316 = vst [vmem:[%s140 + $0x2b8] sm:$0xff] %v315
                %v317 = vld [vmem:[%s139 + $0x580] sm:$0xff]
                %318 = vst [vmem:[%s140 + $0x2c0] sm:$0xff] %v317
                %v319 = vld [vmem:[%s139 + $0x588] sm:$0xff]
                %320 = vst [vmem:[%s140 + $0x2c8] sm:$0xff] %v319
                %v321 = vld [vmem:[%s139 + $0x590] sm:$0xff]
                %322 = vst [vmem:[%s140 + $0x2d0] sm:$0xff] %v321
                %v323 = vld [vmem:[%s139 + $0x598] sm:$0xff]
                %324 = vst [vmem:[%s140 + $0x2d8] sm:$0xff] %v323
                %v325 = vld [vmem:[%s139 + $0x5a0] sm:$0xff]
                %326 = vst [vmem:[%s140 + $0x2e0] sm:$0xff] %v325
                %v327 = vld [vmem:[%s139 + $0x5a8] sm:$0xff]
                %328 = vst [vmem:[%s140 + $0x2e8] sm:$0xff] %v327
                %v329 = vld [vmem:[%s139 + $0x5b0] sm:$0xff]
                %330 = vst [vmem:[%s140 + $0x2f0] sm:$0xff] %v329
                %v331 = vld [vmem:[%s139 + $0x5b8] sm:$0xff]
                %332 = vst [vmem:[%s140 + $0x2f8] sm:$0xff] %v331
                %v333 = vld [vmem:[%s139 + $0x600] sm:$0xff]
                %334 = vst [vmem:[%s140 + $0x300] sm:$0xff] %v333
                %v335 = vld [vmem:[%s139 + $0x608] sm:$0xff]
                %336 = vst [vmem:[%s140 + $0x308] sm:$0xff] %v335
                %v337 = vld [vmem:[%s139 + $0x610] sm:$0xff]
                %338 = vst [vmem:[%s140 + $0x310] sm:$0xff] %v337
                %v339 = vld [vmem:[%s139 + $0x618] sm:$0xff]
                %340 = vst [vmem:[%s140 + $0x318] sm:$0xff] %v339
                %v341 = vld [vmem:[%s139 + $0x620] sm:$0xff]
                %342 = vst [vmem:[%s140 + $0x320] sm:$0xff] %v341
                %v343 = vld [vmem:[%s139 + $0x628] sm:$0xff]
                %344 = vst [vmem:[%s140 + $0x328] sm:$0xff] %v343
                %v345 = vld [vmem:[%s139 + $0x630] sm:$0xff]
                %346 = vst [vmem:[%s140 + $0x330] sm:$0xff] %v345
                %v347 = vld [vmem:[%s139 + $0x638] sm:$0xff]
                %348 = vst [vmem:[%s140 + $0x338] sm:$0xff] %v347
                %v349 = vld [vmem:[%s139 + $0x680] sm:$0xff]
                %350 = vst [vmem:[%s140 + $0x340] sm:$0xff] %v349
                %v351 = vld [vmem:[%s139 + $0x688] sm:$0xff]
                %352 = vst [vmem:[%s140 + $0x348] sm:$0xff] %v351
                %v353 = vld [vmem:[%s139 + $0x690] sm:$0xff]
                %354 = vst [vmem:[%s140 + $0x350] sm:$0xff] %v353
                %v355 = vld [vmem:[%s139 + $0x698] sm:$0xff]
                %356 = vst [vmem:[%s140 + $0x358] sm:$0xff] %v355
                %v357 = vld [vmem:[%s139 + $0x6a0] sm:$0xff]
                %358 = vst [vmem:[%s140 + $0x360] sm:$0xff] %v357
                %v359 = vld [vmem:[%s139 + $0x6a8] sm:$0xff]
                %360 = vst [vmem:[%s140 + $0x368] sm:$0xff] %v359
                %v361 = vld [vmem:[%s139 + $0x6b0] sm:$0xff]
                %362 = vst [vmem:[%s140 + $0x370] sm:$0xff] %v361
                %v363 = vld [vmem:[%s139 + $0x6b8] sm:$0xff]
                %364 = vst [vmem:[%s140 + $0x378] sm:$0xff] %v363
                %v365 = vld [vmem:[%s139 + $0x700] sm:$0xff]
                %366 = vst [vmem:[%s140 + $0x380] sm:$0xff] %v365
                %v367 = vld [vmem:[%s139 + $0x708] sm:$0xff]
                %368 = vst [vmem:[%s140 + $0x388] sm:$0xff] %v367
                %v369 = vld [vmem:[%s139 + $0x710] sm:$0xff]
                %370 = vst [vmem:[%s140 + $0x390] sm:$0xff] %v369
                %v371 = vld [vmem:[%s139 + $0x718] sm:$0xff]
                %372 = vst [vmem:[%s140 + $0x398] sm:$0xff] %v371
                %v373 = vld [vmem:[%s139 + $0x720] sm:$0xff]
                %374 = vst [vmem:[%s140 + $0x3a0] sm:$0xff] %v373
                %v375 = vld [vmem:[%s139 + $0x728] sm:$0xff]
                %376 = vst [vmem:[%s140 + $0x3a8] sm:$0xff] %v375
                %v377 = vld [vmem:[%s139 + $0x730] sm:$0xff]
                %378 = vst [vmem:[%s140 + $0x3b0] sm:$0xff] %v377
                %v379 = vld [vmem:[%s139 + $0x738] sm:$0xff]
                %380 = vst [vmem:[%s140 + $0x3b8] sm:$0xff] %v379
                %v381 = vld [vmem:[%s139 + $0x780] sm:$0xff]
                %382 = vst [vmem:[%s140 + $0x3c0] sm:$0xff] %v381
                %v383 = vld [vmem:[%s139 + $0x788] sm:$0xff]
                %384 = vst [vmem:[%s140 + $0x3c8] sm:$0xff] %v383
                %v385 = vld [vmem:[%s139 + $0x790] sm:$0xff]
                %386 = vst [vmem:[%s140 + $0x3d0] sm:$0xff] %v385
                %v387 = vld [vmem:[%s139 + $0x798] sm:$0xff]
                %388 = vst [vmem:[%s140 + $0x3d8] sm:$0xff] %v387
                %v389 = vld [vmem:[%s139 + $0x7a0] sm:$0xff]
                %390 = vst [vmem:[%s140 + $0x3e0] sm:$0xff] %v389
                %v391 = vld [vmem:[%s139 + $0x7a8] sm:$0xff]
                %392 = vst [vmem:[%s140 + $0x3e8] sm:$0xff] %v391
                %v393 = vld [vmem:[%s139 + $0x7b0] sm:$0xff]
                %394 = vst [vmem:[%s140 + $0x3f0] sm:$0xff] %v393
                %v395 = vld [vmem:[%s139 + $0x7b8] sm:$0xff]
                %396 = vst [vmem:[%s140 + $0x3f8] sm:$0xff] %v395
                %v397 = vld [vmem:[%s139 + $0x800] sm:$0xff]
                %398 = vst [vmem:[%s140 + $0x400] sm:$0xff] %v397
                %v399 = vld [vmem:[%s139 + $0x808] sm:$0xff]
                %400 = vst [vmem:[%s140 + $0x408] sm:$0xff] %v399
                %v401 = vld [vmem:[%s139 + $0x810] sm:$0xff]
                %402 = vst [vmem:[%s140 + $0x410] sm:$0xff] %v401
                %v403 = vld [vmem:[%s139 + $0x818] sm:$0xff]
                %404 = vst [vmem:[%s140 + $0x418] sm:$0xff] %v403
                %v405 = vld [vmem:[%s139 + $0x820] sm:$0xff]
                %406 = vst [vmem:[%s140 + $0x420] sm:$0xff] %v405
                %v407 = vld [vmem:[%s139 + $0x828] sm:$0xff]
                %408 = vst [vmem:[%s140 + $0x428] sm:$0xff] %v407
                %v409 = vld [vmem:[%s139 + $0x830] sm:$0xff]
                %410 = vst [vmem:[%s140 + $0x430] sm:$0xff] %v409
                %v411 = vld [vmem:[%s139 + $0x838] sm:$0xff]
                %412 = vst [vmem:[%s140 + $0x438] sm:$0xff] %v411
                %v413 = vld [vmem:[%s139 + $0x880] sm:$0xff]
                %414 = vst [vmem:[%s140 + $0x440] sm:$0xff] %v413
                %v415 = vld [vmem:[%s139 + $0x888] sm:$0xff]
                %416 = vst [vmem:[%s140 + $0x448] sm:$0xff] %v415
                %v417 = vld [vmem:[%s139 + $0x890] sm:$0xff]
                %418 = vst [vmem:[%s140 + $0x450] sm:$0xff] %v417
                %v419 = vld [vmem:[%s139 + $0x898] sm:$0xff]
                %420 = vst [vmem:[%s140 + $0x458] sm:$0xff] %v419
                %v421 = vld [vmem:[%s139 + $0x8a0] sm:$0xff]
                %422 = vst [vmem:[%s140 + $0x460] sm:$0xff] %v421
                %v423 = vld [vmem:[%s139 + $0x8a8] sm:$0xff]
                %424 = vst [vmem:[%s140 + $0x468] sm:$0xff] %v423
                %v425 = vld [vmem:[%s139 + $0x8b0] sm:$0xff]
                %426 = vst [vmem:[%s140 + $0x470] sm:$0xff] %v425
                %v427 = vld [vmem:[%s139 + $0x8b8] sm:$0xff]
                %428 = vst [vmem:[%s140 + $0x478] sm:$0xff] %v427
                %v429 = vld [vmem:[%s139 + $0x900] sm:$0xff]
                %430 = vst [vmem:[%s140 + $0x480] sm:$0xff] %v429
                %v431 = vld [vmem:[%s139 + $0x908] sm:$0xff]
                %432 = vst [vmem:[%s140 + $0x488] sm:$0xff] %v431
                %v433 = vld [vmem:[%s139 + $0x910] sm:$0xff]
                %434 = vst [vmem:[%s140 + $0x490] sm:$0xff] %v433
                %v435 = vld [vmem:[%s139 + $0x918] sm:$0xff]
                %436 = vst [vmem:[%s140 + $0x498] sm:$0xff] %v435
                %v437 = vld [vmem:[%s139 + $0x920] sm:$0xff]
                %438 = vst [vmem:[%s140 + $0x4a0] sm:$0xff] %v437
                %v439 = vld [vmem:[%s139 + $0x928] sm:$0xff]
                %440 = vst [vmem:[%s140 + $0x4a8] sm:$0xff] %v439
                %v441 = vld [vmem:[%s139 + $0x930] sm:$0xff]
                %442 = vst [vmem:[%s140 + $0x4b0] sm:$0xff] %v441
                %v443 = vld [vmem:[%s139 + $0x938] sm:$0xff]
                %444 = vst [vmem:[%s140 + $0x4b8] sm:$0xff] %v443
                %v445 = vld [vmem:[%s139 + $0x980] sm:$0xff]
                %446 = vst [vmem:[%s140 + $0x4c0] sm:$0xff] %v445
                %v447 = vld [vmem:[%s139 + $0x988] sm:$0xff]
                %448 = vst [vmem:[%s140 + $0x4c8] sm:$0xff] %v447
                %v449 = vld [vmem:[%s139 + $0x990] sm:$0xff]
                %450 = vst [vmem:[%s140 + $0x4d0] sm:$0xff] %v449
                %v451 = vld [vmem:[%s139 + $0x998] sm:$0xff]
                %452 = vst [vmem:[%s140 + $0x4d8] sm:$0xff] %v451
                %v453 = vld [vmem:[%s139 + $0x9a0] sm:$0xff]
                %454 = vst [vmem:[%s140 + $0x4e0] sm:$0xff] %v453
                %v455 = vld [vmem:[%s139 + $0x9a8] sm:$0xff]
                %456 = vst [vmem:[%s140 + $0x4e8] sm:$0xff] %v455
                %v457 = vld [vmem:[%s139 + $0x9b0] sm:$0xff]
                %458 = vst [vmem:[%s140 + $0x4f0] sm:$0xff] %v457
                %v459 = vld [vmem:[%s139 + $0x9b8] sm:$0xff]
                %460 = vst [vmem:[%s140 + $0x4f8] sm:$0xff] %v459
                %v461 = vld [vmem:[%s139 + $0xa00] sm:$0xff]
                %462 = vst [vmem:[%s140 + $0x500] sm:$0xff] %v461
                %v463 = vld [vmem:[%s139 + $0xa08] sm:$0xff]
                %464 = vst [vmem:[%s140 + $0x508] sm:$0xff] %v463
                %v465 = vld [vmem:[%s139 + $0xa10] sm:$0xff]
                %466 = vst [vmem:[%s140 + $0x510] sm:$0xff] %v465
                %v467 = vld [vmem:[%s139 + $0xa18] sm:$0xff]
                %468 = vst [vmem:[%s140 + $0x518] sm:$0xff] %v467
                %v469 = vld [vmem:[%s139 + $0xa20] sm:$0xff]
                %470 = vst [vmem:[%s140 + $0x520] sm:$0xff] %v469
                %v471 = vld [vmem:[%s139 + $0xa28] sm:$0xff]
                %472 = vst [vmem:[%s140 + $0x528] sm:$0xff] %v471
                %v473 = vld [vmem:[%s139 + $0xa30] sm:$0xff]
                %474 = vst [vmem:[%s140 + $0x530] sm:$0xff] %v473
                %v475 = vld [vmem:[%s139 + $0xa38] sm:$0xff]
                %476 = vst [vmem:[%s140 + $0x538] sm:$0xff] %v475
                %v477 = vld [vmem:[%s139 + $0xa80] sm:$0xff]
                %478 = vst [vmem:[%s140 + $0x540] sm:$0xff] %v477
                %v479 = vld [vmem:[%s139 + $0xa88] sm:$0xff]
                %480 = vst [vmem:[%s140 + $0x548] sm:$0xff] %v479
                %v481 = vld [vmem:[%s139 + $0xa90] sm:$0xff]
                %482 = vst [vmem:[%s140 + $0x550] sm:$0xff] %v481
                %v483 = vld [vmem:[%s139 + $0xa98] sm:$0xff]
                %484 = vst [vmem:[%s140 + $0x558] sm:$0xff] %v483
                %v485 = vld [vmem:[%s139 + $0xaa0] sm:$0xff]
                %486 = vst [vmem:[%s140 + $0x560] sm:$0xff] %v485
                %v487 = vld [vmem:[%s139 + $0xaa8] sm:$0xff]
                %488 = vst [vmem:[%s140 + $0x568] sm:$0xff] %v487
                %v489 = vld [vmem:[%s139 + $0xab0] sm:$0xff]
                %490 = vst [vmem:[%s140 + $0x570] sm:$0xff] %v489
                %v491 = vld [vmem:[%s139 + $0xab8] sm:$0xff]
                %492 = vst [vmem:[%s140 + $0x578] sm:$0xff] %v491
                %v493 = vld [vmem:[%s139 + $0xb00] sm:$0xff]
                %494 = vst [vmem:[%s140 + $0x580] sm:$0xff] %v493
                %v495 = vld [vmem:[%s139 + $0xb08] sm:$0xff]
                %496 = vst [vmem:[%s140 + $0x588] sm:$0xff] %v495
                %v497 = vld [vmem:[%s139 + $0xb10] sm:$0xff]
                %498 = vst [vmem:[%s140 + $0x590] sm:$0xff] %v497
                %v499 = vld [vmem:[%s139 + $0xb18] sm:$0xff]
                %500 = vst [vmem:[%s140 + $0x598] sm:$0xff] %v499
                %v501 = vld [vmem:[%s139 + $0xb20] sm:$0xff]
                %502 = vst [vmem:[%s140 + $0x5a0] sm:$0xff] %v501
                %v503 = vld [vmem:[%s139 + $0xb28] sm:$0xff]
                %504 = vst [vmem:[%s140 + $0x5a8] sm:$0xff] %v503
                %v505 = vld [vmem:[%s139 + $0xb30] sm:$0xff]
                %506 = vst [vmem:[%s140 + $0x5b0] sm:$0xff] %v505
                %v507 = vld [vmem:[%s139 + $0xb38] sm:$0xff]
                %508 = vst [vmem:[%s140 + $0x5b8] sm:$0xff] %v507
                %v509 = vld [vmem:[%s139 + $0xb80] sm:$0xff]
                %510 = vst [vmem:[%s140 + $0x5c0] sm:$0xff] %v509
                %v511 = vld [vmem:[%s139 + $0xb88] sm:$0xff]
                %512 = vst [vmem:[%s140 + $0x5c8] sm:$0xff] %v511
                %v513 = vld [vmem:[%s139 + $0xb90] sm:$0xff]
                %514 = vst [vmem:[%s140 + $0x5d0] sm:$0xff] %v513
                %v515 = vld [vmem:[%s139 + $0xb98] sm:$0xff]
                %516 = vst [vmem:[%s140 + $0x5d8] sm:$0xff] %v515
                %v517 = vld [vmem:[%s139 + $0xba0] sm:$0xff]
                %518 = vst [vmem:[%s140 + $0x5e0] sm:$0xff] %v517
                %v519 = vld [vmem:[%s139 + $0xba8] sm:$0xff]
                %520 = vst [vmem:[%s140 + $0x5e8] sm:$0xff] %v519
                %v521 = vld [vmem:[%s139 + $0xbb0] sm:$0xff]
                %522 = vst [vmem:[%s140 + $0x5f0] sm:$0xff] %v521
                %v523 = vld [vmem:[%s139 + $0xbb8] sm:$0xff]
                %524 = vst [vmem:[%s140 + $0x5f8] sm:$0xff] %v523
                %v525 = vld [vmem:[%s139 + $0xc00] sm:$0xff]
                %526 = vst [vmem:[%s140 + $0x600] sm:$0xff] %v525
                %v527 = vld [vmem:[%s139 + $0xc08] sm:$0xff]
                %528 = vst [vmem:[%s140 + $0x608] sm:$0xff] %v527
                %v529 = vld [vmem:[%s139 + $0xc10] sm:$0xff]
                %530 = vst [vmem:[%s140 + $0x610] sm:$0xff] %v529
                %v531 = vld [vmem:[%s139 + $0xc18] sm:$0xff]
                %532 = vst [vmem:[%s140 + $0x618] sm:$0xff] %v531
                %v533 = vld [vmem:[%s139 + $0xc20] sm:$0xff]
                %534 = vst [vmem:[%s140 + $0x620] sm:$0xff] %v533
                %v535 = vld [vmem:[%s139 + $0xc28] sm:$0xff]
                %536 = vst [vmem:[%s140 + $0x628] sm:$0xff] %v535
                %v537 = vld [vmem:[%s139 + $0xc30] sm:$0xff]
                %538 = vst [vmem:[%s140 + $0x630] sm:$0xff] %v537
                %v539 = vld [vmem:[%s139 + $0xc38] sm:$0xff]
                %540 = vst [vmem:[%s140 + $0x638] sm:$0xff] %v539
                %v541 = vld [vmem:[%s139 + $0xc80] sm:$0xff]
                %542 = vst [vmem:[%s140 + $0x640] sm:$0xff] %v541
                %v543 = vld [vmem:[%s139 + $0xc88] sm:$0xff]
                %544 = vst [vmem:[%s140 + $0x648] sm:$0xff] %v543
                %v545 = vld [vmem:[%s139 + $0xc90] sm:$0xff]
                %546 = vst [vmem:[%s140 + $0x650] sm:$0xff] %v545
                %v547 = vld [vmem:[%s139 + $0xc98] sm:$0xff]
                %548 = vst [vmem:[%s140 + $0x658] sm:$0xff] %v547
                %v549 = vld [vmem:[%s139 + $0xca0] sm:$0xff]
                %550 = vst [vmem:[%s140 + $0x660] sm:$0xff] %v549
                %v551 = vld [vmem:[%s139 + $0xca8] sm:$0xff]
                %552 = vst [vmem:[%s140 + $0x668] sm:$0xff] %v551
                %v553 = vld [vmem:[%s139 + $0xcb0] sm:$0xff]
                %554 = vst [vmem:[%s140 + $0x670] sm:$0xff] %v553
                %v555 = vld [vmem:[%s139 + $0xcb8] sm:$0xff]
                %556 = vst [vmem:[%s140 + $0x678] sm:$0xff] %v555
                %v557 = vld [vmem:[%s139 + $0xd00] sm:$0xff]
                %558 = vst [vmem:[%s140 + $0x680] sm:$0xff] %v557
                %v559 = vld [vmem:[%s139 + $0xd08] sm:$0xff]
                %560 = vst [vmem:[%s140 + $0x688] sm:$0xff] %v559
                %v561 = vld [vmem:[%s139 + $0xd10] sm:$0xff]
                %562 = vst [vmem:[%s140 + $0x690] sm:$0xff] %v561
                %v563 = vld [vmem:[%s139 + $0xd18] sm:$0xff]
                %564 = vst [vmem:[%s140 + $0x698] sm:$0xff] %v563
                %v565 = vld [vmem:[%s139 + $0xd20] sm:$0xff]
                %566 = vst [vmem:[%s140 + $0x6a0] sm:$0xff] %v565
                %v567 = vld [vmem:[%s139 + $0xd28] sm:$0xff]
                %568 = vst [vmem:[%s140 + $0x6a8] sm:$0xff] %v567
                %v569 = vld [vmem:[%s139 + $0xd30] sm:$0xff]
                %570 = vst [vmem:[%s140 + $0x6b0] sm:$0xff] %v569
                %v571 = vld [vmem:[%s139 + $0xd38] sm:$0xff]
                %572 = vst [vmem:[%s140 + $0x6b8] sm:$0xff] %v571
                %v573 = vld [vmem:[%s139 + $0xd80] sm:$0xff]
                %574 = vst [vmem:[%s140 + $0x6c0] sm:$0xff] %v573
                %v575 = vld [vmem:[%s139 + $0xd88] sm:$0xff]
                %576 = vst [vmem:[%s140 + $0x6c8] sm:$0xff] %v575
                %v577 = vld [vmem:[%s139 + $0xd90] sm:$0xff]
                %578 = vst [vmem:[%s140 + $0x6d0] sm:$0xff] %v577
                %v579 = vld [vmem:[%s139 + $0xd98] sm:$0xff]
                %580 = vst [vmem:[%s140 + $0x6d8] sm:$0xff] %v579
                %v581 = vld [vmem:[%s139 + $0xda0] sm:$0xff]
                %582 = vst [vmem:[%s140 + $0x6e0] sm:$0xff] %v581
                %v583 = vld [vmem:[%s139 + $0xda8] sm:$0xff]
                %584 = vst [vmem:[%s140 + $0x6e8] sm:$0xff] %v583
                %v585 = vld [vmem:[%s139 + $0xdb0] sm:$0xff]
                %586 = vst [vmem:[%s140 + $0x6f0] sm:$0xff] %v585
                %v587 = vld [vmem:[%s139 + $0xdb8] sm:$0xff]
                %588 = vst [vmem:[%s140 + $0x6f8] sm:$0xff] %v587
                %v589 = vld [vmem:[%s139 + $0xe00] sm:$0xff]
                %590 = vst [vmem:[%s140 + $0x700] sm:$0xff] %v589
                %v591 = vld [vmem:[%s139 + $0xe08] sm:$0xff]
                %592 = vst [vmem:[%s140 + $0x708] sm:$0xff] %v591
                %v593 = vld [vmem:[%s139 + $0xe10] sm:$0xff]
                %594 = vst [vmem:[%s140 + $0x710] sm:$0xff] %v593
                %v595 = vld [vmem:[%s139 + $0xe18] sm:$0xff]
                %596 = vst [vmem:[%s140 + $0x718] sm:$0xff] %v595
                %v597 = vld [vmem:[%s139 + $0xe20] sm:$0xff]
                %598 = vst [vmem:[%s140 + $0x720] sm:$0xff] %v597
                %v599 = vld [vmem:[%s139 + $0xe28] sm:$0xff]
                %600 = vst [vmem:[%s140 + $0x728] sm:$0xff] %v599
                %v601 = vld [vmem:[%s139 + $0xe30] sm:$0xff]
                %602 = vst [vmem:[%s140 + $0x730] sm:$0xff] %v601
                %v603 = vld [vmem:[%s139 + $0xe38] sm:$0xff]
                %604 = vst [vmem:[%s140 + $0x738] sm:$0xff] %v603
                %v605 = vld [vmem:[%s139 + $0xe80] sm:$0xff]
                %606 = vst [vmem:[%s140 + $0x740] sm:$0xff] %v605
                %v607 = vld [vmem:[%s139 + $0xe88] sm:$0xff]
                %608 = vst [vmem:[%s140 + $0x748] sm:$0xff] %v607
                %v609 = vld [vmem:[%s139 + $0xe90] sm:$0xff]
                %610 = vst [vmem:[%s140 + $0x750] sm:$0xff] %v609
                %v611 = vld [vmem:[%s139 + $0xe98] sm:$0xff]
                %612 = vst [vmem:[%s140 + $0x758] sm:$0xff] %v611
                %v613 = vld [vmem:[%s139 + $0xea0] sm:$0xff]
                %614 = vst [vmem:[%s140 + $0x760] sm:$0xff] %v613
                %v615 = vld [vmem:[%s139 + $0xea8] sm:$0xff]
                %616 = vst [vmem:[%s140 + $0x768] sm:$0xff] %v615
                %v617 = vld [vmem:[%s139 + $0xeb0] sm:$0xff]
                %618 = vst [vmem:[%s140 + $0x770] sm:$0xff] %v617
                %v619 = vld [vmem:[%s139 + $0xeb8] sm:$0xff]
                %620 = vst [vmem:[%s140 + $0x778] sm:$0xff] %v619
                %v621 = vld [vmem:[%s139 + $0xf00] sm:$0xff]
                %622 = vst [vmem:[%s140 + $0x780] sm:$0xff] %v621
                %v623 = vld [vmem:[%s139 + $0xf08] sm:$0xff]
                %624 = vst [vmem:[%s140 + $0x788] sm:$0xff] %v623
                %v625 = vld [vmem:[%s139 + $0xf10] sm:$0xff]
                %626 = vst [vmem:[%s140 + $0x790] sm:$0xff] %v625
                %v627 = vld [vmem:[%s139 + $0xf18] sm:$0xff]
                %628 = vst [vmem:[%s140 + $0x798] sm:$0xff] %v627
                %v629 = vld [vmem:[%s139 + $0xf20] sm:$0xff]
                %630 = vst [vmem:[%s140 + $0x7a0] sm:$0xff] %v629
                %v631 = vld [vmem:[%s139 + $0xf28] sm:$0xff]
                %632 = vst [vmem:[%s140 + $0x7a8] sm:$0xff] %v631
                %v633 = vld [vmem:[%s139 + $0xf30] sm:$0xff]
                %634 = vst [vmem:[%s140 + $0x7b0] sm:$0xff] %v633
                %v635 = vld [vmem:[%s139 + $0xf38] sm:$0xff]
                %636 = vst [vmem:[%s140 + $0x7b8] sm:$0xff] %v635
                %v637 = vld [vmem:[%s139 + $0xf80] sm:$0xff]
                %638 = vst [vmem:[%s140 + $0x7c0] sm:$0xff] %v637
                %v639 = vld [vmem:[%s139 + $0xf88] sm:$0xff]
                %640 = vst [vmem:[%s140 + $0x7c8] sm:$0xff] %v639
                %v641 = vld [vmem:[%s139 + $0xf90] sm:$0xff]
                %642 = vst [vmem:[%s140 + $0x7d0] sm:$0xff] %v641
                %v643 = vld [vmem:[%s139 + $0xf98] sm:$0xff]
                %644 = vst [vmem:[%s140 + $0x7d8] sm:$0xff] %v643
                %v645 = vld [vmem:[%s139 + $0xfa0] sm:$0xff]
                %646 = vst [vmem:[%s140 + $0x7e0] sm:$0xff] %v645
                %v647 = vld [vmem:[%s139 + $0xfa8] sm:$0xff]
                %648 = vst [vmem:[%s140 + $0x7e8] sm:$0xff] %v647
                %v649 = vld [vmem:[%s139 + $0xfb0] sm:$0xff]
                %650 = vst [vmem:[%s140 + $0x7f0] sm:$0xff] %v649
                %v651 = vld [vmem:[%s139 + $0xfb8] sm:$0xff]
                %652 = vst [vmem:[%s140 + $0x7f8] sm:$0xff] %v651
              $region37: #{conv_block_forward.3} parent=31 // loop_footer
                %s138 = sadd.s32 1, %s134
              $region38: #{conv_block_forward.3} parent=31 // loop_footer_branch
                %133 = sbr.rel target = $region34
              $region39: #{conv_block_forward.3} parent=31 // loop_exit
                _
            $region32: #{conv_block_forward.3} parent=27 // pred_fallthru
              _
            // Predicated region
            $region40: #{conv_block_forward.3} parent=27 // pred_check
              _
            $region41: #{conv_block_forward.3} parent=27 // pred_check_branch
              %654 = sbr.rel target = $region43
            $region42: #{conv_block_forward.3} parent=27 // pred_region
              _
            $region43: #{conv_block_forward.3} parent=27 // pred_fallthru
              _
          $region28: #{conv_block_forward.3} parent=23 // pred_fallthru
            _
          %655 = vnop
        $region24: #{conv_block_forward.3} parent=19 // pred_fallthru
          _
      $region20: #{conv_block_forward.3} parent=5 // pred_fallthru
        _
      %p656 = scmp.le.s32.totalorder 1, %s8
      %p657 = scmp.lt.s32.totalorder %s8, 5
      %p658 = pnand %p656, %p657
      %p659 = pneg %p658
      // Predicated region
      $region44: #{conv_block_forward.3} parent=5 // pred_check
        _
      $region45: #{conv_block_forward.3} parent=5 // pred_check_branch
        %661 = sbr.rel (%p658) target = $region47
      $region46: #{conv_block_forward.3} parent=5 // pred_region
        %s662 = ssub.s32 %s8, 1
        %s663 = sand.u32 %s56, 1
        %s664 = sand.u32 %s56, 1
        %s665 = smul.addr %s664, 2048
        %s666 = scalar_lea.vmem [#allocation4], %s665
        // Predicated region
        $region48: #{conv_block_forward.3} parent=46 // pred_check
          %p667 = pneg %p69
        $region49: #{conv_block_forward.3} parent=46 // pred_check_branch
          %669 = sbr.rel (%p667) target = $region51
        $region50: #{conv_block_forward.3} parent=46 // pred_region
          _
        $region51: #{conv_block_forward.3} parent=46 // pred_fallthru
          _
        %p670 = pneg %p41
        %p671 = pneg %p38
        %s672 = sand.u32 %s56, 1
        %s673 = sand.u32 %s56, 1
        %s674 = smul.addr %s673, 2048
        %s675 = scalar_lea.vmem [#allocation4], %s674
        %p676 = pneg %p69
        %p677 = pneg %p66
        %p678 = pneg %p95
        %p679 = pneg %p92
        %p680 = scmp.lt.s32.totalorder %s17, 1
        %s681 = scalar_select %p680, %s17, 1
        %s682 = smul.addr %s681, 32
        %s683 = smul.addr %s682, 8
        %s684 = scalar_lea.vmem %s2, %s683
        %s685 = smul.u32 16, %s18
        %p686 = scmp.lt.s32.totalorder %s17, 1
        %s687 = scalar_select %p686, %s17, 1
        %s688 = smul.addr %s687, 32
        %s689 = smul.addr %s688, 8
        %s690 = scalar_lea.vmem %s2, %s689
        %p691 = scmp.eq.s32.totalorder %s18, 0
        // Predicated region
        $region52: #{conv_block_forward.3} parent=46 // pred_check
          %p692 = pneg %p691
        $region53: #{conv_block_forward.3} parent=46 // pred_check_branch
          %694 = sbr.rel (%p692) target = $region55
        $region54: #{conv_block_forward.3} parent=46 // pred_region
          %vm695 = vcmask 7168
          %696 = vst.msk [vmem:[#allocation2] sm:$0xff] %vm695, 0.0
          %697 = vst.msk [vmem:[#allocation3] sm:$0xff] %vm695, 0.0
        $region55: #{conv_block_forward.3} parent=46 // pred_fallthru
          _
        %v698 = vld [vmem:[%s0] sm:$0xff]
        %v699 = vld [vmem:[%s666] sm:$0xff]
        %v700 = vld [vmem:[%s666 + $0x8] sm:$0xff]
        %v701 = vld [vmem:[%s666 + $0x10] sm:$0xff]
        %v702 = vld [vmem:[%s666 + $0x18] sm:$0xff]
        %v703 = vld [vmem:[%s666 + $0x20] sm:$0xff]
        %v704 = vld [vmem:[%s666 + $0x28] sm:$0xff]
        %v705 = vld [vmem:[%s666 + $0x30] sm:$0xff]
        %v706 = vld [vmem:[%s666 + $0x38] sm:$0xff]
        %v707 = vld [vmem:[%s666 + $0x40] sm:$0xff]
        %v708 = vld [vmem:[%s666 + $0x48] sm:$0xff]
        %v709 = vld [vmem:[%s666 + $0x50] sm:$0xff]
        %v710 = vld [vmem:[%s666 + $0x58] sm:$0xff]
        %v711 = vld [vmem:[%s666 + $0x60] sm:$0xff]
        %v712 = vld [vmem:[%s666 + $0x68] sm:$0xff]
        %v713 = vld [vmem:[%s666 + $0x70] sm:$0xff]
        %v714 = vld [vmem:[%s666 + $0x78] sm:$0xff]
        %v715 = vld [vmem:[%s666 + $0x80] sm:$0xff]
        %v716 = vld [vmem:[%s666 + $0x88] sm:$0xff]
        %v717 = vld [vmem:[%s666 + $0x90] sm:$0xff]
        %v718 = vld [vmem:[%s666 + $0x98] sm:$0xff]
        %v719 = vld [vmem:[%s666 + $0xa0] sm:$0xff]
        %v720 = vld [vmem:[%s666 + $0xa8] sm:$0xff]
        %v721 = vld [vmem:[%s666 + $0xb0] sm:$0xff]
        %v722 = vld [vmem:[%s666 + $0xb8] sm:$0xff]
        %v723 = vld [vmem:[%s666 + $0xc0] sm:$0xff]
        %v724 = vld [vmem:[%s666 + $0xc8] sm:$0xff]
        %v725 = vld [vmem:[%s666 + $0xd0] sm:$0xff]
        %v726 = vld [vmem:[%s666 + $0xd8] sm:$0xff]
        %v727 = vld [vmem:[%s666 + $0xe0] sm:$0xff]
        %v728 = vld [vmem:[%s666 + $0xe8] sm:$0xff]
        %v729 = vld [vmem:[%s666 + $0xf0] sm:$0xff]
        %v730 = vld [vmem:[%s666 + $0xf8] sm:$0xff]
        %v731 = vld [vmem:[%s666 + $0x100] sm:$0xff]
        %v732 = vld [vmem:[%s666 + $0x108] sm:$0xff]
        %v733 = vld [vmem:[%s666 + $0x110] sm:$0xff]
        %v734 = vld [vmem:[%s666 + $0x118] sm:$0xff]
        %v735 = vld [vmem:[%s666 + $0x120] sm:$0xff]
        %v736 = vld [vmem:[%s666 + $0x128] sm:$0xff]
        %v737 = vld [vmem:[%s666 + $0x130] sm:$0xff]
        %v738 = vld [vmem:[%s666 + $0x138] sm:$0xff]
        %v739 = vld [vmem:[%s666 + $0x140] sm:$0xff]
        %v740 = vld [vmem:[%s666 + $0x148] sm:$0xff]
        %v741 = vld [vmem:[%s666 + $0x150] sm:$0xff]
        %v742 = vld [vmem:[%s666 + $0x158] sm:$0xff]
        %v743 = vld [vmem:[%s666 + $0x160] sm:$0xff]
        %v744 = vld [vmem:[%s666 + $0x168] sm:$0xff]
        %v745 = vld [vmem:[%s666 + $0x170] sm:$0xff]
        %v746 = vld [vmem:[%s666 + $0x178] sm:$0xff]
        %v747 = vld [vmem:[%s666 + $0x180] sm:$0xff]
        %v748 = vld [vmem:[%s666 + $0x188] sm:$0xff]
        %v749 = vld [vmem:[%s666 + $0x190] sm:$0xff]
        %v750 = vld [vmem:[%s666 + $0x198] sm:$0xff]
        %v751 = vld [vmem:[%s666 + $0x1a0] sm:$0xff]
        %v752 = vld [vmem:[%s666 + $0x1a8] sm:$0xff]
        %v753 = vld [vmem:[%s666 + $0x1b0] sm:$0xff]
        %v754 = vld [vmem:[%s666 + $0x1b8] sm:$0xff]
        %v755 = vld [vmem:[%s666 + $0x1c0] sm:$0xff]
        %v756 = vld [vmem:[%s666 + $0x1c8] sm:$0xff]
        %v757 = vld [vmem:[%s666 + $0x1d0] sm:$0xff]
        %v758 = vld [vmem:[%s666 + $0x1d8] sm:$0xff]
        %v759 = vld [vmem:[%s666 + $0x1e0] sm:$0xff]
        %v760 = vld [vmem:[%s666 + $0x1e8] sm:$0xff]
        %v761 = vld [vmem:[%s666 + $0x1f0] sm:$0xff]
        %v762 = vld [vmem:[%s666 + $0x1f8] sm:$0xff]
        %v763 = vld [vmem:[%s666 + $0x200] sm:$0xff]
        %v764 = vld [vmem:[%s666 + $0x208] sm:$0xff]
        %v765 = vld [vmem:[%s666 + $0x210] sm:$0xff]
        %v766 = vld [vmem:[%s666 + $0x218] sm:$0xff]
        %v767 = vld [vmem:[%s666 + $0x220] sm:$0xff]
        %v768 = vld [vmem:[%s666 + $0x228] sm:$0xff]
        %v769 = vld [vmem:[%s666 + $0x230] sm:$0xff]
        %v770 = vld [vmem:[%s666 + $0x238] sm:$0xff]
        %v771 = vld [vmem:[%s666 + $0x240] sm:$0xff]
        %v772 = vld [vmem:[%s666 + $0x248] sm:$0xff]
        %v773 = vld [vmem:[%s666 + $0x250] sm:$0xff]
        %v774 = vld [vmem:[%s666 + $0x258] sm:$0xff]
        %v775 = vld [vmem:[%s666 + $0x260] sm:$0xff]
        %v776 = vld [vmem:[%s666 + $0x268] sm:$0xff]
        %v777 = vld [vmem:[%s666 + $0x270] sm:$0xff]
        %v778 = vld [vmem:[%s666 + $0x278] sm:$0xff]
        %v779 = vld [vmem:[%s666 + $0x280] sm:$0xff]
        %v780 = vld [vmem:[%s666 + $0x288] sm:$0xff]
        %v781 = vld [vmem:[%s666 + $0x290] sm:$0xff]
        %v782 = vld [vmem:[%s666 + $0x298] sm:$0xff]
        %v783 = vld [vmem:[%s666 + $0x2a0] sm:$0xff]
        %v784 = vld [vmem:[%s666 + $0x2a8] sm:$0xff]
        %v785 = vld [vmem:[%s666 + $0x2b0] sm:$0xff]
        %v786 = vld [vmem:[%s666 + $0x2b8] sm:$0xff]
        %v787 = vld [vmem:[%s666 + $0x2c0] sm:$0xff]
        %v788 = vld [vmem:[%s666 + $0x2c8] sm:$0xff]
        %v789 = vld [vmem:[%s666 + $0x2d0] sm:$0xff]
        %v790 = vld [vmem:[%s666 + $0x2d8] sm:$0xff]
        %v791 = vld [vmem:[%s666 + $0x2e0] sm:$0xff]
        %v792 = vld [vmem:[%s666 + $0x2e8] sm:$0xff]
        %v793 = vld [vmem:[%s666 + $0x2f0] sm:$0xff]
        %v794 = vld [vmem:[%s666 + $0x2f8] sm:$0xff]
        %v795 = vld [vmem:[%s666 + $0x300] sm:$0xff]
        %v796 = vld [vmem:[%s666 + $0x308] sm:$0xff]
        %v797 = vld [vmem:[%s666 + $0x310] sm:$0xff]
        %v798 = vld [vmem:[%s666 + $0x318] sm:$0xff]
        %v799 = vld [vmem:[%s666 + $0x320] sm:$0xff]
        %v800 = vld [vmem:[%s666 + $0x328] sm:$0xff]
        %v801 = vld [vmem:[%s666 + $0x330] sm:$0xff]
        %v802 = vld [vmem:[%s666 + $0x338] sm:$0xff]
        %v803 = vld [vmem:[%s666 + $0x340] sm:$0xff]
        %v804 = vld [vmem:[%s666 + $0x348] sm:$0xff]
        %v805 = vld [vmem:[%s666 + $0x350] sm:$0xff]
        %v806 = vld [vmem:[%s666 + $0x358] sm:$0xff]
        %v807 = vld [vmem:[%s666 + $0x360] sm:$0xff]
        %v808 = vld [vmem:[%s666 + $0x368] sm:$0xff]
        %v809 = vld [vmem:[%s666 + $0x370] sm:$0xff]
        %v810 = vld [vmem:[%s666 + $0x378] sm:$0xff]
        %v811 = vld [vmem:[%s666 + $0x380] sm:$0xff]
        %v812 = vld [vmem:[%s666 + $0x388] sm:$0xff]
        %v813 = vld [vmem:[%s666 + $0x390] sm:$0xff]
        %v814 = vld [vmem:[%s666 + $0x398] sm:$0xff]
        %v815 = vld [vmem:[%s666 + $0x3a0] sm:$0xff]
        %v816 = vld [vmem:[%s666 + $0x3a8] sm:$0xff]
        %v817 = vld [vmem:[%s666 + $0x3b0] sm:$0xff]
        %v818 = vld [vmem:[%s666 + $0x3b8] sm:$0xff]
        %v819 = vld [vmem:[%s666 + $0x3c0] sm:$0xff]
        %v820 = vld [vmem:[%s666 + $0x3c8] sm:$0xff]
        %v821 = vld [vmem:[%s666 + $0x3d0] sm:$0xff]
        %v822 = vld [vmem:[%s666 + $0x3d8] sm:$0xff]
        %v823 = vld [vmem:[%s666 + $0x3e0] sm:$0xff]
        %v824 = vld [vmem:[%s666 + $0x3e8] sm:$0xff]
        %v825 = vld [vmem:[%s666 + $0x3f0] sm:$0xff]
        %v826 = vld [vmem:[%s666 + $0x3f8] sm:$0xff]
        %v827 = vld [vmem:[%s666 + $0x400] sm:$0xff]
        %v828 = vld [vmem:[%s666 + $0x408] sm:$0xff]
        %v829 = vld [vmem:[%s666 + $0x410] sm:$0xff]
        %v830 = vld [vmem:[%s666 + $0x418] sm:$0xff]
        %v831 = vld [vmem:[%s666 + $0x420] sm:$0xff]
        %v832 = vld [vmem:[%s666 + $0x428] sm:$0xff]
        %v833 = vld [vmem:[%s666 + $0x430] sm:$0xff]
        %v834 = vld [vmem:[%s666 + $0x438] sm:$0xff]
        %v835 = vld [vmem:[%s666 + $0x440] sm:$0xff]
        %v836 = vld [vmem:[%s666 + $0x448] sm:$0xff]
        %v837 = vld [vmem:[%s666 + $0x450] sm:$0xff]
        %v838 = vld [vmem:[%s666 + $0x458] sm:$0xff]
        %v839 = vld [vmem:[%s666 + $0x460] sm:$0xff]
        %v840 = vld [vmem:[%s666 + $0x468] sm:$0xff]
        %v841 = vld [vmem:[%s666 + $0x470] sm:$0xff]
        %v842 = vld [vmem:[%s666 + $0x478] sm:$0xff]
        %v843 = vld [vmem:[%s666 + $0x480] sm:$0xff]
        %v844 = vld [vmem:[%s666 + $0x488] sm:$0xff]
        %v845 = vld [vmem:[%s666 + $0x490] sm:$0xff]
        %v846 = vld [vmem:[%s666 + $0x498] sm:$0xff]
        %v847 = vld [vmem:[%s666 + $0x4a0] sm:$0xff]
        %v848 = vld [vmem:[%s666 + $0x4a8] sm:$0xff]
        %v849 = vld [vmem:[%s666 + $0x4b0] sm:$0xff]
        %v850 = vld [vmem:[%s666 + $0x4b8] sm:$0xff]
        %v851 = vld [vmem:[%s666 + $0x4c0] sm:$0xff]
        %v852 = vld [vmem:[%s666 + $0x4c8] sm:$0xff]
        %v853 = vld [vmem:[%s666 + $0x4d0] sm:$0xff]
        %v854 = vld [vmem:[%s666 + $0x4d8] sm:$0xff]
        %v855 = vld [vmem:[%s666 + $0x4e0] sm:$0xff]
        %v856 = vld [vmem:[%s666 + $0x4e8] sm:$0xff]
        %v857 = vld [vmem:[%s666 + $0x4f0] sm:$0xff]
        %v858 = vld [vmem:[%s666 + $0x4f8] sm:$0xff]
        %v859 = vld [vmem:[%s666 + $0x500] sm:$0xff]
        %v860 = vld [vmem:[%s666 + $0x508] sm:$0xff]
        %v861 = vld [vmem:[%s666 + $0x510] sm:$0xff]
        %v862 = vld [vmem:[%s666 + $0x518] sm:$0xff]
        %v863 = vld [vmem:[%s666 + $0x520] sm:$0xff]
        %v864 = vld [vmem:[%s666 + $0x528] sm:$0xff]
        %v865 = vld [vmem:[%s666 + $0x530] sm:$0xff]
        %v866 = vld [vmem:[%s666 + $0x538] sm:$0xff]
        %v867 = vld [vmem:[%s666 + $0x540] sm:$0xff]
        %v868 = vld [vmem:[%s666 + $0x548] sm:$0xff]
        %v869 = vld [vmem:[%s666 + $0x550] sm:$0xff]
        %v870 = vld [vmem:[%s666 + $0x558] sm:$0xff]
        %v871 = vld [vmem:[%s666 + $0x560] sm:$0xff]
        %v872 = vld [vmem:[%s666 + $0x568] sm:$0xff]
        %v873 = vld [vmem:[%s666 + $0x570] sm:$0xff]
        %v874 = vld [vmem:[%s666 + $0x578] sm:$0xff]
        %v875 = vld [vmem:[%s666 + $0x580] sm:$0xff]
        %v876 = vld [vmem:[%s666 + $0x588] sm:$0xff]
        %v877 = vld [vmem:[%s666 + $0x590] sm:$0xff]
        %v878 = vld [vmem:[%s666 + $0x598] sm:$0xff]
        %v879 = vld [vmem:[%s666 + $0x5a0] sm:$0xff]
        %v880 = vld [vmem:[%s666 + $0x5a8] sm:$0xff]
        %v881 = vld [vmem:[%s666 + $0x5b0] sm:$0xff]
        %v882 = vld [vmem:[%s666 + $0x5b8] sm:$0xff]
        %v883 = vld [vmem:[%s666 + $0x5c0] sm:$0xff]
        %v884 = vld [vmem:[%s666 + $0x5c8] sm:$0xff]
        %v885 = vld [vmem:[%s666 + $0x5d0] sm:$0xff]
        %v886 = vld [vmem:[%s666 + $0x5d8] sm:$0xff]
        %v887 = vld [vmem:[%s666 + $0x5e0] sm:$0xff]
        %v888 = vld [vmem:[%s666 + $0x5e8] sm:$0xff]
        %v889 = vld [vmem:[%s666 + $0x5f0] sm:$0xff]
        %v890 = vld [vmem:[%s666 + $0x5f8] sm:$0xff]
        %v891 = vld [vmem:[%s666 + $0x600] sm:$0xff]
        %v892 = vld [vmem:[%s666 + $0x608] sm:$0xff]
        %v893 = vld [vmem:[%s666 + $0x610] sm:$0xff]
        %v894 = vld [vmem:[%s666 + $0x618] sm:$0xff]
        %v895 = vld [vmem:[%s666 + $0x620] sm:$0xff]
        %v896 = vld [vmem:[%s666 + $0x628] sm:$0xff]
        %v897 = vld [vmem:[%s666 + $0x630] sm:$0xff]
        %v898 = vld [vmem:[%s666 + $0x638] sm:$0xff]
        %v899 = vld [vmem:[%s666 + $0x640] sm:$0xff]
        %v900 = vld [vmem:[%s666 + $0x648] sm:$0xff]
        %v901 = vld [vmem:[%s666 + $0x650] sm:$0xff]
        %v902 = vld [vmem:[%s666 + $0x658] sm:$0xff]
        %v903 = vld [vmem:[%s666 + $0x660] sm:$0xff]
        %v904 = vld [vmem:[%s666 + $0x668] sm:$0xff]
        %v905 = vld [vmem:[%s666 + $0x670] sm:$0xff]
        %v906 = vld [vmem:[%s666 + $0x678] sm:$0xff]
        %v907 = vld [vmem:[%s666 + $0x680] sm:$0xff]
        %v908 = vld [vmem:[%s666 + $0x688] sm:$0xff]
        %v909 = vld [vmem:[%s666 + $0x690] sm:$0xff]
        %v910 = vld [vmem:[%s666 + $0x698] sm:$0xff]
        %v911 = vld [vmem:[%s666 + $0x6a0] sm:$0xff]
        %v912 = vld [vmem:[%s666 + $0x6a8] sm:$0xff]
        %v913 = vld [vmem:[%s666 + $0x6b0] sm:$0xff]
        %v914 = vld [vmem:[%s666 + $0x6b8] sm:$0xff]
        %v915 = vld [vmem:[%s666 + $0x6c0] sm:$0xff]
        %v916 = vld [vmem:[%s666 + $0x6c8] sm:$0xff]
        %v917 = vld [vmem:[%s666 + $0x6d0] sm:$0xff]
        %v918 = vld [vmem:[%s666 + $0x6d8] sm:$0xff]
        %v919 = vld [vmem:[%s666 + $0x6e0] sm:$0xff]
        %v920 = vld [vmem:[%s666 + $0x6e8] sm:$0xff]
        %v921 = vld [vmem:[%s666 + $0x6f0] sm:$0xff]
        %v922 = vld [vmem:[%s666 + $0x6f8] sm:$0xff]
        %v923 = vld [vmem:[%s666 + $0x700] sm:$0xff]
        %v924 = vld [vmem:[%s666 + $0x708] sm:$0xff]
        %v925 = vld [vmem:[%s666 + $0x710] sm:$0xff]
        %v926 = vld [vmem:[%s666 + $0x718] sm:$0xff]
        %v927 = vld [vmem:[%s666 + $0x720] sm:$0xff]
        %v928 = vld [vmem:[%s666 + $0x728] sm:$0xff]
        %v929 = vld [vmem:[%s666 + $0x730] sm:$0xff]
        %v930 = vld [vmem:[%s666 + $0x738] sm:$0xff]
        %v931 = vld [vmem:[%s666 + $0x740] sm:$0xff]
        %v932 = vld [vmem:[%s666 + $0x748] sm:$0xff]
        %v933 = vld [vmem:[%s666 + $0x750] sm:$0xff]
        %v934 = vld [vmem:[%s666 + $0x758] sm:$0xff]
        %v935 = vld [vmem:[%s666 + $0x760] sm:$0xff]
        %v936 = vld [vmem:[%s666 + $0x768] sm:$0xff]
        %v937 = vld [vmem:[%s666 + $0x770] sm:$0xff]
        %v938 = vld [vmem:[%s666 + $0x778] sm:$0xff]
        %v939 = vld [vmem:[%s666 + $0x780] sm:$0xff]
        %v940 = vld [vmem:[%s666 + $0x788] sm:$0xff]
        %v941 = vld [vmem:[%s666 + $0x790] sm:$0xff]
        %v942 = vld [vmem:[%s666 + $0x798] sm:$0xff]
        %v943 = vld [vmem:[%s666 + $0x7a0] sm:$0xff]
        %v944 = vld [vmem:[%s666 + $0x7a8] sm:$0xff]
        %v945 = vld [vmem:[%s666 + $0x7b0] sm:$0xff]
        %v946 = vld [vmem:[%s666 + $0x7b8] sm:$0xff]
        %v947 = vld [vmem:[%s666 + $0x7c0] sm:$0xff]
        %v948 = vld [vmem:[%s666 + $0x7c8] sm:$0xff]
        %v949 = vld [vmem:[%s666 + $0x7d0] sm:$0xff]
        %v950 = vld [vmem:[%s666 + $0x7d8] sm:$0xff]
        %v951 = vld [vmem:[%s666 + $0x7e0] sm:$0xff]
        %v952 = vld [vmem:[%s666 + $0x7e8] sm:$0xff]
        %v953 = vld [vmem:[%s666 + $0x7f0] sm:$0xff]
        %v954 = vld [vmem:[%s666 + $0x7f8] sm:$0xff]
        %v956 = vunpack.c.l.b16 %v698
        %v957 = vunpack.c.h.b16 %v698
        %v958 = vpack.c.b16 %v956, %v956
        %v959 = vpack.c.b16 %v957, %v957
        %v1218 = vunpack.c.l.b16 %v699
        %v1219 = vunpack.c.h.b16 %v699
        %v1220 = vunpack.c.l.b16 %v700
        %v1221 = vunpack.c.h.b16 %v700
        %v1222 = vunpack.c.l.b16 %v701
        %v1223 = vunpack.c.h.b16 %v701
        %v1224 = vunpack.c.l.b16 %v702
        %v1225 = vunpack.c.h.b16 %v702
        %v1226 = vunpack.c.l.b16 %v703
        %v1227 = vunpack.c.h.b16 %v703
        %v1228 = vunpack.c.l.b16 %v704
        %v1229 = vunpack.c.h.b16 %v704
        %v1230 = vunpack.c.l.b16 %v705
        %v1231 = vunpack.c.h.b16 %v705
        %v1232 = vunpack.c.l.b16 %v706
        %v1233 = vunpack.c.h.b16 %v706
        %v1234 = vunpack.c.l.b16 %v707
        %v1235 = vunpack.c.h.b16 %v707
        %v1236 = vunpack.c.l.b16 %v708
        %v1237 = vunpack.c.h.b16 %v708
        %v1238 = vunpack.c.l.b16 %v709
        %v1239 = vunpack.c.h.b16 %v709
        %v1240 = vunpack.c.l.b16 %v710
        %v1241 = vunpack.c.h.b16 %v710
        %v1242 = vunpack.c.l.b16 %v711
        %v1243 = vunpack.c.h.b16 %v711
        %v1244 = vunpack.c.l.b16 %v712
        %v1245 = vunpack.c.h.b16 %v712
        %v1246 = vunpack.c.l.b16 %v713
        %v1247 = vunpack.c.h.b16 %v713
        %v1248 = vunpack.c.l.b16 %v714
        %v1249 = vunpack.c.h.b16 %v714
        %v1250 = vunpack.c.l.b16 %v715
        %v1251 = vunpack.c.h.b16 %v715
        %v1252 = vunpack.c.l.b16 %v716
        %v1253 = vunpack.c.h.b16 %v716
        %v1254 = vunpack.c.l.b16 %v717
        %v1255 = vunpack.c.h.b16 %v717
        %v1256 = vunpack.c.l.b16 %v718
        %v1257 = vunpack.c.h.b16 %v718
        %v1258 = vunpack.c.l.b16 %v719
        %v1259 = vunpack.c.h.b16 %v719
        %v1260 = vunpack.c.l.b16 %v720
        %v1261 = vunpack.c.h.b16 %v720
        %v1262 = vunpack.c.l.b16 %v721
        %v1263 = vunpack.c.h.b16 %v721
        %v1264 = vunpack.c.l.b16 %v722
        %v1265 = vunpack.c.h.b16 %v722
        %v1266 = vunpack.c.l.b16 %v723
        %v1267 = vunpack.c.h.b16 %v723
        %v1268 = vunpack.c.l.b16 %v724
        %v1269 = vunpack.c.h.b16 %v724
        %v1270 = vunpack.c.l.b16 %v725
        %v1271 = vunpack.c.h.b16 %v725
        %v1272 = vunpack.c.l.b16 %v726
        %v1273 = vunpack.c.h.b16 %v726
        %v1274 = vunpack.c.l.b16 %v727
        %v1275 = vunpack.c.h.b16 %v727
        %v1276 = vunpack.c.l.b16 %v728
        %v1277 = vunpack.c.h.b16 %v728
        %v1278 = vunpack.c.l.b16 %v729
        %v1279 = vunpack.c.h.b16 %v729
        %v1280 = vunpack.c.l.b16 %v730
        %v1281 = vunpack.c.h.b16 %v730
        %v1282 = vunpack.c.l.b16 %v731
        %v1283 = vunpack.c.h.b16 %v731
        %v1284 = vunpack.c.l.b16 %v732
        %v1285 = vunpack.c.h.b16 %v732
        %v1286 = vunpack.c.l.b16 %v733
        %v1287 = vunpack.c.h.b16 %v733
        %v1288 = vunpack.c.l.b16 %v734
        %v1289 = vunpack.c.h.b16 %v734
        %v1290 = vunpack.c.l.b16 %v735
        %v1291 = vunpack.c.h.b16 %v735
        %v1292 = vunpack.c.l.b16 %v736
        %v1293 = vunpack.c.h.b16 %v736
        %v1294 = vunpack.c.l.b16 %v737
        %v1295 = vunpack.c.h.b16 %v737
        %v1296 = vunpack.c.l.b16 %v738
        %v1297 = vunpack.c.h.b16 %v738
        %v1298 = vunpack.c.l.b16 %v739
        %v1299 = vunpack.c.h.b16 %v739
        %v1300 = vunpack.c.l.b16 %v740
        %v1301 = vunpack.c.h.b16 %v740
        %v1302 = vunpack.c.l.b16 %v741
        %v1303 = vunpack.c.h.b16 %v741
        %v1304 = vunpack.c.l.b16 %v742
        %v1305 = vunpack.c.h.b16 %v742
        %v1306 = vunpack.c.l.b16 %v743
        %v1307 = vunpack.c.h.b16 %v743
        %v1308 = vunpack.c.l.b16 %v744
        %v1309 = vunpack.c.h.b16 %v744
        %v1310 = vunpack.c.l.b16 %v745
        %v1311 = vunpack.c.h.b16 %v745
        %v1312 = vunpack.c.l.b16 %v746
        %v1313 = vunpack.c.h.b16 %v746
        %v1314 = vunpack.c.l.b16 %v747
        %v1315 = vunpack.c.h.b16 %v747
        %v1316 = vunpack.c.l.b16 %v748
        %v1317 = vunpack.c.h.b16 %v748
        %v1318 = vunpack.c.l.b16 %v749
        %v1319 = vunpack.c.h.b16 %v749
        %v1320 = vunpack.c.l.b16 %v750
        %v1321 = vunpack.c.h.b16 %v750
        %v1322 = vunpack.c.l.b16 %v751
        %v1323 = vunpack.c.h.b16 %v751
        %v1324 = vunpack.c.l.b16 %v752
        %v1325 = vunpack.c.h.b16 %v752
        %v1326 = vunpack.c.l.b16 %v753
        %v1327 = vunpack.c.h.b16 %v753
        %v1328 = vunpack.c.l.b16 %v754
        %v1329 = vunpack.c.h.b16 %v754
        %v1330 = vunpack.c.l.b16 %v755
        %v1331 = vunpack.c.h.b16 %v755
        %v1332 = vunpack.c.l.b16 %v756
        %v1333 = vunpack.c.h.b16 %v756
        %v1334 = vunpack.c.l.b16 %v757
        %v1335 = vunpack.c.h.b16 %v757
        %v1336 = vunpack.c.l.b16 %v758
        %v1337 = vunpack.c.h.b16 %v758
        %v1338 = vunpack.c.l.b16 %v759
        %v1339 = vunpack.c.h.b16 %v759
        %v1340 = vunpack.c.l.b16 %v760
        %v1341 = vunpack.c.h.b16 %v760
        %v1342 = vunpack.c.l.b16 %v761
        %v1343 = vunpack.c.h.b16 %v761
        %v1344 = vunpack.c.l.b16 %v762
        %v1345 = vunpack.c.h.b16 %v762
        %v1346 = vunpack.c.l.b16 %v763
        %v1347 = vunpack.c.h.b16 %v763
        %v1348 = vunpack.c.l.b16 %v764
        %v1349 = vunpack.c.h.b16 %v764
        %v1350 = vunpack.c.l.b16 %v765
        %v1351 = vunpack.c.h.b16 %v765
        %v1352 = vunpack.c.l.b16 %v766
        %v1353 = vunpack.c.h.b16 %v766
        %v1354 = vunpack.c.l.b16 %v767
        %v1355 = vunpack.c.h.b16 %v767
        %v1356 = vunpack.c.l.b16 %v768
        %v1357 = vunpack.c.h.b16 %v768
        %v1358 = vunpack.c.l.b16 %v769
        %v1359 = vunpack.c.h.b16 %v769
        %v1360 = vunpack.c.l.b16 %v770
        %v1361 = vunpack.c.h.b16 %v770
        %v1362 = vunpack.c.l.b16 %v771
        %v1363 = vunpack.c.h.b16 %v771
        %v1364 = vunpack.c.l.b16 %v772
        %v1365 = vunpack.c.h.b16 %v772
        %v1366 = vunpack.c.l.b16 %v773
        %v1367 = vunpack.c.h.b16 %v773
        %v1368 = vunpack.c.l.b16 %v774
        %v1369 = vunpack.c.h.b16 %v774
        %v1370 = vunpack.c.l.b16 %v775
        %v1371 = vunpack.c.h.b16 %v775
        %v1372 = vunpack.c.l.b16 %v776
        %v1373 = vunpack.c.h.b16 %v776
        %v1374 = vunpack.c.l.b16 %v777
        %v1375 = vunpack.c.h.b16 %v777
        %v1376 = vunpack.c.l.b16 %v778
        %v1377 = vunpack.c.h.b16 %v778
        %v1378 = vunpack.c.l.b16 %v779
        %v1379 = vunpack.c.h.b16 %v779
        %v1380 = vunpack.c.l.b16 %v780
        %v1381 = vunpack.c.h.b16 %v780
        %v1382 = vunpack.c.l.b16 %v781
        %v1383 = vunpack.c.h.b16 %v781
        %v1384 = vunpack.c.l.b16 %v782
        %v1385 = vunpack.c.h.b16 %v782
        %v1386 = vunpack.c.l.b16 %v783
        %v1387 = vunpack.c.h.b16 %v783
        %v1388 = vunpack.c.l.b16 %v784
        %v1389 = vunpack.c.h.b16 %v784
        %v1390 = vunpack.c.l.b16 %v785
        %v1391 = vunpack.c.h.b16 %v785
        %v1392 = vunpack.c.l.b16 %v786
        %v1393 = vunpack.c.h.b16 %v786
        %v1394 = vunpack.c.l.b16 %v787
        %v1395 = vunpack.c.h.b16 %v787
        %v1396 = vunpack.c.l.b16 %v788
        %v1397 = vunpack.c.h.b16 %v788
        %v1398 = vunpack.c.l.b16 %v789
        %v1399 = vunpack.c.h.b16 %v789
        %v1400 = vunpack.c.l.b16 %v790
        %v1401 = vunpack.c.h.b16 %v790
        %v1402 = vunpack.c.l.b16 %v791
        %v1403 = vunpack.c.h.b16 %v791
        %v1404 = vunpack.c.l.b16 %v792
        %v1405 = vunpack.c.h.b16 %v792
        %v1406 = vunpack.c.l.b16 %v793
        %v1407 = vunpack.c.h.b16 %v793
        %v1408 = vunpack.c.l.b16 %v794
        %v1409 = vunpack.c.h.b16 %v794
        %v1410 = vunpack.c.l.b16 %v795
        %v1411 = vunpack.c.h.b16 %v795
        %v1412 = vunpack.c.l.b16 %v796
        %v1413 = vunpack.c.h.b16 %v796
        %v1414 = vunpack.c.l.b16 %v797
        %v1415 = vunpack.c.h.b16 %v797
        %v1416 = vunpack.c.l.b16 %v798
        %v1417 = vunpack.c.h.b16 %v798
        %v1418 = vunpack.c.l.b16 %v799
        %v1419 = vunpack.c.h.b16 %v799
        %v1420 = vunpack.c.l.b16 %v800
        %v1421 = vunpack.c.h.b16 %v800
        %v1422 = vunpack.c.l.b16 %v801
        %v1423 = vunpack.c.h.b16 %v801
        %v1424 = vunpack.c.l.b16 %v802
        %v1425 = vunpack.c.h.b16 %v802
        %v1426 = vunpack.c.l.b16 %v803
        %v1427 = vunpack.c.h.b16 %v803
        %v1428 = vunpack.c.l.b16 %v804
        %v1429 = vunpack.c.h.b16 %v804
        %v1430 = vunpack.c.l.b16 %v805
        %v1431 = vunpack.c.h.b16 %v805
        %v1432 = vunpack.c.l.b16 %v806
        %v1433 = vunpack.c.h.b16 %v806
        %v1434 = vunpack.c.l.b16 %v807
        %v1435 = vunpack.c.h.b16 %v807
        %v1436 = vunpack.c.l.b16 %v808
        %v1437 = vunpack.c.h.b16 %v808
        %v1438 = vunpack.c.l.b16 %v809
        %v1439 = vunpack.c.h.b16 %v809
        %v1440 = vunpack.c.l.b16 %v810
        %v1441 = vunpack.c.h.b16 %v810
        %v1442 = vunpack.c.l.b16 %v811
        %v1443 = vunpack.c.h.b16 %v811
        %v1444 = vunpack.c.l.b16 %v812
        %v1445 = vunpack.c.h.b16 %v812
        %v1446 = vunpack.c.l.b16 %v813
        %v1447 = vunpack.c.h.b16 %v813
        %v1448 = vunpack.c.l.b16 %v814
        %v1449 = vunpack.c.h.b16 %v814
        %v1450 = vunpack.c.l.b16 %v815
        %v1451 = vunpack.c.h.b16 %v815
        %v1452 = vunpack.c.l.b16 %v816
        %v1453 = vunpack.c.h.b16 %v816
        %v1454 = vunpack.c.l.b16 %v817
        %v1455 = vunpack.c.h.b16 %v817
        %v1456 = vunpack.c.l.b16 %v818
        %v1457 = vunpack.c.h.b16 %v818
        %v1458 = vunpack.c.l.b16 %v819
        %v1459 = vunpack.c.h.b16 %v819
        %v1460 = vunpack.c.l.b16 %v820
        %v1461 = vunpack.c.h.b16 %v820
        %v1462 = vunpack.c.l.b16 %v821
        %v1463 = vunpack.c.h.b16 %v821
        %v1464 = vunpack.c.l.b16 %v822
        %v1465 = vunpack.c.h.b16 %v822
        %v1466 = vunpack.c.l.b16 %v823
        %v1467 = vunpack.c.h.b16 %v823
        %v1468 = vunpack.c.l.b16 %v824
        %v1469 = vunpack.c.h.b16 %v824
        %v1470 = vunpack.c.l.b16 %v825
        %v1471 = vunpack.c.h.b16 %v825
        %v1472 = vunpack.c.l.b16 %v826
        %v1473 = vunpack.c.h.b16 %v826
        %v1474 = vunpack.c.l.b16 %v827
        %v1475 = vunpack.c.h.b16 %v827
        %v1476 = vunpack.c.l.b16 %v828
        %v1477 = vunpack.c.h.b16 %v828
        %v1478 = vunpack.c.l.b16 %v829
        %v1479 = vunpack.c.h.b16 %v829
        %v1480 = vunpack.c.l.b16 %v830
        %v1481 = vunpack.c.h.b16 %v830
        %v1482 = vunpack.c.l.b16 %v831
        %v1483 = vunpack.c.h.b16 %v831
        %v1484 = vunpack.c.l.b16 %v832
        %v1485 = vunpack.c.h.b16 %v832
        %v1486 = vunpack.c.l.b16 %v833
        %v1487 = vunpack.c.h.b16 %v833
        %v1488 = vunpack.c.l.b16 %v834
        %v1489 = vunpack.c.h.b16 %v834
        %v1490 = vunpack.c.l.b16 %v835
        %v1491 = vunpack.c.h.b16 %v835
        %v1492 = vunpack.c.l.b16 %v836
        %v1493 = vunpack.c.h.b16 %v836
        %v1494 = vunpack.c.l.b16 %v837
        %v1495 = vunpack.c.h.b16 %v837
        %v1496 = vunpack.c.l.b16 %v838
        %v1497 = vunpack.c.h.b16 %v838
        %v1498 = vunpack.c.l.b16 %v839
        %v1499 = vunpack.c.h.b16 %v839
        %v1500 = vunpack.c.l.b16 %v840
        %v1501 = vunpack.c.h.b16 %v840
        %v1502 = vunpack.c.l.b16 %v841
        %v1503 = vunpack.c.h.b16 %v841
        %v1504 = vunpack.c.l.b16 %v842
        %v1505 = vunpack.c.h.b16 %v842
        %v1506 = vunpack.c.l.b16 %v843
        %v1507 = vunpack.c.h.b16 %v843
        %v1508 = vunpack.c.l.b16 %v844
        %v1509 = vunpack.c.h.b16 %v844
        %v1510 = vunpack.c.l.b16 %v845
        %v1511 = vunpack.c.h.b16 %v845
        %v1512 = vunpack.c.l.b16 %v846
        %v1513 = vunpack.c.h.b16 %v846
        %v1514 = vunpack.c.l.b16 %v847
        %v1515 = vunpack.c.h.b16 %v847
        %v1516 = vunpack.c.l.b16 %v848
        %v1517 = vunpack.c.h.b16 %v848
        %v1518 = vunpack.c.l.b16 %v849
        %v1519 = vunpack.c.h.b16 %v849
        %v1520 = vunpack.c.l.b16 %v850
        %v1521 = vunpack.c.h.b16 %v850
        %v1522 = vunpack.c.l.b16 %v851
        %v1523 = vunpack.c.h.b16 %v851
        %v1524 = vunpack.c.l.b16 %v852
        %v1525 = vunpack.c.h.b16 %v852
        %v1526 = vunpack.c.l.b16 %v853
        %v1527 = vunpack.c.h.b16 %v853
        %v1528 = vunpack.c.l.b16 %v854
        %v1529 = vunpack.c.h.b16 %v854
        %v1530 = vunpack.c.l.b16 %v855
        %v1531 = vunpack.c.h.b16 %v855
        %v1532 = vunpack.c.l.b16 %v856
        %v1533 = vunpack.c.h.b16 %v856
        %v1534 = vunpack.c.l.b16 %v857
        %v1535 = vunpack.c.h.b16 %v857
        %v1536 = vunpack.c.l.b16 %v858
        %v1537 = vunpack.c.h.b16 %v858
        %v1538 = vunpack.c.l.b16 %v859
        %v1539 = vunpack.c.h.b16 %v859
        %v1540 = vunpack.c.l.b16 %v860
        %v1541 = vunpack.c.h.b16 %v860
        %v1542 = vunpack.c.l.b16 %v861
        %v1543 = vunpack.c.h.b16 %v861
        %v1544 = vunpack.c.l.b16 %v862
        %v1545 = vunpack.c.h.b16 %v862
        %v1546 = vunpack.c.l.b16 %v863
        %v1547 = vunpack.c.h.b16 %v863
        %v1548 = vunpack.c.l.b16 %v864
        %v1549 = vunpack.c.h.b16 %v864
        %v1550 = vunpack.c.l.b16 %v865
        %v1551 = vunpack.c.h.b16 %v865
        %v1552 = vunpack.c.l.b16 %v866
        %v1553 = vunpack.c.h.b16 %v866
        %v1554 = vunpack.c.l.b16 %v867
        %v1555 = vunpack.c.h.b16 %v867
        %v1556 = vunpack.c.l.b16 %v868
        %v1557 = vunpack.c.h.b16 %v868
        %v1558 = vunpack.c.l.b16 %v869
        %v1559 = vunpack.c.h.b16 %v869
        %v1560 = vunpack.c.l.b16 %v870
        %v1561 = vunpack.c.h.b16 %v870
        %v1562 = vunpack.c.l.b16 %v871
        %v1563 = vunpack.c.h.b16 %v871
        %v1564 = vunpack.c.l.b16 %v872
        %v1565 = vunpack.c.h.b16 %v872
        %v1566 = vunpack.c.l.b16 %v873
        %v1567 = vunpack.c.h.b16 %v873
        %v1568 = vunpack.c.l.b16 %v874
        %v1569 = vunpack.c.h.b16 %v874
        %v1570 = vunpack.c.l.b16 %v875
        %v1571 = vunpack.c.h.b16 %v875
        %v1572 = vunpack.c.l.b16 %v876
        %v1573 = vunpack.c.h.b16 %v876
        %v1574 = vunpack.c.l.b16 %v877
        %v1575 = vunpack.c.h.b16 %v877
        %v1576 = vunpack.c.l.b16 %v878
        %v1577 = vunpack.c.h.b16 %v878
        %v1578 = vunpack.c.l.b16 %v879
        %v1579 = vunpack.c.h.b16 %v879
        %v1580 = vunpack.c.l.b16 %v880
        %v1581 = vunpack.c.h.b16 %v880
        %v1582 = vunpack.c.l.b16 %v881
        %v1583 = vunpack.c.h.b16 %v881
        %v1584 = vunpack.c.l.b16 %v882
        %v1585 = vunpack.c.h.b16 %v882
        %v1586 = vunpack.c.l.b16 %v883
        %v1587 = vunpack.c.h.b16 %v883
        %v1588 = vunpack.c.l.b16 %v884
        %v1589 = vunpack.c.h.b16 %v884
        %v1590 = vunpack.c.l.b16 %v885
        %v1591 = vunpack.c.h.b16 %v885
        %v1592 = vunpack.c.l.b16 %v886
        %v1593 = vunpack.c.h.b16 %v886
        %v1594 = vunpack.c.l.b16 %v887
        %v1595 = vunpack.c.h.b16 %v887
        %v1596 = vunpack.c.l.b16 %v888
        %v1597 = vunpack.c.h.b16 %v888
        %v1598 = vunpack.c.l.b16 %v889
        %v1599 = vunpack.c.h.b16 %v889
        %v1600 = vunpack.c.l.b16 %v890
        %v1601 = vunpack.c.h.b16 %v890
        %v1602 = vunpack.c.l.b16 %v891
        %v1603 = vunpack.c.h.b16 %v891
        %v1604 = vunpack.c.l.b16 %v892
        %v1605 = vunpack.c.h.b16 %v892
        %v1606 = vunpack.c.l.b16 %v893
        %v1607 = vunpack.c.h.b16 %v893
        %v1608 = vunpack.c.l.b16 %v894
        %v1609 = vunpack.c.h.b16 %v894
        %v1610 = vunpack.c.l.b16 %v895
        %v1611 = vunpack.c.h.b16 %v895
        %v1612 = vunpack.c.l.b16 %v896
        %v1613 = vunpack.c.h.b16 %v896
        %v1614 = vunpack.c.l.b16 %v897
        %v1615 = vunpack.c.h.b16 %v897
        %v1616 = vunpack.c.l.b16 %v898
        %v1617 = vunpack.c.h.b16 %v898
        %v1618 = vunpack.c.l.b16 %v899
        %v1619 = vunpack.c.h.b16 %v899
        %v1620 = vunpack.c.l.b16 %v900
        %v1621 = vunpack.c.h.b16 %v900
        %v1622 = vunpack.c.l.b16 %v901
        %v1623 = vunpack.c.h.b16 %v901
        %v1624 = vunpack.c.l.b16 %v902
        %v1625 = vunpack.c.h.b16 %v902
        %v1626 = vunpack.c.l.b16 %v903
        %v1627 = vunpack.c.h.b16 %v903
        %v1628 = vunpack.c.l.b16 %v904
        %v1629 = vunpack.c.h.b16 %v904
        %v1630 = vunpack.c.l.b16 %v905
        %v1631 = vunpack.c.h.b16 %v905
        %v1632 = vunpack.c.l.b16 %v906
        %v1633 = vunpack.c.h.b16 %v906
        %v1634 = vunpack.c.l.b16 %v907
        %v1635 = vunpack.c.h.b16 %v907
        %v1636 = vunpack.c.l.b16 %v908
        %v1637 = vunpack.c.h.b16 %v908
        %v1638 = vunpack.c.l.b16 %v909
        %v1639 = vunpack.c.h.b16 %v909
        %v1640 = vunpack.c.l.b16 %v910
        %v1641 = vunpack.c.h.b16 %v910
        %v1642 = vunpack.c.l.b16 %v911
        %v1643 = vunpack.c.h.b16 %v911
        %v1644 = vunpack.c.l.b16 %v912
        %v1645 = vunpack.c.h.b16 %v912
        %v1646 = vunpack.c.l.b16 %v913
        %v1647 = vunpack.c.h.b16 %v913
        %v1648 = vunpack.c.l.b16 %v914
        %v1649 = vunpack.c.h.b16 %v914
        %v1650 = vunpack.c.l.b16 %v915
        %v1651 = vunpack.c.h.b16 %v915
        %v1652 = vunpack.c.l.b16 %v916
        %v1653 = vunpack.c.h.b16 %v916
        %v1654 = vunpack.c.l.b16 %v917
        %v1655 = vunpack.c.h.b16 %v917
        %v1656 = vunpack.c.l.b16 %v918
        %v1657 = vunpack.c.h.b16 %v918
        %v1658 = vunpack.c.l.b16 %v919
        %v1659 = vunpack.c.h.b16 %v919
        %v1660 = vunpack.c.l.b16 %v920
        %v1661 = vunpack.c.h.b16 %v920
        %v1662 = vunpack.c.l.b16 %v921
        %v1663 = vunpack.c.h.b16 %v921
        %v1664 = vunpack.c.l.b16 %v922
        %v1665 = vunpack.c.h.b16 %v922
        %v1666 = vunpack.c.l.b16 %v923
        %v1667 = vunpack.c.h.b16 %v923
        %v1668 = vunpack.c.l.b16 %v924
        %v1669 = vunpack.c.h.b16 %v924
        %v1670 = vunpack.c.l.b16 %v925
        %v1671 = vunpack.c.h.b16 %v925
        %v1672 = vunpack.c.l.b16 %v926
        %v1673 = vunpack.c.h.b16 %v926
        %v1674 = vunpack.c.l.b16 %v927
        %v1675 = vunpack.c.h.b16 %v927
        %v1676 = vunpack.c.l.b16 %v928
        %v1677 = vunpack.c.h.b16 %v928
        %v1678 = vunpack.c.l.b16 %v929
        %v1679 = vunpack.c.h.b16 %v929
        %v1680 = vunpack.c.l.b16 %v930
        %v1681 = vunpack.c.h.b16 %v930
        %v1682 = vunpack.c.l.b16 %v931
        %v1683 = vunpack.c.h.b16 %v931
        %v1684 = vunpack.c.l.b16 %v932
        %v1685 = vunpack.c.h.b16 %v932
        %v1686 = vunpack.c.l.b16 %v933
        %v1687 = vunpack.c.h.b16 %v933
        %v1688 = vunpack.c.l.b16 %v934
        %v1689 = vunpack.c.h.b16 %v934
        %v1690 = vunpack.c.l.b16 %v935
        %v1691 = vunpack.c.h.b16 %v935
        %v1692 = vunpack.c.l.b16 %v936
        %v1693 = vunpack.c.h.b16 %v936
        %v1694 = vunpack.c.l.b16 %v937
        %v1695 = vunpack.c.h.b16 %v937
        %v1696 = vunpack.c.l.b16 %v938
        %v1697 = vunpack.c.h.b16 %v938
        %v1698 = vunpack.c.l.b16 %v939
        %v1699 = vunpack.c.h.b16 %v939
        %v1700 = vunpack.c.l.b16 %v940
        %v1701 = vunpack.c.h.b16 %v940
        %v1702 = vunpack.c.l.b16 %v941
        %v1703 = vunpack.c.h.b16 %v941
        %v1704 = vunpack.c.l.b16 %v942
        %v1705 = vunpack.c.h.b16 %v942
        %v1706 = vunpack.c.l.b16 %v943
        %v1707 = vunpack.c.h.b16 %v943
        %v1708 = vunpack.c.l.b16 %v944
        %v1709 = vunpack.c.h.b16 %v944
        %v1710 = vunpack.c.l.b16 %v945
        %v1711 = vunpack.c.h.b16 %v945
        %v1712 = vunpack.c.l.b16 %v946
        %v1713 = vunpack.c.h.b16 %v946
        %v1714 = vunpack.c.l.b16 %v947
        %v1715 = vunpack.c.h.b16 %v947
        %v1716 = vunpack.c.l.b16 %v948
        %v1717 = vunpack.c.h.b16 %v948
        %v1718 = vunpack.c.l.b16 %v949
        %v1719 = vunpack.c.h.b16 %v949
        %v1720 = vunpack.c.l.b16 %v950
        %v1721 = vunpack.c.h.b16 %v950
        %v1722 = vunpack.c.l.b16 %v951
        %v1723 = vunpack.c.h.b16 %v951
        %v1724 = vunpack.c.l.b16 %v952
        %v1725 = vunpack.c.h.b16 %v952
        %v1726 = vunpack.c.l.b16 %v953
        %v1727 = vunpack.c.h.b16 %v953
        %v1728 = vunpack.c.l.b16 %v954
        %v1729 = vunpack.c.h.b16 %v954
        %v1730 = vpack.c.b16 %v1234, %v1218
        %v1731 = vpack.c.b16 %v1235, %v1219
        %v1732 = vpack.c.b16 %v1236, %v1220
        %v1733 = vpack.c.b16 %v1237, %v1221
        %v1734 = vpack.c.b16 %v1238, %v1222
        %v1735 = vpack.c.b16 %v1239, %v1223
        %v1736 = vpack.c.b16 %v1240, %v1224
        %v1737 = vpack.c.b16 %v1241, %v1225
        %v1738 = vpack.c.b16 %v1242, %v1226
        %v1739 = vpack.c.b16 %v1243, %v1227
        %v1740 = vpack.c.b16 %v1244, %v1228
        %v1741 = vpack.c.b16 %v1245, %v1229
        %v1742 = vpack.c.b16 %v1246, %v1230
        %v1743 = vpack.c.b16 %v1247, %v1231
        %v1744 = vpack.c.b16 %v1248, %v1232
        %v1745 = vpack.c.b16 %v1249, %v1233
        %v1746 = vpack.c.b16 %v1266, %v1250
        %v1747 = vpack.c.b16 %v1267, %v1251
        %v1748 = vpack.c.b16 %v1268, %v1252
        %v1749 = vpack.c.b16 %v1269, %v1253
        %v1750 = vpack.c.b16 %v1270, %v1254
        %v1751 = vpack.c.b16 %v1271, %v1255
        %v1752 = vpack.c.b16 %v1272, %v1256
        %v1753 = vpack.c.b16 %v1273, %v1257
        %v1754 = vpack.c.b16 %v1274, %v1258
        %v1755 = vpack.c.b16 %v1275, %v1259
        %v1756 = vpack.c.b16 %v1276, %v1260
        %v1757 = vpack.c.b16 %v1277, %v1261
        %v1758 = vpack.c.b16 %v1278, %v1262
        %v1759 = vpack.c.b16 %v1279, %v1263
        %v1760 = vpack.c.b16 %v1280, %v1264
        %v1761 = vpack.c.b16 %v1281, %v1265
        %v1762 = vpack.c.b16 %v1298, %v1282
        %v1763 = vpack.c.b16 %v1299, %v1283
        %v1764 = vpack.c.b16 %v1300, %v1284
        %v1765 = vpack.c.b16 %v1301, %v1285
        %v1766 = vpack.c.b16 %v1302, %v1286
        %v1767 = vpack.c.b16 %v1303, %v1287
        %v1768 = vpack.c.b16 %v1304, %v1288
        %v1769 = vpack.c.b16 %v1305, %v1289
        %v1770 = vpack.c.b16 %v1306, %v1290
        %v1771 = vpack.c.b16 %v1307, %v1291
        %v1772 = vpack.c.b16 %v1308, %v1292
        %v1773 = vpack.c.b16 %v1309, %v1293
        %v1774 = vpack.c.b16 %v1310, %v1294
        %v1775 = vpack.c.b16 %v1311, %v1295
        %v1776 = vpack.c.b16 %v1312, %v1296
        %v1777 = vpack.c.b16 %v1313, %v1297
        %v1778 = vpack.c.b16 %v1330, %v1314
        %v1779 = vpack.c.b16 %v1331, %v1315
        %v1780 = vpack.c.b16 %v1332, %v1316
        %v1781 = vpack.c.b16 %v1333, %v1317
        %v1782 = vpack.c.b16 %v1334, %v1318
        %v1783 = vpack.c.b16 %v1335, %v1319
        %v1784 = vpack.c.b16 %v1336, %v1320
        %v1785 = vpack.c.b16 %v1337, %v1321
        %v1786 = vpack.c.b16 %v1338, %v1322
        %v1787 = vpack.c.b16 %v1339, %v1323
        %v1788 = vpack.c.b16 %v1340, %v1324
        %v1789 = vpack.c.b16 %v1341, %v1325
        %v1790 = vpack.c.b16 %v1342, %v1326
        %v1791 = vpack.c.b16 %v1343, %v1327
        %v1792 = vpack.c.b16 %v1344, %v1328
        %v1793 = vpack.c.b16 %v1345, %v1329
        %v1794 = vpack.c.b16 %v1362, %v1346
        %v1795 = vpack.c.b16 %v1363, %v1347
        %v1796 = vpack.c.b16 %v1364, %v1348
        %v1797 = vpack.c.b16 %v1365, %v1349
        %v1798 = vpack.c.b16 %v1366, %v1350
        %v1799 = vpack.c.b16 %v1367, %v1351
        %v1800 = vpack.c.b16 %v1368, %v1352
        %v1801 = vpack.c.b16 %v1369, %v1353
        %v1802 = vpack.c.b16 %v1370, %v1354
        %v1803 = vpack.c.b16 %v1371, %v1355
        %v1804 = vpack.c.b16 %v1372, %v1356
        %v1805 = vpack.c.b16 %v1373, %v1357
        %v1806 = vpack.c.b16 %v1374, %v1358
        %v1807 = vpack.c.b16 %v1375, %v1359
        %v1808 = vpack.c.b16 %v1376, %v1360
        %v1809 = vpack.c.b16 %v1377, %v1361
        %v1810 = vpack.c.b16 %v1394, %v1378
        %v1811 = vpack.c.b16 %v1395, %v1379
        %v1812 = vpack.c.b16 %v1396, %v1380
        %v1813 = vpack.c.b16 %v1397, %v1381
        %v1814 = vpack.c.b16 %v1398, %v1382
        %v1815 = vpack.c.b16 %v1399, %v1383
        %v1816 = vpack.c.b16 %v1400, %v1384
        %v1817 = vpack.c.b16 %v1401, %v1385
        %v1818 = vpack.c.b16 %v1402, %v1386
        %v1819 = vpack.c.b16 %v1403, %v1387
        %v1820 = vpack.c.b16 %v1404, %v1388
        %v1821 = vpack.c.b16 %v1405, %v1389
        %v1822 = vpack.c.b16 %v1406, %v1390
        %v1823 = vpack.c.b16 %v1407, %v1391
        %v1824 = vpack.c.b16 %v1408, %v1392
        %v1825 = vpack.c.b16 %v1409, %v1393
        %v1826 = vpack.c.b16 %v1426, %v1410
        %v1827 = vpack.c.b16 %v1427, %v1411
        %v1828 = vpack.c.b16 %v1428, %v1412
        %v1829 = vpack.c.b16 %v1429, %v1413
        %v1830 = vpack.c.b16 %v1430, %v1414
        %v1831 = vpack.c.b16 %v1431, %v1415
        %v1832 = vpack.c.b16 %v1432, %v1416
        %v1833 = vpack.c.b16 %v1433, %v1417
        %v1834 = vpack.c.b16 %v1434, %v1418
        %v1835 = vpack.c.b16 %v1435, %v1419
        %v1836 = vpack.c.b16 %v1436, %v1420
        %v1837 = vpack.c.b16 %v1437, %v1421
        %v1838 = vpack.c.b16 %v1438, %v1422
        %v1839 = vpack.c.b16 %v1439, %v1423
        %v1840 = vpack.c.b16 %v1440, %v1424
        %v1841 = vpack.c.b16 %v1441, %v1425
        %v1842 = vpack.c.b16 %v1458, %v1442
        %v1843 = vpack.c.b16 %v1459, %v1443
        %v1844 = vpack.c.b16 %v1460, %v1444
        %v1845 = vpack.c.b16 %v1461, %v1445
        %v1846 = vpack.c.b16 %v1462, %v1446
        %v1847 = vpack.c.b16 %v1463, %v1447
        %v1848 = vpack.c.b16 %v1464, %v1448
        %v1849 = vpack.c.b16 %v1465, %v1449
        %v1850 = vpack.c.b16 %v1466, %v1450
        %v1851 = vpack.c.b16 %v1467, %v1451
        %v1852 = vpack.c.b16 %v1468, %v1452
        %v1853 = vpack.c.b16 %v1469, %v1453
        %v1854 = vpack.c.b16 %v1470, %v1454
        %v1855 = vpack.c.b16 %v1471, %v1455
        %v1856 = vpack.c.b16 %v1472, %v1456
        %v1857 = vpack.c.b16 %v1473, %v1457
        %v1858 = vpack.c.b16 %v1490, %v1474
        %v1859 = vpack.c.b16 %v1491, %v1475
        %v1860 = vpack.c.b16 %v1492, %v1476
        %v1861 = vpack.c.b16 %v1493, %v1477
        %v1862 = vpack.c.b16 %v1494, %v1478
        %v1863 = vpack.c.b16 %v1495, %v1479
        %v1864 = vpack.c.b16 %v1496, %v1480
        %v1865 = vpack.c.b16 %v1497, %v1481
        %v1866 = vpack.c.b16 %v1498, %v1482
        %v1867 = vpack.c.b16 %v1499, %v1483
        %v1868 = vpack.c.b16 %v1500, %v1484
        %v1869 = vpack.c.b16 %v1501, %v1485
        %v1870 = vpack.c.b16 %v1502, %v1486
        %v1871 = vpack.c.b16 %v1503, %v1487
        %v1872 = vpack.c.b16 %v1504, %v1488
        %v1873 = vpack.c.b16 %v1505, %v1489
        %v1874 = vpack.c.b16 %v1522, %v1506
        %v1875 = vpack.c.b16 %v1523, %v1507
        %v1876 = vpack.c.b16 %v1524, %v1508
        %v1877 = vpack.c.b16 %v1525, %v1509
        %v1878 = vpack.c.b16 %v1526, %v1510
        %v1879 = vpack.c.b16 %v1527, %v1511
        %v1880 = vpack.c.b16 %v1528, %v1512
        %v1881 = vpack.c.b16 %v1529, %v1513
        %v1882 = vpack.c.b16 %v1530, %v1514
        %v1883 = vpack.c.b16 %v1531, %v1515
        %v1884 = vpack.c.b16 %v1532, %v1516
        %v1885 = vpack.c.b16 %v1533, %v1517
        %v1886 = vpack.c.b16 %v1534, %v1518
        %v1887 = vpack.c.b16 %v1535, %v1519
        %v1888 = vpack.c.b16 %v1536, %v1520
        %v1889 = vpack.c.b16 %v1537, %v1521
        %v1890 = vpack.c.b16 %v1554, %v1538
        %v1891 = vpack.c.b16 %v1555, %v1539
        %v1892 = vpack.c.b16 %v1556, %v1540
        %v1893 = vpack.c.b16 %v1557, %v1541
        %v1894 = vpack.c.b16 %v1558, %v1542
        %v1895 = vpack.c.b16 %v1559, %v1543
        %v1896 = vpack.c.b16 %v1560, %v1544
        %v1897 = vpack.c.b16 %v1561, %v1545
        %v1898 = vpack.c.b16 %v1562, %v1546
        %v1899 = vpack.c.b16 %v1563, %v1547
        %v1900 = vpack.c.b16 %v1564, %v1548
        %v1901 = vpack.c.b16 %v1565, %v1549
        %v1902 = vpack.c.b16 %v1566, %v1550
        %v1903 = vpack.c.b16 %v1567, %v1551
        %v1904 = vpack.c.b16 %v1568, %v1552
        %v1905 = vpack.c.b16 %v1569, %v1553
        %v1906 = vpack.c.b16 %v1586, %v1570
        %v1907 = vpack.c.b16 %v1587, %v1571
        %v1908 = vpack.c.b16 %v1588, %v1572
        %v1909 = vpack.c.b16 %v1589, %v1573
        %v1910 = vpack.c.b16 %v1590, %v1574
        %v1911 = vpack.c.b16 %v1591, %v1575
        %v1912 = vpack.c.b16 %v1592, %v1576
        %v1913 = vpack.c.b16 %v1593, %v1577
        %v1914 = vpack.c.b16 %v1594, %v1578
        %v1915 = vpack.c.b16 %v1595, %v1579
        %v1916 = vpack.c.b16 %v1596, %v1580
        %v1917 = vpack.c.b16 %v1597, %v1581
        %v1918 = vpack.c.b16 %v1598, %v1582
        %v1919 = vpack.c.b16 %v1599, %v1583
        %v1920 = vpack.c.b16 %v1600, %v1584
        %v1921 = vpack.c.b16 %v1601, %v1585
        %v1922 = vpack.c.b16 %v1618, %v1602
        %v1923 = vpack.c.b16 %v1619, %v1603
        %v1924 = vpack.c.b16 %v1620, %v1604
        %v1925 = vpack.c.b16 %v1621, %v1605
        %v1926 = vpack.c.b16 %v1622, %v1606
        %v1927 = vpack.c.b16 %v1623, %v1607
        %v1928 = vpack.c.b16 %v1624, %v1608
        %v1929 = vpack.c.b16 %v1625, %v1609
        %v1930 = vpack.c.b16 %v1626, %v1610
        %v1931 = vpack.c.b16 %v1627, %v1611
        %v1932 = vpack.c.b16 %v1628, %v1612
        %v1933 = vpack.c.b16 %v1629, %v1613
        %v1934 = vpack.c.b16 %v1630, %v1614
        %v1935 = vpack.c.b16 %v1631, %v1615
        %v1936 = vpack.c.b16 %v1632, %v1616
        %v1937 = vpack.c.b16 %v1633, %v1617
        %v1938 = vpack.c.b16 %v1650, %v1634
        %v1939 = vpack.c.b16 %v1651, %v1635
        %v1940 = vpack.c.b16 %v1652, %v1636
        %v1941 = vpack.c.b16 %v1653, %v1637
        %v1942 = vpack.c.b16 %v1654, %v1638
        %v1943 = vpack.c.b16 %v1655, %v1639
        %v1944 = vpack.c.b16 %v1656, %v1640
        %v1945 = vpack.c.b16 %v1657, %v1641
        %v1946 = vpack.c.b16 %v1658, %v1642
        %v1947 = vpack.c.b16 %v1659, %v1643
        %v1948 = vpack.c.b16 %v1660, %v1644
        %v1949 = vpack.c.b16 %v1661, %v1645
        %v1950 = vpack.c.b16 %v1662, %v1646
        %v1951 = vpack.c.b16 %v1663, %v1647
        %v1952 = vpack.c.b16 %v1664, %v1648
        %v1953 = vpack.c.b16 %v1665, %v1649
        %v1954 = vpack.c.b16 %v1682, %v1666
        %v1955 = vpack.c.b16 %v1683, %v1667
        %v1956 = vpack.c.b16 %v1684, %v1668
        %v1957 = vpack.c.b16 %v1685, %v1669
        %v1958 = vpack.c.b16 %v1686, %v1670
        %v1959 = vpack.c.b16 %v1687, %v1671
        %v1960 = vpack.c.b16 %v1688, %v1672
        %v1961 = vpack.c.b16 %v1689, %v1673
        %v1962 = vpack.c.b16 %v1690, %v1674
        %v1963 = vpack.c.b16 %v1691, %v1675
        %v1964 = vpack.c.b16 %v1692, %v1676
        %v1965 = vpack.c.b16 %v1693, %v1677
        %v1966 = vpack.c.b16 %v1694, %v1678
        %v1967 = vpack.c.b16 %v1695, %v1679
        %v1968 = vpack.c.b16 %v1696, %v1680
        %v1969 = vpack.c.b16 %v1697, %v1681
        %v1970 = vpack.c.b16 %v1714, %v1698
        %v1971 = vpack.c.b16 %v1715, %v1699
        %v1972 = vpack.c.b16 %v1716, %v1700
        %v1973 = vpack.c.b16 %v1717, %v1701
        %v1974 = vpack.c.b16 %v1718, %v1702
        %v1975 = vpack.c.b16 %v1719, %v1703
        %v1976 = vpack.c.b16 %v1720, %v1704
        %v1977 = vpack.c.b16 %v1721, %v1705
        %v1978 = vpack.c.b16 %v1722, %v1706
        %v1979 = vpack.c.b16 %v1723, %v1707
        %v1980 = vpack.c.b16 %v1724, %v1708
        %v1981 = vpack.c.b16 %v1725, %v1709
        %v1982 = vpack.c.b16 %v1726, %v1710
        %v1983 = vpack.c.b16 %v1727, %v1711
        %v1984 = vpack.c.b16 %v1728, %v1712
        %v1985 = vpack.c.b16 %v1729, %v1713
        %2242 = vmatprep.subr.bf16.mxu0 %v1731
        %2243 = vmatpush1.bf16.msra.mxu0 %v1730
        %2244 = vmatprep.subr.bf16.mxu0 %v1747
        %2245 = vmatpush1.bf16.msra.mxu0 %v1746
        %2246 = vmatprep.subr.bf16.mxu0 %v1763
        %2247 = vmatpush1.bf16.msra.mxu0 %v1762
        %2248 = vmatprep.subr.bf16.mxu0 %v1779
        %2249 = vmatpush1.bf16.msra.mxu0 %v1778
        %2250 = vmatprep.subr.bf16.mxu0 %v1795
        %2251 = vmatpush1.bf16.msra.mxu0 %v1794
        %2252 = vmatprep.subr.bf16.mxu0 %v1811
        %2253 = vmatpush1.bf16.msra.mxu0 %v1810
        %2254 = vmatprep.subr.bf16.mxu0 %v1827
        %2255 = vmatpush1.bf16.msra.mxu0 %v1826
        %2256 = vmatprep.subr.bf16.mxu0 %v1843
        %2257 = vmatpush1.bf16.msra.mxu0 %v1842
        %2258 = vmatprep.subr.bf16.mxu0 %v1859
        %2259 = vmatpush1.bf16.msra.mxu0 %v1858
        %2260 = vmatprep.subr.bf16.mxu0 %v1875
        %2261 = vmatpush1.bf16.msra.mxu0 %v1874
        %2262 = vmatprep.subr.bf16.mxu0 %v1891
        %2263 = vmatpush1.bf16.msra.mxu0 %v1890
        %2264 = vmatprep.subr.bf16.mxu0 %v1907
        %2265 = vmatpush1.bf16.msra.mxu0 %v1906
        %2266 = vmatprep.subr.bf16.mxu0 %v1923
        %2267 = vmatpush1.bf16.msra.mxu0 %v1922
        %2268 = vmatprep.subr.bf16.mxu0 %v1939
        %2269 = vmatpush1.bf16.msra.mxu0 %v1938
        %2270 = vmatprep.subr.bf16.mxu0 %v1955
        %2271 = vmatpush1.bf16.msra.mxu0 %v1954
        %2272 = vmatprep.subr.bf16.mxu0 %v1971
        %2273 = vmatpush1.bf16.msra.mxu0 %v1970
        %2274 = vmatprep.mubr.bf16.mxu0 %v959
        %2275 = vmatmul.mubr.bf16.gmra.mrb[0].mxu0 %v958
        %v2276 = vpop.f32.mrb[0].mxu0
        %v2277 = vadd.f32 0.0, %v2276
        %v2278 = vpop.f32.mrb[0].mxu0
        %v2279 = vadd.f32 0.0, %v2278
        %v2280 = vpop.f32.mrb[0].mxu0
        %v2281 = vpop.f32.mrb[0].mxu0
        %2282 = vdwg.mxu0
        %2283 = vmatprep.subr.bf16.mxu0 %v1733
        %2284 = vmatpush1.bf16.msra.mxu0 %v1732
        %2285 = vmatprep.subr.bf16.mxu0 %v1749
        %2286 = vmatpush1.bf16.msra.mxu0 %v1748
        %2287 = vmatprep.subr.bf16.mxu0 %v1765
        %2288 = vmatpush1.bf16.msra.mxu0 %v1764
        %2289 = vmatprep.subr.bf16.mxu0 %v1781
        %2290 = vmatpush1.bf16.msra.mxu0 %v1780
        %2291 = vmatprep.subr.bf16.mxu0 %v1797
        %2292 = vmatpush1.bf16.msra.mxu0 %v1796
        %2293 = vmatprep.subr.bf16.mxu0 %v1813
        %2294 = vmatpush1.bf16.msra.mxu0 %v1812
        %2295 = vmatprep.subr.bf16.mxu0 %v1829
        %2296 = vmatpush1.bf16.msra.mxu0 %v1828
        %2297 = vmatprep.subr.bf16.mxu0 %v1845
        %2298 = vmatpush1.bf16.msra.mxu0 %v1844
        %2299 = vmatprep.subr.bf16.mxu0 %v1861
        %2300 = vmatpush1.bf16.msra.mxu0 %v1860
        %2301 = vmatprep.subr.bf16.mxu0 %v1877
        %2302 = vmatpush1.bf16.msra.mxu0 %v1876
        %2303 = vmatprep.subr.bf16.mxu0 %v1893
        %2304 = vmatpush1.bf16.msra.mxu0 %v1892
        %2305 = vmatprep.subr.bf16.mxu0 %v1909
        %2306 = vmatpush1.bf16.msra.mxu0 %v1908
        %2307 = vmatprep.subr.bf16.mxu0 %v1925
        %2308 = vmatpush1.bf16.msra.mxu0 %v1924
        %2309 = vmatprep.subr.bf16.mxu0 %v1941
        %2310 = vmatpush1.bf16.msra.mxu0 %v1940
        %2311 = vmatprep.subr.bf16.mxu0 %v1957
        %2312 = vmatpush1.bf16.msra.mxu0 %v1956
        %2313 = vmatprep.subr.bf16.mxu0 %v1973
        %2314 = vmatpush1.bf16.msra.mxu0 %v1972
        %2315 = vmatprep.mubr.bf16.mxu0 %v959
        %2316 = vmatmul.mubr.bf16.gmra.mrb[0].mxu0 %v958
        %v2317 = vpop.f32.mrb[0].mxu0
        %v2318 = vadd.f32 0.0, %v2317
        %v2319 = vpop.f32.mrb[0].mxu0
        %v2320 = vadd.f32 0.0, %v2319
        %v2321 = vpop.f32.mrb[0].mxu0
        %v2322 = vpop.f32.mrb[0].mxu0
        %2323 = vdwg.mxu0
        %2324 = vmatprep.subr.bf16.mxu0 %v1735
        %2325 = vmatpush1.bf16.msra.mxu0 %v1734
        %2326 = vmatprep.subr.bf16.mxu0 %v1751
        %2327 = vmatpush1.bf16.msra.mxu0 %v1750
        %2328 = vmatprep.subr.bf16.mxu0 %v1767
        %2329 = vmatpush1.bf16.msra.mxu0 %v1766
        %2330 = vmatprep.subr.bf16.mxu0 %v1783
        %2331 = vmatpush1.bf16.msra.mxu0 %v1782
        %2332 = vmatprep.subr.bf16.mxu0 %v1799
        %2333 = vmatpush1.bf16.msra.mxu0 %v1798
        %2334 = vmatprep.subr.bf16.mxu0 %v1815
        %2335 = vmatpush1.bf16.msra.mxu0 %v1814
        %2336 = vmatprep.subr.bf16.mxu0 %v1831
        %2337 = vmatpush1.bf16.msra.mxu0 %v1830
        %2338 = vmatprep.subr.bf16.mxu0 %v1847
        %2339 = vmatpush1.bf16.msra.mxu0 %v1846
        %2340 = vmatprep.subr.bf16.mxu0 %v1863
        %2341 = vmatpush1.bf16.msra.mxu0 %v1862
        %2342 = vmatprep.subr.bf16.mxu0 %v1879
        %2343 = vmatpush1.bf16.msra.mxu0 %v1878
        %2344 = vmatprep.subr.bf16.mxu0 %v1895
        %2345 = vmatpush1.bf16.msra.mxu0 %v1894
        %2346 = vmatprep.subr.bf16.mxu0 %v1911
        %2347 = vmatpush1.bf16.msra.mxu0 %v1910
        %2348 = vmatprep.subr.bf16.mxu0 %v1927
        %2349 = vmatpush1.bf16.msra.mxu0 %v1926
        %2350 = vmatprep.subr.bf16.mxu0 %v1943
        %2351 = vmatpush1.bf16.msra.mxu0 %v1942
        %2352 = vmatprep.subr.bf16.mxu0 %v1959
        %2353 = vmatpush1.bf16.msra.mxu0 %v1958
        %2354 = vmatprep.subr.bf16.mxu0 %v1975
        %2355 = vmatpush1.bf16.msra.mxu0 %v1974
        %2356 = vmatprep.mubr.bf16.mxu0 %v959
        %2357 = vmatmul.mubr.bf16.gmra.mrb[0].mxu0 %v958
        %v2358 = vpop.f32.mrb[0].mxu0
        %v2359 = vadd.f32 0.0, %v2358
        %v2360 = vpop.f32.mrb[0].mxu0
        %v2361 = vadd.f32 0.0, %v2360
        %v2362 = vpop.f32.mrb[0].mxu0
        %v2363 = vpop.f32.mrb[0].mxu0
        %2364 = vdwg.mxu0
        %2365 = vmatprep.subr.bf16.mxu0 %v1737
        %2366 = vmatpush1.bf16.msra.mxu0 %v1736
        %2367 = vmatprep.subr.bf16.mxu0 %v1753
        %2368 = vmatpush1.bf16.msra.mxu0 %v1752
        %2369 = vmatprep.subr.bf16.mxu0 %v1769
        %2370 = vmatpush1.bf16.msra.mxu0 %v1768
        %2371 = vmatprep.subr.bf16.mxu0 %v1785
        %2372 = vmatpush1.bf16.msra.mxu0 %v1784
        %2373 = vmatprep.subr.bf16.mxu0 %v1801
        %2374 = vmatpush1.bf16.msra.mxu0 %v1800
        %2375 = vmatprep.subr.bf16.mxu0 %v1817
        %2376 = vmatpush1.bf16.msra.mxu0 %v1816
        %2377 = vmatprep.subr.bf16.mxu0 %v1833
        %2378 = vmatpush1.bf16.msra.mxu0 %v1832
        %2379 = vmatprep.subr.bf16.mxu0 %v1849
        %2380 = vmatpush1.bf16.msra.mxu0 %v1848
        %2381 = vmatprep.subr.bf16.mxu0 %v1865
        %2382 = vmatpush1.bf16.msra.mxu0 %v1864
        %2383 = vmatprep.subr.bf16.mxu0 %v1881
        %2384 = vmatpush1.bf16.msra.mxu0 %v1880
        %2385 = vmatprep.subr.bf16.mxu0 %v1897
        %2386 = vmatpush1.bf16.msra.mxu0 %v1896
        %2387 = vmatprep.subr.bf16.mxu0 %v1913
        %2388 = vmatpush1.bf16.msra.mxu0 %v1912
        %2389 = vmatprep.subr.bf16.mxu0 %v1929
        %2390 = vmatpush1.bf16.msra.mxu0 %v1928
        %2391 = vmatprep.subr.bf16.mxu0 %v1945
        %2392 = vmatpush1.bf16.msra.mxu0 %v1944
        %2393 = vmatprep.subr.bf16.mxu0 %v1961
        %2394 = vmatpush1.bf16.msra.mxu0 %v1960
        %2395 = vmatprep.subr.bf16.mxu0 %v1977
        %2396 = vmatpush1.bf16.msra.mxu0 %v1976
        %2397 = vmatprep.mubr.bf16.mxu0 %v959
        %2398 = vmatmul.mubr.bf16.gmra.mrb[0].mxu0 %v958
        %v2399 = vpop.f32.mrb[0].mxu0
        %v2400 = vadd.f32 0.0, %v2399
        %v2401 = vpop.f32.mrb[0].mxu0
        %v2402 = vadd.f32 0.0, %v2401
        %v2403 = vpop.f32.mrb[0].mxu0
        %v2404 = vpop.f32.mrb[0].mxu0
        %2405 = vdwg.mxu0
        %2406 = vmatprep.subr.bf16.mxu0 %v1739
        %2407 = vmatpush1.bf16.msra.mxu0 %v1738
        %2408 = vmatprep.subr.bf16.mxu0 %v1755
        %2409 = vmatpush1.bf16.msra.mxu0 %v1754
        %2410 = vmatprep.subr.bf16.mxu0 %v1771
        %2411 = vmatpush1.bf16.msra.mxu0 %v1770
        %2412 = vmatprep.subr.bf16.mxu0 %v1787
        %2413 = vmatpush1.bf16.msra.mxu0 %v1786
        %2414 = vmatprep.subr.bf16.mxu0 %v1803
        %2415 = vmatpush1.bf16.msra.mxu0 %v1802
        %2416 = vmatprep.subr.bf16.mxu0 %v1819
        %2417 = vmatpush1.bf16.msra.mxu0 %v1818
        %2418 = vmatprep.subr.bf16.mxu0 %v1835
        %2419 = vmatpush1.bf16.msra.mxu0 %v1834
        %2420 = vmatprep.subr.bf16.mxu0 %v1851
        %2421 = vmatpush1.bf16.msra.mxu0 %v1850
        %2422 = vmatprep.subr.bf16.mxu0 %v1867
        %2423 = vmatpush1.bf16.msra.mxu0 %v1866
        %2424 = vmatprep.subr.bf16.mxu0 %v1883
        %2425 = vmatpush1.bf16.msra.mxu0 %v1882
        %2426 = vmatprep.subr.bf16.mxu0 %v1899
        %2427 = vmatpush1.bf16.msra.mxu0 %v1898
        %2428 = vmatprep.subr.bf16.mxu0 %v1915
        %2429 = vmatpush1.bf16.msra.mxu0 %v1914
        %2430 = vmatprep.subr.bf16.mxu0 %v1931
        %2431 = vmatpush1.bf16.msra.mxu0 %v1930
        %2432 = vmatprep.subr.bf16.mxu0 %v1947
        %2433 = vmatpush1.bf16.msra.mxu0 %v1946
        %2434 = vmatprep.subr.bf16.mxu0 %v1963
        %2435 = vmatpush1.bf16.msra.mxu0 %v1962
        %2436 = vmatprep.subr.bf16.mxu0 %v1979
        %2437 = vmatpush1.bf16.msra.mxu0 %v1978
        %2438 = vmatprep.mubr.bf16.mxu0 %v959
        %2439 = vmatmul.mubr.bf16.gmra.mrb[0].mxu0 %v958
        %v2440 = vpop.f32.mrb[0].mxu0
        %v2441 = vadd.f32 0.0, %v2440
        %v2442 = vpop.f32.mrb[0].mxu0
        %v2443 = vadd.f32 0.0, %v2442
        %v2444 = vpop.f32.mrb[0].mxu0
        %v2445 = vpop.f32.mrb[0].mxu0
        %2446 = vdwg.mxu0
        %2447 = vmatprep.subr.bf16.mxu0 %v1741
        %2448 = vmatpush1.bf16.msra.mxu0 %v1740
        %2449 = vmatprep.subr.bf16.mxu0 %v1757
        %2450 = vmatpush1.bf16.msra.mxu0 %v1756
        %2451 = vmatprep.subr.bf16.mxu0 %v1773
        %2452 = vmatpush1.bf16.msra.mxu0 %v1772
        %2453 = vmatprep.subr.bf16.mxu0 %v1789
        %2454 = vmatpush1.bf16.msra.mxu0 %v1788
        %2455 = vmatprep.subr.bf16.mxu0 %v1805
        %2456 = vmatpush1.bf16.msra.mxu0 %v1804
        %2457 = vmatprep.subr.bf16.mxu0 %v1821
        %2458 = vmatpush1.bf16.msra.mxu0 %v1820
        %2459 = vmatprep.subr.bf16.mxu0 %v1837
        %2460 = vmatpush1.bf16.msra.mxu0 %v1836
        %2461 = vmatprep.subr.bf16.mxu0 %v1853
        %2462 = vmatpush1.bf16.msra.mxu0 %v1852
        %2463 = vmatprep.subr.bf16.mxu0 %v1869
        %2464 = vmatpush1.bf16.msra.mxu0 %v1868
        %2465 = vmatprep.subr.bf16.mxu0 %v1885
        %2466 = vmatpush1.bf16.msra.mxu0 %v1884
        %2467 = vmatprep.subr.bf16.mxu0 %v1901
        %2468 = vmatpush1.bf16.msra.mxu0 %v1900
        %2469 = vmatprep.subr.bf16.mxu0 %v1917
        %2470 = vmatpush1.bf16.msra.mxu0 %v1916
        %2471 = vmatprep.subr.bf16.mxu0 %v1933
        %2472 = vmatpush1.bf16.msra.mxu0 %v1932
        %2473 = vmatprep.subr.bf16.mxu0 %v1949
        %2474 = vmatpush1.bf16.msra.mxu0 %v1948
        %2475 = vmatprep.subr.bf16.mxu0 %v1965
        %2476 = vmatpush1.bf16.msra.mxu0 %v1964
        %2477 = vmatprep.subr.bf16.mxu0 %v1981
        %2478 = vmatpush1.bf16.msra.mxu0 %v1980
        %2479 = vmatprep.mubr.bf16.mxu0 %v959
        %2480 = vmatmul.mubr.bf16.gmra.mrb[0].mxu0 %v958
        %v2481 = vpop.f32.mrb[0].mxu0
        %v2482 = vadd.f32 0.0, %v2481
        %v2483 = vpop.f32.mrb[0].mxu0
        %v2484 = vadd.f32 0.0, %v2483
        %v2485 = vpop.f32.mrb[0].mxu0
        %v2486 = vpop.f32.mrb[0].mxu0
        %2487 = vdwg.mxu0
        %2488 = vmatprep.subr.bf16.mxu0 %v1743
        %2489 = vmatpush1.bf16.msra.mxu0 %v1742
        %2490 = vmatprep.subr.bf16.mxu0 %v1759
        %2491 = vmatpush1.bf16.msra.mxu0 %v1758
        %2492 = vmatprep.subr.bf16.mxu0 %v1775
        %2493 = vmatpush1.bf16.msra.mxu0 %v1774
        %2494 = vmatprep.subr.bf16.mxu0 %v1791
        %2495 = vmatpush1.bf16.msra.mxu0 %v1790
        %2496 = vmatprep.subr.bf16.mxu0 %v1807
        %2497 = vmatpush1.bf16.msra.mxu0 %v1806
        %2498 = vmatprep.subr.bf16.mxu0 %v1823
        %2499 = vmatpush1.bf16.msra.mxu0 %v1822
        %2500 = vmatprep.subr.bf16.mxu0 %v1839
        %2501 = vmatpush1.bf16.msra.mxu0 %v1838
        %2502 = vmatprep.subr.bf16.mxu0 %v1855
        %2503 = vmatpush1.bf16.msra.mxu0 %v1854
        %2504 = vmatprep.subr.bf16.mxu0 %v1871
        %2505 = vmatpush1.bf16.msra.mxu0 %v1870
        %2506 = vmatprep.subr.bf16.mxu0 %v1887
        %2507 = vmatpush1.bf16.msra.mxu0 %v1886
        %2508 = vmatprep.subr.bf16.mxu0 %v1903
        %2509 = vmatpush1.bf16.msra.mxu0 %v1902
        %2510 = vmatprep.subr.bf16.mxu0 %v1919
        %2511 = vmatpush1.bf16.msra.mxu0 %v1918
        %2512 = vmatprep.subr.bf16.mxu0 %v1935
        %2513 = vmatpush1.bf16.msra.mxu0 %v1934
        %2514 = vmatprep.subr.bf16.mxu0 %v1951
        %2515 = vmatpush1.bf16.msra.mxu0 %v1950
        %2516 = vmatprep.subr.bf16.mxu0 %v1967
        %2517 = vmatpush1.bf16.msra.mxu0 %v1966
        %2518 = vmatprep.subr.bf16.mxu0 %v1983
        %2519 = vmatpush1.bf16.msra.mxu0 %v1982
        %2520 = vmatprep.mubr.bf16.mxu0 %v959
        %2521 = vmatmul.mubr.bf16.gmra.mrb[0].mxu0 %v958
        %v2522 = vpop.f32.mrb[0].mxu0
        %v2523 = vadd.f32 0.0, %v2522
        %v2524 = vpop.f32.mrb[0].mxu0
        %v2525 = vadd.f32 0.0, %v2524
        %v2526 = vpop.f32.mrb[0].mxu0
        %v2527 = vpop.f32.mrb[0].mxu0
        %2528 = vdwg.mxu0
        %2529 = vmatprep.subr.bf16.mxu0 %v1745
        %2530 = vmatpush1.bf16.msra.mxu0 %v1744
        %2531 = vmatprep.subr.bf16.mxu0 %v1761
        %2532 = vmatpush1.bf16.msra.mxu0 %v1760
        %2533 = vmatprep.subr.bf16.mxu0 %v1777
        %2534 = vmatpush1.bf16.msra.mxu0 %v1776
        %2535 = vmatprep.subr.bf16.mxu0 %v1793
        %2536 = vmatpush1.bf16.msra.mxu0 %v1792
        %2537 = vmatprep.subr.bf16.mxu0 %v1809
        %2538 = vmatpush1.bf16.msra.mxu0 %v1808
        %2539 = vmatprep.subr.bf16.mxu0 %v1825
        %2540 = vmatpush1.bf16.msra.mxu0 %v1824
        %2541 = vmatprep.subr.bf16.mxu0 %v1841
        %2542 = vmatpush1.bf16.msra.mxu0 %v1840
        %2543 = vmatprep.subr.bf16.mxu0 %v1857
        %2544 = vmatpush1.bf16.msra.mxu0 %v1856
        %2545 = vmatprep.subr.bf16.mxu0 %v1873
        %2546 = vmatpush1.bf16.msra.mxu0 %v1872
        %2547 = vmatprep.subr.bf16.mxu0 %v1889
        %2548 = vmatpush1.bf16.msra.mxu0 %v1888
        %2549 = vmatprep.subr.bf16.mxu0 %v1905
        %2550 = vmatpush1.bf16.msra.mxu0 %v1904
        %2551 = vmatprep.subr.bf16.mxu0 %v1921
        %2552 = vmatpush1.bf16.msra.mxu0 %v1920
        %2553 = vmatprep.subr.bf16.mxu0 %v1937
        %2554 = vmatpush1.bf16.msra.mxu0 %v1936
        %2555 = vmatprep.subr.bf16.mxu0 %v1953
        %2556 = vmatpush1.bf16.msra.mxu0 %v1952
        %2557 = vmatprep.subr.bf16.mxu0 %v1969
        %2558 = vmatpush1.bf16.msra.mxu0 %v1968
        %2559 = vmatprep.subr.bf16.mxu0 %v1985
        %2560 = vmatpush1.bf16.msra.mxu0 %v1984
        %2561 = vmatprep.mubr.bf16.mxu0 %v959
        %2562 = vmatmul.mubr.bf16.gmra.mrb[0].mxu0 %v958
        %v2563 = vpop.f32.mrb[0].mxu0
        %v2564 = vadd.f32 0.0, %v2563
        %v2565 = vpop.f32.mrb[0].mxu0
        %v2566 = vadd.f32 0.0, %v2565
        %v2567 = vpop.f32.mrb[0].mxu0
        %v2568 = vpop.f32.mrb[0].mxu0
        %2569 = vdwg.mxu0
        %v2570 = vld [vmem:[#allocation2] sm:$0xff]
        %v2571 = vadd.f32 %v2277, %v2279
        %v2572 = vadd.f32 %v2571, %v2318
        %v2573 = vadd.f32 %v2572, %v2320
        %v2574 = vadd.f32 %v2573, %v2359
        %v2575 = vadd.f32 %v2574, %v2361
        %v2576 = vadd.f32 %v2575, %v2400
        %v2577 = vadd.f32 %v2576, %v2402
        %v2578 = vadd.f32 %v2577, %v2441
        %v2579 = vadd.f32 %v2578, %v2443
        %v2580 = vadd.f32 %v2579, %v2482
        %v2581 = vadd.f32 %v2580, %v2484
        %v2582 = vadd.f32 %v2581, %v2523
        %v2583 = vadd.f32 %v2582, %v2525
        %v2584 = vadd.f32 %v2583, %v2564
        %v2585 = vadd.f32 %v2584, %v2566
        %2586 = vadd.xlane.f32.xlu0 %v2585
        %v2587 = vpop.xlane.xlu0 %2586
        %v2588 = vadd.f32 %v2570, %v2587
        %vm2589 = vcmask 7168
        %2590 = vst.msk [vmem:[#allocation2] sm:$0xff] %vm2589, %v2588
        %v2591 = vld [vmem:[#allocation3] sm:$0xff]
        %v2592 = vmul.f32 %v2277, %v2277
        %v2593 = vmul.f32 %v2279, %v2279
        %v2594 = vmul.f32 %v2318, %v2318
        %v2595 = vmul.f32 %v2320, %v2320
        %v2596 = vmul.f32 %v2359, %v2359
        %v2597 = vmul.f32 %v2361, %v2361
        %v2598 = vmul.f32 %v2400, %v2400
        %v2599 = vmul.f32 %v2402, %v2402
        %v2600 = vmul.f32 %v2441, %v2441
        %v2601 = vmul.f32 %v2443, %v2443
        %v2602 = vmul.f32 %v2482, %v2482
        %v2603 = vmul.f32 %v2484, %v2484
        %v2604 = vmul.f32 %v2523, %v2523
        %v2605 = vmul.f32 %v2525, %v2525
        %v2606 = vmul.f32 %v2564, %v2564
        %v2607 = vmul.f32 %v2566, %v2566
        %v2608 = vadd.f32 %v2592, %v2593
        %v2609 = vadd.f32 %v2608, %v2594
        %v2610 = vadd.f32 %v2609, %v2595
        %v2611 = vadd.f32 %v2610, %v2596
        %v2612 = vadd.f32 %v2611, %v2597
        %v2613 = vadd.f32 %v2612, %v2598
        %v2614 = vadd.f32 %v2613, %v2599
        %v2615 = vadd.f32 %v2614, %v2600
        %v2616 = vadd.f32 %v2615, %v2601
        %v2617 = vadd.f32 %v2616, %v2602
        %v2618 = vadd.f32 %v2617, %v2603
        %v2619 = vadd.f32 %v2618, %v2604
        %v2620 = vadd.f32 %v2619, %v2605
        %v2621 = vadd.f32 %v2620, %v2606
        %v2622 = vadd.f32 %v2621, %v2607
        %2623 = vadd.xlane.f32.xlu0 %v2622
        %v2624 = vpop.xlane.xlu0 %2623
        %v2625 = vadd.f32 %v2591, %v2624
        %2626 = vst.msk [vmem:[#allocation3] sm:$0xff] %vm2589, %v2625
        %s2627 = smul.u32 %s18, 2048
        %s2628 = sshra.s32 %s2627, 7
        %s2629 = sand.u32 %s2627, 127
        %s2630 = smul.addr %s2628, 8
        %s2631 = scalar_lea.vmem %s690, %s2630
        %2632 = vst [vmem:[%s2631] sm:$0xff] %v2277
        %2633 = vst [vmem:[%s2631 + $0x8] sm:$0xff] %v2279
        %2634 = vst [vmem:[%s2631 + $0x10] sm:$0xff] %v2318
        %2635 = vst [vmem:[%s2631 + $0x18] sm:$0xff] %v2320
        %2636 = vst [vmem:[%s2631 + $0x20] sm:$0xff] %v2359
        %2637 = vst [vmem:[%s2631 + $0x28] sm:$0xff] %v2361
        %2638 = vst [vmem:[%s2631 + $0x30] sm:$0xff] %v2400
        %2639 = vst [vmem:[%s2631 + $0x38] sm:$0xff] %v2402
        %2640 = vst [vmem:[%s2631 + $0x40] sm:$0xff] %v2441
        %2641 = vst [vmem:[%s2631 + $0x48] sm:$0xff] %v2443
        %2642 = vst [vmem:[%s2631 + $0x50] sm:$0xff] %v2482
        %2643 = vst [vmem:[%s2631 + $0x58] sm:$0xff] %v2484
        %2644 = vst [vmem:[%s2631 + $0x60] sm:$0xff] %v2523
        %2645 = vst [vmem:[%s2631 + $0x68] sm:$0xff] %v2525
        %2646 = vst [vmem:[%s2631 + $0x70] sm:$0xff] %v2564
        %2647 = vst [vmem:[%s2631 + $0x78] sm:$0xff] %v2566
        %p2648 = scmp.eq.s32.totalorder %s18, 1
        // Predicated region
        $region56: #{conv_block_forward.3} parent=46 // pred_check
          %p2649 = pneg %p2648
        $region57: #{conv_block_forward.3} parent=46 // pred_check_branch
          %2651 = sbr.rel (%p2649) target = $region59
        $region58: #{conv_block_forward.3} parent=46 // pred_region
          %v2652 = vld [vmem:[#allocation2] sm:$0xff]
          %v2653 = vmul.f32 %v2652, 0.00024414063
          %v2654 = vld [vmem:[#allocation3] sm:$0xff]
          %v2655 = vmul.f32 %v2654, 0.00024414063
          %v2656 = vmul.f32 %v2653, %v2653
          %v2657 = vsub.f32 %v2655, %v2656
          %v2658 = vmax.f32 %v2657, 0.0
          %v2659 = vadd.f32 %v2658, 1e-05
          %v2660 = vrsqrt.pop %v2659
          %v2661 = vmul.f32 %v2653, %v2660
          loop: start=0, step=1, limit=2
          $region60: #{conv_block_forward.3} parent=58 // loop_pre_header
            _
          $region61: #{conv_block_forward.3} parent=58 // loop_header
            %s2663 = sphi 0, %s2667
            %p2664 = scmp.ge.s32.totalorder %s2663, 2
          $region62: #{conv_block_forward.3} parent=58 // loop_header_branch
            %2666 = sbr.rel (%p2664) target = $region66
          $region63: #{conv_block_forward.3} parent=58 // loop_body
            %s2668 = smul.u32 %s2663, 2048
            %s2669 = sshra.s32 %s2668, 7
            %s2670 = sand.u32 %s2668, 127
            %s2671 = smul.addr %s2669, 8
            %s2672 = scalar_lea.vmem %s690, %s2671
            %v2673 = vld [vmem:[%s2672] sm:$0xff]
            %v2674 = vld [vmem:[%s2672 + $0x8] sm:$0xff]
            %v2675 = vld [vmem:[%s2672 + $0x10] sm:$0xff]
            %v2676 = vld [vmem:[%s2672 + $0x18] sm:$0xff]
            %v2677 = vld [vmem:[%s2672 + $0x20] sm:$0xff]
            %v2678 = vld [vmem:[%s2672 + $0x28] sm:$0xff]
            %v2679 = vld [vmem:[%s2672 + $0x30] sm:$0xff]
            %v2680 = vld [vmem:[%s2672 + $0x38] sm:$0xff]
            %v2681 = vld [vmem:[%s2672 + $0x40] sm:$0xff]
            %v2682 = vld [vmem:[%s2672 + $0x48] sm:$0xff]
            %v2683 = vld [vmem:[%s2672 + $0x50] sm:$0xff]
            %v2684 = vld [vmem:[%s2672 + $0x58] sm:$0xff]
            %v2685 = vld [vmem:[%s2672 + $0x60] sm:$0xff]
            %v2686 = vld [vmem:[%s2672 + $0x68] sm:$0xff]
            %v2687 = vld [vmem:[%s2672 + $0x70] sm:$0xff]
            %v2688 = vld [vmem:[%s2672 + $0x78] sm:$0xff]
            %2690 = vset.pattern.permute.xlu0 0
            %2691 = vperm.xlu0 %2690, %v2660
            %v2692 = vpop.permute.xlu0 %2691
            %v2694 = vmul.f32 %v2673, %v2692
            %v2695 = vmul.f32 %v2674, %v2692
            %v2696 = vmul.f32 %v2675, %v2692
            %v2697 = vmul.f32 %v2676, %v2692
            %v2698 = vmul.f32 %v2677, %v2692
            %v2699 = vmul.f32 %v2678, %v2692
            %v2700 = vmul.f32 %v2679, %v2692
            %v2701 = vmul.f32 %v2680, %v2692
            %v2702 = vmul.f32 %v2681, %v2692
            %v2703 = vmul.f32 %v2682, %v2692
            %v2704 = vmul.f32 %v2683, %v2692
            %v2705 = vmul.f32 %v2684, %v2692
            %v2706 = vmul.f32 %v2685, %v2692
            %v2707 = vmul.f32 %v2686, %v2692
            %v2708 = vmul.f32 %v2687, %v2692
            %v2709 = vmul.f32 %v2688, %v2692
            %2711 = vset.pattern.permute.xlu0 0
            %2712 = vperm.xlu0 %2711, %v2661
            %v2713 = vpop.permute.xlu0 %2712
            %v2715 = vsub.f32 %v2694, %v2713
            %v2716 = vsub.f32 %v2695, %v2713
            %v2717 = vsub.f32 %v2696, %v2713
            %v2718 = vsub.f32 %v2697, %v2713
            %v2719 = vsub.f32 %v2698, %v2713
            %v2720 = vsub.f32 %v2699, %v2713
            %v2721 = vsub.f32 %v2700, %v2713
            %v2722 = vsub.f32 %v2701, %v2713
            %v2723 = vsub.f32 %v2702, %v2713
            %v2724 = vsub.f32 %v2703, %v2713
            %v2725 = vsub.f32 %v2704, %v2713
            %v2726 = vsub.f32 %v2705, %v2713
            %v2727 = vsub.f32 %v2706, %v2713
            %v2728 = vsub.f32 %v2707, %v2713
            %v2729 = vsub.f32 %v2708, %v2713
            %v2730 = vsub.f32 %v2709, %v2713
            %vm2731 = vcmp.ge.f32.partialorder %v2715, 0.0
            %vm2732 = vcmp.ge.f32.partialorder %v2716, 0.0
            %vm2733 = vcmp.ge.f32.partialorder %v2717, 0.0
            %vm2734 = vcmp.ge.f32.partialorder %v2718, 0.0
            %vm2735 = vcmp.ge.f32.partialorder %v2719, 0.0
            %vm2736 = vcmp.ge.f32.partialorder %v2720, 0.0
            %vm2737 = vcmp.ge.f32.partialorder %v2721, 0.0
            %vm2738 = vcmp.ge.f32.partialorder %v2722, 0.0
            %vm2739 = vcmp.ge.f32.partialorder %v2723, 0.0
            %vm2740 = vcmp.ge.f32.partialorder %v2724, 0.0
            %vm2741 = vcmp.ge.f32.partialorder %v2725, 0.0
            %vm2742 = vcmp.ge.f32.partialorder %v2726, 0.0
            %vm2743 = vcmp.ge.f32.partialorder %v2727, 0.0
            %vm2744 = vcmp.ge.f32.partialorder %v2728, 0.0
            %vm2745 = vcmp.ge.f32.partialorder %v2729, 0.0
            %vm2746 = vcmp.ge.f32.partialorder %v2730, 0.0
            %v2747 = vmul.f32 %v2715, 0.2
            %v2748 = vmul.f32 %v2716, 0.2
            %v2749 = vmul.f32 %v2717, 0.2
            %v2750 = vmul.f32 %v2718, 0.2
            %v2751 = vmul.f32 %v2719, 0.2
            %v2752 = vmul.f32 %v2720, 0.2
            %v2753 = vmul.f32 %v2721, 0.2
            %v2754 = vmul.f32 %v2722, 0.2
            %v2755 = vmul.f32 %v2723, 0.2
            %v2756 = vmul.f32 %v2724, 0.2
            %v2757 = vmul.f32 %v2725, 0.2
            %v2758 = vmul.f32 %v2726, 0.2
            %v2759 = vmul.f32 %v2727, 0.2
            %v2760 = vmul.f32 %v2728, 0.2
            %v2761 = vmul.f32 %v2729, 0.2
            %v2762 = vmul.f32 %v2730, 0.2
            %v2763 = vsel %vm2731, %v2715, %v2747
            %v2764 = vsel %vm2732, %v2716, %v2748
            %v2765 = vsel %vm2733, %v2717, %v2749
            %v2766 = vsel %vm2734, %v2718, %v2750
            %v2767 = vsel %vm2735, %v2719, %v2751
            %v2768 = vsel %vm2736, %v2720, %v2752
            %v2769 = vsel %vm2737, %v2721, %v2753
            %v2770 = vsel %vm2738, %v2722, %v2754
            %v2771 = vsel %vm2739, %v2723, %v2755
            %v2772 = vsel %vm2740, %v2724, %v2756
            %v2773 = vsel %vm2741, %v2725, %v2757
            %v2774 = vsel %vm2742, %v2726, %v2758
            %v2775 = vsel %vm2743, %v2727, %v2759
            %v2776 = vsel %vm2744, %v2728, %v2760
            %v2777 = vsel %vm2745, %v2729, %v2761
            %v2778 = vsel %vm2746, %v2730, %v2762
            %2779 = vst [vmem:[%s2672] sm:$0xff] %v2763
            %2780 = vst [vmem:[%s2672 + $0x8] sm:$0xff] %v2764
            %2781 = vst [vmem:[%s2672 + $0x10] sm:$0xff] %v2765
            %2782 = vst [vmem:[%s2672 + $0x18] sm:$0xff] %v2766
            %2783 = vst [vmem:[%s2672 + $0x20] sm:$0xff] %v2767
            %2784 = vst [vmem:[%s2672 + $0x28] sm:$0xff] %v2768
            %2785 = vst [vmem:[%s2672 + $0x30] sm:$0xff] %v2769
            %2786 = vst [vmem:[%s2672 + $0x38] sm:$0xff] %v2770
            %2787 = vst [vmem:[%s2672 + $0x40] sm:$0xff] %v2771
            %2788 = vst [vmem:[%s2672 + $0x48] sm:$0xff] %v2772
            %2789 = vst [vmem:[%s2672 + $0x50] sm:$0xff] %v2773
            %2790 = vst [vmem:[%s2672 + $0x58] sm:$0xff] %v2774
            %2791 = vst [vmem:[%s2672 + $0x60] sm:$0xff] %v2775
            %2792 = vst [vmem:[%s2672 + $0x68] sm:$0xff] %v2776
            %2793 = vst [vmem:[%s2672 + $0x70] sm:$0xff] %v2777
            %2794 = vst [vmem:[%s2672 + $0x78] sm:$0xff] %v2778
          $region64: #{conv_block_forward.3} parent=58 // loop_footer
            %s2667 = sadd.s32 1, %s2663
          $region65: #{conv_block_forward.3} parent=58 // loop_footer_branch
            %2662 = sbr.rel target = $region61
          $region66: #{conv_block_forward.3} parent=58 // loop_exit
            _
        $region59: #{conv_block_forward.3} parent=46 // pred_fallthru
          _
        %p2795 = scmp.lt.s32.totalorder %s17, 1
        %s2796 = scalar_select %p2795, %s17, 1
        %s2797 = smul.addr %s2796, 32
        %s2798 = smul.addr %s2797, 8
        %s2799 = scalar_lea.vmem %s2, %s2798
        // Predicated region
        $region67: #{conv_block_forward.3} parent=46 // pred_check
          %p2800 = pneg %p92
        $region68: #{conv_block_forward.3} parent=46 // pred_check_branch
          %2802 = sbr.rel (%p2800) target = $region70
        $region69: #{conv_block_forward.3} parent=46 // pred_region
          _
        $region70: #{conv_block_forward.3} parent=46 // pred_fallthru
          _
      $region47: #{conv_block_forward.3} parent=5 // pred_fallthru
        _
      %p2803 = scmp.le.s32.totalorder 2, %s8
      // Predicated region
      $region71: #{conv_block_forward.3} parent=5 // pred_check
        %p2804 = pneg %p2803
      $region72: #{conv_block_forward.3} parent=5 // pred_check_branch
        %2806 = sbr.rel (%p2804) target = $region74
      $region73: #{conv_block_forward.3} parent=5 // pred_region
        %s2807 = ssub.s32 %s8, 2
        // Predicated region
        $region75: #{conv_block_forward.3} parent=73 // pred_check
          %p2808 = pneg %p98
        $region76: #{conv_block_forward.3} parent=73 // pred_check_branch
          %2810 = sbr.rel (%p2808) target = $region78
        $region77: #{conv_block_forward.3} parent=73 // pred_region
          %p2811 = scmp.lt.s32.totalorder %s19, 1
          %s2812 = scalar_select %p2811, %s19, 1
          %s2813 = smul.addr %s2812, 32
          %s2814 = smul.addr %s2813, 8
          %s2815 = scalar_lea.vmem %s2, %s2814
        $region78: #{conv_block_forward.3} parent=73 // pred_fallthru
          _
      $region74: #{conv_block_forward.3} parent=5 // pred_fallthru
        _
    $region6: #{conv_block_forward.3} parent=1 // loop_footer
      %s12 = sadd.s32 1, %s8
    $region7: #{conv_block_forward.3} parent=1 // loop_footer_branch
      %7 = sbr.rel target = $region3
    $region8: #{conv_block_forward.3} parent=1 // loop_exit
      _

</llo_original>
